<compile_context>
chip_gen: v5e
topology: v5e:2x2
jax: 0.10.0
libtpu: 0.0.40
codegen_flags: <defaults>
</compile_context>

<pallas_src>
import functools
import math

import jax
import jax.numpy as jnp
from jax.experimental import pallas as pl
from jax.experimental.pallas import tpu as pltpu

F32 = jnp.float32
BF16 = jnp.bfloat16
LN_EPS = 1e-12


# ----------------------------- in-kernel helpers ----------------------------

def _layernorm(x, gamma, beta, eps=LN_EPS):
    """f32 LayerNorm over the last axis."""
    mu = jnp.mean(x, axis=-1, keepdims=True)
    var = jnp.mean(jnp.square(x - mu), axis=-1, keepdims=True)
    return (x - mu) * jax.lax.rsqrt(var + eps) * gamma + beta


def _matmul(x, w_ref, b_ref=None):
    """bf16 MXU operands, f32 accumulation; optional f32 bias."""
    y = jnp.dot(x.astype(BF16), w_ref[...], preferred_element_type=jnp.float32)
    if b_ref is not None:
        y = y + b_ref[...]
    return y


# ----------------------------- Pallas kernels ------------------------------

def _embed_ln_kernel(word_ref, pos_ref, type_ref, g_ref, b_ref, o_ref):
    """(word + position + token_type) embeddings followed by LayerNorm, one batch row."""
    e = (word_ref[0].astype(F32) + pos_ref[...].astype(F32)
         + type_ref[...].astype(F32))
    o_ref[0] = _layernorm(e, g_ref[...], b_ref[...]).astype(o_ref.dtype)


def _encoder_layer_kernel(x_ref, mask_ref, wqkv_ref, bqkv_ref, wo_ref, bo_ref,
                          g1_ref, b1_ref, wi_ref, bi_ref, wout_ref, bout_ref,
                          g2_ref, b2_ref, y_ref, *, num_heads, head_dim):
    """One full BERT encoder layer for a single batch row (grid axis = batch)."""
    x = x_ref[0].astype(F32)                              # (S, H)
    S, H = x.shape
    scale = 1.0 / math.sqrt(head_dim)

    # fused QKV projection: (S, H) @ (H, 3H)
    qkv = _matmul(x, wqkv_ref, bqkv_ref)                  # (S, 3H) f32
    # additive key mask, broadcast in-kernel (no (B*nh, S, S) HBM tensor)
    key_bias = (1.0 - mask_ref[0]) * -1e9                 # (1, S)

    ctx_heads = []
    for h in range(num_heads):                            # static unroll, no 3-D transposes
        lo = h * head_dim
        qh = qkv[:, lo:lo + head_dim].astype(BF16)
        kh = qkv[:, H + lo:H + lo + head_dim].astype(BF16)
        vh = qkv[:, 2 * H + lo:2 * H + lo + head_dim].astype(BF16)
        s = jnp.einsum("qd,kd->qk", qh, kh,
                       preferred_element_type=jnp.float32) * scale + key_bias
        s = s - jnp.max(s, axis=-1, keepdims=True)        # f32 softmax
        p = jnp.exp(s)
        p = p * pl.reciprocal(jnp.sum(p, axis=-1, keepdims=True), approx=True)
        ctx_heads.append(jnp.dot(p.astype(BF16), vh,
                                 preferred_element_type=jnp.float32))
    ctx = jnp.concatenate(ctx_heads, axis=-1)             # (S, H)

    attn_out = _matmul(ctx, wo_ref, bo_ref)
    h1 = _layernorm(x + attn_out, g1_ref[...], b1_ref[...])

    # TODO(synk): HF BERT uses exact erf-GELU; tanh approximation used here.
    inter = jax.nn.gelu(_matmul(h1, wi_ref, bi_ref), approximate=True)
    mlp_out = _matmul(inter, wout_ref, bout_ref)
    h2 = _layernorm(h1 + mlp_out, g2_ref[...], b2_ref[...])

    y_ref[0] = h2.astype(y_ref.dtype)


def _fused_head_kernel(h_ref, mask_ref, g2v_ref,
                       we1_ref, be1_ref, we2_ref, be2_ref,
                       wu1_ref, bu1_ref, wu2_ref, bu2_ref, wu3_ref, bu3_ref,
                       wf1a_ref, wf1b_ref, bf1_ref, wf2_ref, bf2_ref,
                       wp_ref, bp_ref, emb_ref, logit_ref):
    """Masked mean pooling + LateFusion MLP + classification head, one batch row."""
    h = h_ref[0].astype(F32)                              # (S, H)
    m = mask_ref[0].astype(F32)                           # (1, S)
    pooled = jnp.dot(m, h, preferred_element_type=jnp.float32)          # masked sum
    pooled = pooled / jnp.maximum(jnp.sum(m, axis=-1, keepdims=True), 1e-9)

    relu = lambda v: jnp.maximum(v, 0.0)
    x1 = relu(_matmul(pooled, we1_ref, be1_ref))          # embedding1
    x2 = g2v_ref[0].astype(F32)
    x2 = relu(_matmul(x2, we2_ref, be2_ref))              # embedding2
    x2 = relu(_matmul(x2, wu1_ref, bu1_ref))              # unet1
    x2 = relu(_matmul(x2, wu2_ref, bu2_ref))              # unet2
    x2 = relu(_matmul(x2, wu3_ref, bu3_ref))              # unet3
    # fc1(concat([x1, x2], dim=1)) == x1 @ W[:fus] + x2 @ W[fus:]  (weight pre-split)
    z = relu(_matmul(x1, wf1a_ref) + _matmul(x2, wf1b_ref) + bf1_ref[...])
    emb = relu(_matmul(z, wf2_ref, bf2_ref))              # fc2 -> (1, H)
    logits = _matmul(emb, wp_ref, bp_ref)                 # classification head

    emb_ref[0] = emb.astype(emb_ref.dtype)
    logit_ref[0] = logits.astype(logit_ref.dtype)


def _pooled_head_kernel(h_ref, mask_ref, wp_ref, bp_ref, emb_ref, logit_ref):
    """Masked mean pooling + classification head (gene2vec=None branch)."""
    h = h_ref[0].astype(F32)
    m = mask_ref[0].astype(F32)
    pooled = jnp.dot(m, h, preferred_element_type=jnp.float32)
    pooled = pooled / jnp.maximum(jnp.sum(m, axis=-1, keepdims=True), 1e-9)
    logits = _matmul(pooled, wp_ref, bp_ref)
    emb_ref[0] = pooled.astype(emb_ref.dtype)
    logit_ref[0] = logits.astype(logit_ref.dtype)


# ----------------------------- pallas_call wrappers -------------------------

def _const2(shape):
    """BlockSpec for a small 2-D weight: whole array, resident across grid steps."""
    return pl.BlockSpec(shape, lambda b: (0, 0))


def embed_layernorm(word, pos, type_row, gamma, beta):
    B, S, H = word.shape
    return pl.pallas_call(
        _embed_ln_kernel,
        out_shape=jax.ShapeDtypeStruct((B, S, H), F32),
        grid=(B,),
        in_specs=[
            pl.BlockSpec((1, S, H), lambda b: (b, 0, 0)),
            _const2((S, H)), _const2((1, H)), _const2((1, H)), _const2((1, H)),
        ],
        out_specs=pl.BlockSpec((1, S, H), lambda b: (b, 0, 0)),
        compiler_params=pltpu.CompilerParams(dimension_semantics=("parallel",)),
    )(word, pos, type_row, gamma, beta)


def encoder_layer(x, mask3, lyr, *, num_heads):
    B, S, H = x.shape
    I = lyr["wi"].shape[1]
    return pl.pallas_call(
        functools.partial(_encoder_layer_kernel, num_heads=num_heads,
                          head_dim=H // num_heads),
        out_shape=jax.ShapeDtypeStruct((B, S, H), x.dtype),
        grid=(B,),
        in_specs=[
            pl.BlockSpec((1, S, H), lambda b: (b, 0, 0)),
            pl.BlockSpec((1, 1, S), lambda b: (b, 0, 0)),
            _const2((H, 3 * H)), _const2((1, 3 * H)),
            _const2((H, H)), _const2((1, H)),
            _const2((1, H)), _const2((1, H)),
            _const2((H, I)), _const2((1, I)),
            _const2((I, H)), _const2((1, H)),
            _const2((1, H)), _const2((1, H)),
        ],
        out_specs=pl.BlockSpec((1, S, H), lambda b: (b, 0, 0)),
        compiler_params=pltpu.CompilerParams(dimension_semantics=("parallel",)),
    )(x, mask3, lyr["wqkv"], lyr["bqkv"], lyr["wo"], lyr["bo"],
      lyr["ln1_g"], lyr["ln1_b"], lyr["wi"], lyr["bi"],
      lyr["wout"], lyr["bout"], lyr["ln2_g"], lyr["ln2_b"])


def fused_head(hidden_state, mask3, g2v3, fp, pipeline):
    B, S, H = hidden_state.shape
    G = g2v3.shape[-1]
    fus = fp["wf1a"].shape[0]
    wp, bp = pipeline
    n_labels = wp.shape[1]
    emb, logits = pl.pallas_call(
        _fused_head_kernel,
        out_shape=(jax.ShapeDtypeStruct((B, 1, H), F32),
                   jax.ShapeDtypeStruct((B, 1, n_labels), F32)),
        grid=(B,),
        in_specs=[
            pl.BlockSpec((1, S, H), lambda b: (b, 0, 0)),
            pl.BlockSpec((1, 1, S), lambda b: (b, 0, 0)),
            pl.BlockSpec((1, 1, G), lambda b: (b, 0, 0)),
            _const2((H, fus)), _const2((1, fus)),
            _const2((G, G)), _const2((1, G)),
            _const2((G, fus)), _const2((1, fus)),
            _const2((fus, fus)), _const2((1, fus)),
            _const2((fus, fus)), _const2((1, fus)),
            _const2((fus, fus)), _const2((fus, fus)), _const2((1, fus)),
            _const2((fus, H)), _const2((1, H)),
            _const2((H, n_labels)), _const2((1, n_labels)),
        ],
        out_specs=(pl.BlockSpec((1, 1, H), lambda b: (b, 0, 0)),
                   pl.BlockSpec((1, 1, n_labels), lambda b: (b, 0, 0))),
        compiler_params=pltpu.CompilerParams(dimension_semantics=("parallel",)),
    )(hidden_state, mask3, g2v3,
      fp["we1"], fp["be1"], fp["we2"], fp["be2"],
      fp["wu1"], fp["bu1"], fp["wu2"], fp["bu2"], fp["wu3"], fp["bu3"],
      fp["wf1a"], fp["wf1b"], fp["bf1"], fp["wf2"], fp["bf2"],
      wp, bp)
    return emb[:, 0, :], logits[:, 0, :]


def pooled_head(hidden_state, mask3, pipeline):
    B, S, H = hidden_state.shape
    wp, bp = pipeline
    n_labels = wp.shape[1]
    emb, logits = pl.pallas_call(
        _pooled_head_kernel,
        out_shape=(jax.ShapeDtypeStruct((B, 1, H), F32),
                   jax.ShapeDtypeStruct((B, 1, n_labels), F32)),
        grid=(B,),
        in_specs=[
            pl.BlockSpec((1, S, H), lambda b: (b, 0, 0)),
            pl.BlockSpec((1, 1, S), lambda b: (b, 0, 0)),
            _const2((H, n_labels)), _const2((1, n_labels)),
        ],
        out_specs=(pl.BlockSpec((1, 1, H), lambda b: (b, 0, 0)),
                   pl.BlockSpec((1, 1, n_labels), lambda b: (b, 0, 0))),
        compiler_params=pltpu.CompilerParams(dimension_semantics=("parallel",)),
    )(hidden_state, mask3, wp, bp)
    return emb[:, 0, :], logits[:, 0, :]


# --------------------------- parameter construction ------------------------

def make_params(key, cfg):
    H, I, L = cfg["hidden"], cfg["intermediate"], cfg["layers"]
    keys = iter(jax.random.split(key, 128))

    def lin(fan_in, fan_out, scale=0.02):
        kw, kb = jax.random.split(next(keys))
        w = (jax.random.normal(kw, (fan_in, fan_out), F32) * scale).astype(BF16)
        b = jax.random.normal(kb, (1, fan_out), F32) * scale
        return w, b

    p = {}
    # mini-BERT embeddings (tables stay f32; gather runs in plain JAX)
    p["word_emb"] = jax.random.normal(next(keys), (cfg["vocab"], H), F32) * 0.02
    p["pos_emb"] = jax.random.normal(next(keys), (cfg["max_pos"], H), F32) * 0.02
    p["type_emb"] = jax.random.normal(next(keys), (2, H), F32) * 0.02
    p["emb_ln_g"] = jnp.ones((1, H), F32)
    p["emb_ln_b"] = jnp.zeros((1, H), F32)

    layers = []
    for _ in range(L):
        wqkv, bqkv = lin(H, 3 * H)        # fused Q|K|V projection
        wo, bo = lin(H, H)
        wi, bi = lin(H, I)
        wout, bout = lin(I, H)
        layers.append(dict(
            wqkv=wqkv, bqkv=bqkv, wo=wo, bo=bo,
            ln1_g=jnp.ones((1, H), F32), ln1_b=jnp.zeros((1, H), F32),
            wi=wi, bi=bi, wout=wout, bout=bout,
            ln2_g=jnp.ones((1, H), F32), ln2_b=jnp.zeros((1, H), F32)))
    p["layers"] = layers

    # LateFusion(in1=bert_hidden, in2=gene2vec_hidden, hidden_size=fusion_hidden, out=bert_hidden)
    g2v, fus = cfg["gene2vec_hidden"], cfg["fusion_hidden"]
    we1, be1 = lin(H, fus)
    we2, be2 = lin(g2v, g2v)
    wu1, bu1 = lin(g2v, fus)
    wu2, bu2 = lin(fus, fus)
    wu3, bu3 = lin(fus, fus)
    wf1, bf1 = lin(2 * fus, fus)
    wf2, bf2 = lin(fus, H)
    p["fusion"] = dict(we1=we1, be1=be1, we2=we2, be2=be2,
                       wu1=wu1, bu1=bu1, wu2=wu2, bu2=bu2, wu3=wu3, bu3=bu3,
                       # fc1 weight pre-split so the in-kernel concat becomes two matmuls
                       wf1a=wf1[:fus], wf1b=wf1[fus:], bf1=bf1,
                       wf2=wf2, bf2=bf2)

    # classification pipeline head: Linear(bert_hidden, n_labels)
    p["pipeline"] = lin(H, cfg["n_labels"])
    return p


# -------------------------------- forward ----------------------------------

def fine_tuned_bert_forward(params, cfg, input_ids, attention_mask, gene2vec=None):
    B, S = input_ids.shape
    nh = cfg["heads"]
    mask3 = attention_mask.astype(F32).reshape(B, 1, S)

    # embeddings: gather in plain JAX, sum + LayerNorm fused in one kernel
    # (token_type_ids hardcoded to 0, as in single-segment BERT usage)
    word = params["word_emb"][input_ids]                  # (B, S, H)
    x = embed_layernorm(word, params["pos_emb"][:S], params["type_emb"][0:1],
                        params["emb_ln_g"], params["emb_ln_b"])

    for lyr in params["layers"]:
        x = encoder_layer(x, mask3, lyr, num_heads=nh)
    hidden_state = x                                      # (B, S, H)
    # NOTE: the BERT pooler (CLS + tanh) output is unused when pool == "mean", so it is skipped.

    if gene2vec is not None:
        embeddings, logits = fused_head(
            hidden_state, mask3, gene2vec.reshape(B, 1, -1),
            params["fusion"], params["pipeline"])
    else:
        embeddings, logits = pooled_head(hidden_state, mask3, params["pipeline"])
    return embeddings, hidden_state, logits


# ---------------------------------- main ------------------------------------

if __name__ == "__main__":
    cfg = dict(
        vocab=100, hidden=32, heads=4, layers=2, intermediate=64, max_pos=16,
        gene2vec_hidden=16, fusion_hidden=40, n_labels=3,
    )
    B, S = 2, 8

    key = jax.random.PRNGKey(0)
    kp, kid, kg = jax.random.split(key, 3)
    params = make_params(kp, cfg)

    input_ids = jax.random.randint(kid, (B, S), 0, cfg["vocab"], dtype=jnp.int32)
    attention_mask = jnp.array(
        [[1, 1, 1, 1, 1, 1, 1, 1],
         [1, 1, 1, 1, 1, 0, 0, 0]], dtype=jnp.int32)
    gene2vec = jax.random.normal(kg, (B, cfg["gene2vec_hidden"]), F32)

    fwd = jax.jit(functools.partial(fine_tuned_bert_forward, params, cfg))
    embeddings, hidden_state, logits = fwd(input_ids, attention_mask, gene2vec)
    jax.block_until_ready((embeddings, hidden_state, logits))

    assert embeddings.shape == (B, cfg["hidden"])
    assert hidden_state.shape == (B, S, cfg["hidden"])
    assert logits.shape == (B, cfg["n_labels"])
    assert bool(jnp.all(jnp.isfinite(embeddings)))
    assert bool(jnp.all(jnp.isfinite(logits)))
    print("KERNEL_OK")
</pallas_src>

<mosaic_0001>
module attributes {stable_mosaic.version = 11 : i64} {
  func.func @_embed_ln_kernel(%arg0: i32, %arg1: memref<1x8x32xf32, #tpu.memory_space<vmem>>, %arg2: memref<8x32xf32, #tpu.memory_space<vmem>>, %arg3: memref<1x32xf32, #tpu.memory_space<vmem>>, %arg4: memref<1x32xf32, #tpu.memory_space<vmem>>, %arg5: memref<1x32xf32, #tpu.memory_space<vmem>>, %arg6: memref<1x8x32xf32, #tpu.memory_space<vmem>>) attributes {dimension_semantics = [#tpu.dimension_semantics<parallel>], iteration_bounds = array<i64: 2>, scalar_prefetch = 0 : i64, scratch_operands = 0 : i64, tpu.core_type = #tpu.core_type<tc>, window_params = [{transform_indices = @transform_0, window_bounds = array<i64: 1, 8, 32>}, {pipeline_mode = #tpu.pipeline_mode<synchronous>, transform_indices = @transform_1, window_bounds = array<i64: 8, 32>}, {pipeline_mode = #tpu.pipeline_mode<synchronous>, transform_indices = @transform_2, window_bounds = array<i64: 1, 32>}, {pipeline_mode = #tpu.pipeline_mode<synchronous>, transform_indices = @transform_3, window_bounds = array<i64: 1, 32>}, {pipeline_mode = #tpu.pipeline_mode<synchronous>, transform_indices = @transform_4, window_bounds = array<i64: 1, 32>}, {transform_indices = @transform_5, window_bounds = array<i64: 1, 8, 32>}]} {
    %c0 = arith.constant 0 : index
    %c0_0 = arith.constant 0 : index
    %c0_1 = arith.constant 0 : index
    %0 = vector.load %arg1[%c0, %c0_0, %c0_1] : memref<1x8x32xf32, #tpu.memory_space<vmem>>, vector<1x8x32xf32>
    %1 = vector.shape_cast %0 : vector<1x8x32xf32> to vector<8x32xf32>
    %c0_2 = arith.constant 0 : index
    %c0_3 = arith.constant 0 : index
    %2 = vector.load %arg2[%c0_2, %c0_3] : memref<8x32xf32, #tpu.memory_space<vmem>>, vector<8x32xf32>
    %3 = arith.addf %1, %2 : vector<8x32xf32>
    %c0_4 = arith.constant 0 : index
    %c0_5 = arith.constant 0 : index
    %4 = vector.load %arg3[%c0_4, %c0_5] : memref<1x32xf32, #tpu.memory_space<vmem>>, vector<1x32xf32>
    %5 = vector.broadcast %4 : vector<1x32xf32> to vector<8x32xf32>
    %6 = arith.addf %3, %5 : vector<8x32xf32>
    %c0_6 = arith.constant 0 : index
    %c0_7 = arith.constant 0 : index
    %7 = vector.load %arg4[%c0_6, %c0_7] : memref<1x32xf32, #tpu.memory_space<vmem>>, vector<1x32xf32>
    %c0_8 = arith.constant 0 : index
    %c0_9 = arith.constant 0 : index
    %8 = vector.load %arg5[%c0_8, %c0_9] : memref<1x32xf32, #tpu.memory_space<vmem>>, vector<1x32xf32>
    %cst = arith.constant dense<0.000000e+00> : vector<8xf32>
    %9 = vector.multi_reduction <add>, %6, %cst [1] : vector<8x32xf32> to vector<8xf32>
    %10 = vector.shape_cast %9 : vector<8xf32> to vector<8x1xf32>
    %cst_10 = arith.constant 3.200000e+01 : f32
    %11 = vector.broadcast %cst_10 : f32 to vector<8x1xf32>
    %12 = arith.divf %10, %11 : vector<8x1xf32>
    %13 = vector.broadcast %12 : vector<8x1xf32> to vector<8x32xf32>
    %14 = arith.subf %6, %13 : vector<8x32xf32>
    %15 = arith.mulf %14, %14 : vector<8x32xf32>
    %cst_11 = arith.constant dense<0.000000e+00> : vector<8xf32>
    %16 = vector.multi_reduction <add>, %15, %cst_11 [1] : vector<8x32xf32> to vector<8xf32>
    %17 = vector.shape_cast %16 : vector<8xf32> to vector<8x1xf32>
    %cst_12 = arith.constant 3.200000e+01 : f32
    %18 = vector.broadcast %cst_12 : f32 to vector<8x1xf32>
    %19 = arith.divf %17, %18 : vector<8x1xf32>
    %20 = vector.broadcast %12 : vector<8x1xf32> to vector<8x32xf32>
    %21 = arith.subf %6, %20 : vector<8x32xf32>
    %cst_13 = arith.constant 9.99999996E-13 : f32
    %22 = vector.broadcast %cst_13 : f32 to vector<8x1xf32>
    %23 = arith.addf %19, %22 : vector<8x1xf32>
    %24 = math.rsqrt %23 : vector<8x1xf32>
    %25 = vector.broadcast %24 : vector<8x1xf32> to vector<8x32xf32>
    %26 = arith.mulf %21, %25 : vector<8x32xf32>
    %27 = vector.broadcast %7 : vector<1x32xf32> to vector<8x32xf32>
    %28 = arith.mulf %26, %27 : vector<8x32xf32>
    %29 = vector.broadcast %8 : vector<1x32xf32> to vector<8x32xf32>
    %30 = arith.addf %28, %29 : vector<8x32xf32>
    %c0_14 = arith.constant 0 : index
    %c0_15 = arith.constant 0 : index
    %c0_16 = arith.constant 0 : index
    %31 = vector.load %arg6[%c0_14, %c0_15, %c0_16] : memref<1x8x32xf32, #tpu.memory_space<vmem>>, vector<1x8x32xf32>
    %32 = vector.shape_cast %31 : vector<1x8x32xf32> to vector<8x32xf32>
    %33 = vector.shape_cast %30 : vector<8x32xf32> to vector<1x8x32xf32>
    tpu.vector_store %arg6[%c0_14, %c0_15, %c0_16], %33 {strides = array<i32>} : memref<1x8x32xf32, #tpu.memory_space<vmem>>, vector<1x8x32xf32>,
    return
  }
  func.func @transform_0(%arg0: i32) -> (i32, i32, i32) {
    %c0_i32 = arith.constant 0 : i32
    %c0_i32_0 = arith.constant 0 : i32
    %c0_i32_1 = arith.constant 0 : i32
    return %arg0, %c0_i32, %c0_i32_0 : i32, i32, i32
  }
  func.func @transform_1(%arg0: i32) -> (i32, i32) {
    %c0_i32 = arith.constant 0 : i32
    %c0_i32_0 = arith.constant 0 : i32
    %c0_i32_1 = arith.constant 0 : i32
    return %c0_i32, %c0_i32_0 : i32, i32
  }
  func.func @transform_2(%arg0: i32) -> (i32, i32) {
    %c0_i32 = arith.constant 0 : i32
    %c0_i32_0 = arith.constant 0 : i32
    %c0_i32_1 = arith.constant 0 : i32
    return %c0_i32, %c0_i32_0 : i32, i32
  }
  func.func @transform_3(%arg0: i32) -> (i32, i32) {
    %c0_i32 = arith.constant 0 : i32
    %c0_i32_0 = arith.constant 0 : i32
    %c0_i32_1 = arith.constant 0 : i32
    return %c0_i32, %c0_i32_0 : i32, i32
  }
  func.func @transform_4(%arg0: i32) -> (i32, i32) {
    %c0_i32 = arith.constant 0 : i32
    %c0_i32_0 = arith.constant 0 : i32
    %c0_i32_1 = arith.constant 0 : i32
    return %c0_i32, %c0_i32_0 : i32, i32
  }
  func.func @transform_5(%arg0: i32) -> (i32, i32, i32) {
    %c0_i32 = arith.constant 0 : i32
    %c0_i32_0 = arith.constant 0 : i32
    %c0_i32_1 = arith.constant 0 : i32
    return %arg0, %c0_i32, %c0_i32_0 : i32, i32, i32
  }
}

module attributes {stable_mosaic.version = 11 : i64} {
  func.func @_encoder_layer_kernel(%arg0: i32, %arg1: memref<1x8x32xf32, #tpu.memory_space<vmem>>, %arg2: memref<1x1x8xf32, #tpu.memory_space<vmem>>, %arg3: memref<32x96xbf16, #tpu.memory_space<vmem>>, %arg4: memref<1x96xf32, #tpu.memory_space<vmem>>, %arg5: memref<32x32xbf16, #tpu.memory_space<vmem>>, %arg6: memref<1x32xf32, #tpu.memory_space<vmem>>, %arg7: memref<1x32xf32, #tpu.memory_space<vmem>>, %arg8: memref<1x32xf32, #tpu.memory_space<vmem>>, %arg9: memref<32x64xbf16, #tpu.memory_space<vmem>>, %arg10: memref<1x64xf32, #tpu.memory_space<vmem>>, %arg11: memref<64x32xbf16, #tpu.memory_space<vmem>>, %arg12: memref<1x32xf32, #tpu.memory_space<vmem>>, %arg13: memref<1x32xf32, #tpu.memory_space<vmem>>, %arg14: memref<1x32xf32, #tpu.memory_space<vmem>>, %arg15: memref<1x8x32xf32, #tpu.memory_space<vmem>>) attributes {dimension_semantics = [#tpu.dimension_semantics<parallel>], iteration_bounds = array<i64: 2>, scalar_prefetch = 0 : i64, scratch_operands = 0 : i64, tpu.core_type = #tpu.core_type<tc>, window_params = [{transform_indices = @transform_0, window_bounds = array<i64: 1, 8, 32>}, {transform_indices = @transform_1, window_bounds = array<i64: 1, 1, 8>}, {pipeline_mode = #tpu.pipeline_mode<synchronous>, transform_indices = @transform_2, window_bounds = array<i64: 32, 96>}, {pipeline_mode = #tpu.pipeline_mode<synchronous>, transform_indices = @transform_3, window_bounds = array<i64: 1, 96>}, {pipeline_mode = #tpu.pipeline_mode<synchronous>, transform_indices = @transform_4, window_bounds = array<i64: 32, 32>}, {pipeline_mode = #tpu.pipeline_mode<synchronous>, transform_indices = @transform_5, window_bounds = array<i64: 1, 32>}, {pipeline_mode = #tpu.pipeline_mode<synchronous>, transform_indices = @transform_6, window_bounds = array<i64: 1, 32>}, {pipeline_mode = #tpu.pipeline_mode<synchronous>, transform_indices = @transform_7, window_bounds = array<i64: 1, 32>}, {pipeline_mode = #tpu.pipeline_mode<synchronous>, transform_indices = @transform_8, window_bounds = array<i64: 32, 64>}, {pipeline_mode = #tpu.pipeline_mode<synchronous>, transform_indices = @transform_9, window_bounds = array<i64: 1, 64>}, {pipeline_mode = #tpu.pipeline_mode<synchronous>, transform_indices = @transform_10, window_bounds = array<i64: 64, 32>}, {pipeline_mode = #tpu.pipeline_mode<synchronous>, transform_indices = @transform_11, window_bounds = array<i64: 1, 32>}, {pipeline_mode = #tpu.pipeline_mode<synchronous>, transform_indices = @transform_12, window_bounds = array<i64: 1, 32>}, {pipeline_mode = #tpu.pipeline_mode<synchronous>, transform_indices = @transform_13, window_bounds = array<i64: 1, 32>}, {transform_indices = @transform_14, window_bounds = array<i64: 1, 8, 32>}]} {
    %c0 = arith.constant 0 : index
    %c0_0 = arith.constant 0 : index
    %c0_1 = arith.constant 0 : index
    %0 = vector.load %arg1[%c0, %c0_0, %c0_1] : memref<1x8x32xf32, #tpu.memory_space<vmem>>, vector<1x8x32xf32>
    %1 = vector.shape_cast %0 : vector<1x8x32xf32> to vector<8x32xf32>
    %2 = arith.truncf %1 : vector<8x32xf32> to vector<8x32xbf16>
    %c0_2 = arith.constant 0 : index
    %c0_3 = arith.constant 0 : index
    %3 = vector.load %arg3[%c0_2, %c0_3] : memref<32x96xbf16, #tpu.memory_space<vmem>>, vector<32x96xbf16>
    %cst = arith.constant dense<0.000000e+00> : vector<8x96xf32>
    %4 = tpu.matmul %2, %3, %cst {dimension_numbers = #tpu.dot_dimension_numbers<[1], [0], [0], [1], [0, 0, 1, 1], [], []>} : vector<8x32xbf16>, vector<32x96xbf16>, vector<8x96xf32> -> vector<8x96xf32>
    %c0_4 = arith.constant 0 : index
    %c0_5 = arith.constant 0 : index
    %5 = vector.load %arg4[%c0_4, %c0_5] : memref<1x96xf32, #tpu.memory_space<vmem>>, vector<1x96xf32>
    %6 = vector.broadcast %5 : vector<1x96xf32> to vector<8x96xf32>
    %7 = arith.addf %4, %6 : vector<8x96xf32>
    %c0_6 = arith.constant 0 : index
    %c0_7 = arith.constant 0 : index
    %c0_8 = arith.constant 0 : index
    %8 = vector.load %arg2[%c0_6, %c0_7, %c0_8] : memref<1x1x8xf32, #tpu.memory_space<vmem>>, vector<1x1x8xf32>
    %9 = vector.shape_cast %8 : vector<1x1x8xf32> to vector<1x8xf32>
    %cst_9 = arith.constant 1.000000e+00 : f32
    %10 = vector.broadcast %cst_9 : f32 to vector<1x8xf32>
    %11 = arith.subf %10, %9 : vector<1x8xf32>
    %cst_10 = arith.constant -1.000000e+09 : f32
    %12 = vector.broadcast %cst_10 : f32 to vector<1x8xf32>
    %13 = arith.mulf %11, %12 : vector<1x8xf32>
    %14 = vector.extract_strided_slice %7 {offsets = [0, 0], sizes = [8, 8], strides = [1, 1]} : vector<8x96xf32> to vector<8x8xf32>
    %15 = arith.truncf %14 : vector<8x8xf32> to vector<8x8xbf16>
    %16 = vector.extract_strided_slice %7 {offsets = [0, 32], sizes = [8, 8], strides = [1, 1]} : vector<8x96xf32> to vector<8x8xf32>
    %17 = arith.truncf %16 : vector<8x8xf32> to vector<8x8xbf16>
    %18 = vector.extract_strided_slice %7 {offsets = [0, 64], sizes = [8, 8], strides = [1, 1]} : vector<8x96xf32> to vector<8x8xf32>
    %19 = arith.truncf %18 : vector<8x8xf32> to vector<8x8xbf16>
    "tpu.trace_start"() <{level = 10 : i32, message = "qd,kd->qk"}> : () -> ()
    %cst_11 = arith.constant dense<0.000000e+00> : vector<8x8xf32>
    %20 = tpu.matmul %15, %17, %cst_11 {dimension_numbers = #tpu.dot_dimension_numbers<[1], [1], [0], [0], [0, 0, 1, 0], [], []>} : vector<8x8xbf16>, vector<8x8xbf16>, vector<8x8xf32> -> vector<8x8xf32>
    "tpu.trace_stop"() : () -> ()
    %cst_12 = arith.constant 0.353553385 : f32
    %21 = vector.broadcast %cst_12 : f32 to vector<8x8xf32>
    %22 = arith.mulf %20, %21 : vector<8x8xf32>
    %23 = vector.broadcast %13 : vector<1x8xf32> to vector<8x8xf32>
    %24 = arith.addf %22, %23 : vector<8x8xf32>
    %cst_13 = arith.constant dense<0xFF800000> : vector<8xf32>
    %25 = vector.multi_reduction <maximumf>, %24, %cst_13 [1] : vector<8x8xf32> to vector<8xf32>
    %26 = vector.shape_cast %25 : vector<8xf32> to vector<8x1xf32>
    %27 = vector.broadcast %26 : vector<8x1xf32> to vector<8x8xf32>
    %28 = arith.subf %24, %27 : vector<8x8xf32>
    %29 = math.exp %28 : vector<8x8xf32>
    %cst_14 = arith.constant dense<0.000000e+00> : vector<8xf32>
    %30 = vector.multi_reduction <add>, %29, %cst_14 [1] : vector<8x8xf32> to vector<8xf32>
    %31 = vector.shape_cast %30 : vector<8xf32> to vector<8x1xf32>
    %32 = tpu.reciprocal %31 {approx = true} : vector<8x1xf32> -> vector<8x1xf32>
    %33 = vector.broadcast %32 : vector<8x1xf32> to vector<8x8xf32>
    %34 = arith.mulf %29, %33 : vector<8x8xf32>
    %35 = arith.truncf %34 : vector<8x8xf32> to vector<8x8xbf16>
    %cst_15 = arith.constant dense<0.000000e+00> : vector<8x8xf32>
    %36 = tpu.matmul %35, %19, %cst_15 {dimension_numbers = #tpu.dot_dimension_numbers<[1], [0], [0], [1], [0, 0, 1, 1], [], []>} : vector<8x8xbf16>, vector<8x8xbf16>, vector<8x8xf32> -> vector<8x8xf32>
    %37 = vector.extract_strided_slice %7 {offsets = [0, 8], sizes = [8, 8], strides = [1, 1]} : vector<8x96xf32> to vector<8x8xf32>
    %38 = arith.truncf %37 : vector<8x8xf32> to vector<8x8xbf16>
    %39 = vector.extract_strided_slice %7 {offsets = [0, 40], sizes = [8, 8], strides = [1, 1]} : vector<8x96xf32> to vector<8x8xf32>
    %40 = arith.truncf %39 : vector<8x8xf32> to vector<8x8xbf16>
    %41 = vector.extract_strided_slice %7 {offsets = [0, 72], sizes = [8, 8], strides = [1, 1]} : vector<8x96xf32> to vector<8x8xf32>
    %42 = arith.truncf %41 : vector<8x8xf32> to vector<8x8xbf16>
    "tpu.trace_start"() <{level = 10 : i32, message = "qd,kd->qk"}> : () -> ()
    %cst_16 = arith.constant dense<0.000000e+00> : vector<8x8xf32>
    %43 = tpu.matmul %38, %40, %cst_16 {dimension_numbers = #tpu.dot_dimension_numbers<[1], [1], [0], [0], [0, 0, 1, 0], [], []>} : vector<8x8xbf16>, vector<8x8xbf16>, vector<8x8xf32> -> vector<8x8xf32>
    "tpu.trace_stop"() : () -> ()
    %cst_17 = arith.constant 0.353553385 : f32
    %44 = vector.broadcast %cst_17 : f32 to vector<8x8xf32>
    %45 = arith.mulf %43, %44 : vector<8x8xf32>
    %46 = vector.broadcast %13 : vector<1x8xf32> to vector<8x8xf32>
    %47 = arith.addf %45, %46 : vector<8x8xf32>
    %cst_18 = arith.constant dense<0xFF800000> : vector<8xf32>
    %48 = vector.multi_reduction <maximumf>, %47, %cst_18 [1] : vector<8x8xf32> to vector<8xf32>
    %49 = vector.shape_cast %48 : vector<8xf32> to vector<8x1xf32>
    %50 = vector.broadcast %49 : vector<8x1xf32> to vector<8x8xf32>
    %51 = arith.subf %47, %50 : vector<8x8xf32>
    %52 = math.exp %51 : vector<8x8xf32>
    %cst_19 = arith.constant dense<0.000000e+00> : vector<8xf32>
    %53 = vector.multi_reduction <add>, %52, %cst_19 [1] : vector<8x8xf32> to vector<8xf32>
    %54 = vector.shape_cast %53 : vector<8xf32> to vector<8x1xf32>
    %55 = tpu.reciprocal %54 {approx = true} : vector<8x1xf32> -> vector<8x1xf32>
    %56 = vector.broadcast %55 : vector<8x1xf32> to vector<8x8xf32>
    %57 = arith.mulf %52, %56 : vector<8x8xf32>
    %58 = arith.truncf %57 : vector<8x8xf32> to vector<8x8xbf16>
    %cst_20 = arith.constant dense<0.000000e+00> : vector<8x8xf32>
    %59 = tpu.matmul %58, %42, %cst_20 {dimension_numbers = #tpu.dot_dimension_numbers<[1], [0], [0], [1], [0, 0, 1, 1], [], []>} : vector<8x8xbf16>, vector<8x8xbf16>, vector<8x8xf32> -> vector<8x8xf32>
    %60 = vector.extract_strided_slice %7 {offsets = [0, 16], sizes = [8, 8], strides = [1, 1]} : vector<8x96xf32> to vector<8x8xf32>
    %61 = arith.truncf %60 : vector<8x8xf32> to vector<8x8xbf16>
    %62 = vector.extract_strided_slice %7 {offsets = [0, 48], sizes = [8, 8], strides = [1, 1]} : vector<8x96xf32> to vector<8x8xf32>
    %63 = arith.truncf %62 : vector<8x8xf32> to vector<8x8xbf16>
    %64 = vector.extract_strided_slice %7 {offsets = [0, 80], sizes = [8, 8], strides = [1, 1]} : vector<8x96xf32> to vector<8x8xf32>
    %65 = arith.truncf %64 : vector<8x8xf32> to vector<8x8xbf16>
    "tpu.trace_start"() <{level = 10 : i32, message = "qd,kd->qk"}> : () -> ()
    %cst_21 = arith.constant dense<0.000000e+00> : vector<8x8xf32>
    %66 = tpu.matmul %61, %63, %cst_21 {dimension_numbers = #tpu.dot_dimension_numbers<[1], [1], [0], [0], [0, 0, 1, 0], [], []>} : vector<8x8xbf16>, vector<8x8xbf16>, vector<8x8xf32> -> vector<8x8xf32>
    "tpu.trace_stop"() : () -> ()
    %cst_22 = arith.constant 0.353553385 : f32
    %67 = vector.broadcast %cst_22 : f32 to vector<8x8xf32>
    %68 = arith.mulf %66, %67 : vector<8x8xf32>
    %69 = vector.broadcast %13 : vector<1x8xf32> to vector<8x8xf32>
    %70 = arith.addf %68, %69 : vector<8x8xf32>
    %cst_23 = arith.constant dense<0xFF800000> : vector<8xf32>
    %71 = vector.multi_reduction <maximumf>, %70, %cst_23 [1] : vector<8x8xf32> to vector<8xf32>
    %72 = vector.shape_cast %71 : vector<8xf32> to vector<8x1xf32>
    %73 = vector.broadcast %72 : vector<8x1xf32> to vector<8x8xf32>
    %74 = arith.subf %70, %73 : vector<8x8xf32>
    %75 = math.exp %74 : vector<8x8xf32>
    %cst_24 = arith.constant dense<0.000000e+00> : vector<8xf32>
    %76 = vector.multi_reduction <add>, %75, %cst_24 [1] : vector<8x8xf32> to vector<8xf32>
    %77 = vector.shape_cast %76 : vector<8xf32> to vector<8x1xf32>
    %78 = tpu.reciprocal %77 {approx = true} : vector<8x1xf32> -> vector<8x1xf32>
    %79 = vector.broadcast %78 : vector<8x1xf32> to vector<8x8xf32>
    %80 = arith.mulf %75, %79 : vector<8x8xf32>
    %81 = arith.truncf %80 : vector<8x8xf32> to vector<8x8xbf16>
    %cst_25 = arith.constant dense<0.000000e+00> : vector<8x8xf32>
    %82 = tpu.matmul %81, %65, %cst_25 {dimension_numbers = #tpu.dot_dimension_numbers<[1], [0], [0], [1], [0, 0, 1, 1], [], []>} : vector<8x8xbf16>, vector<8x8xbf16>, vector<8x8xf32> -> vector<8x8xf32>
    %83 = vector.extract_strided_slice %7 {offsets = [0, 24], sizes = [8, 8], strides = [1, 1]} : vector<8x96xf32> to vector<8x8xf32>
    %84 = arith.truncf %83 : vector<8x8xf32> to vector<8x8xbf16>
    %85 = vector.extract_strided_slice %7 {offsets = [0, 56], sizes = [8, 8], strides = [1, 1]} : vector<8x96xf32> to vector<8x8xf32>
    %86 = arith.truncf %85 : vector<8x8xf32> to vector<8x8xbf16>
    %87 = vector.extract_strided_slice %7 {offsets = [0, 88], sizes = [8, 8], strides = [1, 1]} : vector<8x96xf32> to vector<8x8xf32>
    %88 = arith.truncf %87 : vector<8x8xf32> to vector<8x8xbf16>
    "tpu.trace_start"() <{level = 10 : i32, message = "qd,kd->qk"}> : () -> ()
    %cst_26 = arith.constant dense<0.000000e+00> : vector<8x8xf32>
    %89 = tpu.matmul %84, %86, %cst_26 {dimension_numbers = #tpu.dot_dimension_numbers<[1], [1], [0], [0], [0, 0, 1, 0], [], []>} : vector<8x8xbf16>, vector<8x8xbf16>, vector<8x8xf32> -> vector<8x8xf32>
    "tpu.trace_stop"() : () -> ()
    %cst_27 = arith.constant 0.353553385 : f32
    %90 = vector.broadcast %cst_27 : f32 to vector<8x8xf32>
    %91 = arith.mulf %89, %90 : vector<8x8xf32>
    %92 = vector.broadcast %13 : vector<1x8xf32> to vector<8x8xf32>
    %93 = arith.addf %91, %92 : vector<8x8xf32>
    %cst_28 = arith.constant dense<0xFF800000> : vector<8xf32>
    %94 = vector.multi_reduction <maximumf>, %93, %cst_28 [1] : vector<8x8xf32> to vector<8xf32>
    %95 = vector.shape_cast %94 : vector<8xf32> to vector<8x1xf32>
    %96 = vector.broadcast %95 : vector<8x1xf32> to vector<8x8xf32>
    %97 = arith.subf %93, %96 : vector<8x8xf32>
    %98 = math.exp %97 : vector<8x8xf32>
    %cst_29 = arith.constant dense<0.000000e+00> : vector<8xf32>
    %99 = vector.multi_reduction <add>, %98, %cst_29 [1] : vector<8x8xf32> to vector<8xf32>
    %100 = vector.shape_cast %99 : vector<8xf32> to vector<8x1xf32>
    %101 = tpu.reciprocal %100 {approx = true} : vector<8x1xf32> -> vector<8x1xf32>
    %102 = vector.broadcast %101 : vector<8x1xf32> to vector<8x8xf32>
    %103 = arith.mulf %98, %102 : vector<8x8xf32>
    %104 = arith.truncf %103 : vector<8x8xf32> to vector<8x8xbf16>
    %cst_30 = arith.constant dense<0.000000e+00> : vector<8x8xf32>
    %105 = tpu.matmul %104, %88, %cst_30 {dimension_numbers = #tpu.dot_dimension_numbers<[1], [0], [0], [1], [0, 0, 1, 1], [], []>} : vector<8x8xbf16>, vector<8x8xbf16>, vector<8x8xf32> -> vector<8x8xf32>
    %106 = tpu.concatenate %36, %59, %82, %105 in 1 : vector<8x8xf32>, vector<8x8xf32>, vector<8x8xf32>, vector<8x8xf32> -> vector<8x32xf32>
    %107 = arith.truncf %106 : vector<8x32xf32> to vector<8x32xbf16>
    %c0_31 = arith.constant 0 : index
    %c0_32 = arith.constant 0 : index
    %108 = vector.load %arg5[%c0_31, %c0_32] : memref<32x32xbf16, #tpu.memory_space<vmem>>, vector<32x32xbf16>
    %cst_33 = arith.constant dense<0.000000e+00> : vector<8x32xf32>
    %109 = tpu.matmul %107, %108, %cst_33 {dimension_numbers = #tpu.dot_dimension_numbers<[1], [0], [0], [1], [0, 0, 1, 1], [], []>} : vector<8x32xbf16>, vector<32x32xbf16>, vector<8x32xf32> -> vector<8x32xf32>
    %c0_34 = arith.constant 0 : index
    %c0_35 = arith.constant 0 : index
    %110 = vector.load %arg6[%c0_34, %c0_35] : memref<1x32xf32, #tpu.memory_space<vmem>>, vector<1x32xf32>
    %111 = vector.broadcast %110 : vector<1x32xf32> to vector<8x32xf32>
    %112 = arith.addf %109, %111 : vector<8x32xf32>
    %113 = arith.addf %1, %112 : vector<8x32xf32>
    %c0_36 = arith.constant 0 : index
    %c0_37 = arith.constant 0 : index
    %114 = vector.load %arg7[%c0_36, %c0_37] : memref<1x32xf32, #tpu.memory_space<vmem>>, vector<1x32xf32>
    %c0_38 = arith.constant 0 : index
    %c0_39 = arith.constant 0 : index
    %115 = vector.load %arg8[%c0_38, %c0_39] : memref<1x32xf32, #tpu.memory_space<vmem>>, vector<1x32xf32>
    %cst_40 = arith.constant dense<0.000000e+00> : vector<8xf32>
    %116 = vector.multi_reduction <add>, %113, %cst_40 [1] : vector<8x32xf32> to vector<8xf32>
    %117 = vector.shape_cast %116 : vector<8xf32> to vector<8x1xf32>
    %cst_41 = arith.constant 3.200000e+01 : f32
    %118 = vector.broadcast %cst_41 : f32 to vector<8x1xf32>
    %119 = arith.divf %117, %118 : vector<8x1xf32>
    %120 = vector.broadcast %119 : vector<8x1xf32> to vector<8x32xf32>
    %121 = arith.subf %113, %120 : vector<8x32xf32>
    %122 = arith.mulf %121, %121 : vector<8x32xf32>
    %cst_42 = arith.constant dense<0.000000e+00> : vector<8xf32>
    %123 = vector.multi_reduction <add>, %122, %cst_42 [1] : vector<8x32xf32> to vector<8xf32>
    %124 = vector.shape_cast %123 : vector<8xf32> to vector<8x1xf32>
    %cst_43 = arith.constant 3.200000e+01 : f32
    %125 = vector.broadcast %cst_43 : f32 to vector<8x1xf32>
    %126 = arith.divf %124, %125 : vector<8x1xf32>
    %127 = vector.broadcast %119 : vector<8x1xf32> to vector<8x32xf32>
    %128 = arith.subf %113, %127 : vector<8x32xf32>
    %cst_44 = arith.constant 9.99999996E-13 : f32
    %129 = vector.broadcast %cst_44 : f32 to vector<8x1xf32>
    %130 = arith.addf %126, %129 : vector<8x1xf32>
    %131 = math.rsqrt %130 : vector<8x1xf32>
    %132 = vector.broadcast %131 : vector<8x1xf32> to vector<8x32xf32>
    %133 = arith.mulf %128, %132 : vector<8x32xf32>
    %134 = vector.broadcast %114 : vector<1x32xf32> to vector<8x32xf32>
    %135 = arith.mulf %133, %134 : vector<8x32xf32>
    %136 = vector.broadcast %115 : vector<1x32xf32> to vector<8x32xf32>
    %137 = arith.addf %135, %136 : vector<8x32xf32>
    %138 = arith.truncf %137 : vector<8x32xf32> to vector<8x32xbf16>
    %c0_45 = arith.constant 0 : index
    %c0_46 = arith.constant 0 : index
    %139 = vector.load %arg9[%c0_45, %c0_46] : memref<32x64xbf16, #tpu.memory_space<vmem>>, vector<32x64xbf16>
    %cst_47 = arith.constant dense<0.000000e+00> : vector<8x64xf32>
    %140 = tpu.matmul %138, %139, %cst_47 {dimension_numbers = #tpu.dot_dimension_numbers<[1], [0], [0], [1], [0, 0, 1, 1], [], []>} : vector<8x32xbf16>, vector<32x64xbf16>, vector<8x64xf32> -> vector<8x64xf32>
    %c0_48 = arith.constant 0 : index
    %c0_49 = arith.constant 0 : index
    %141 = vector.load %arg10[%c0_48, %c0_49] : memref<1x64xf32, #tpu.memory_space<vmem>>, vector<1x64xf32>
    %142 = vector.broadcast %141 : vector<1x64xf32> to vector<8x64xf32>
    %143 = arith.addf %140, %142 : vector<8x64xf32>
    %144 = arith.mulf %143, %143 : vector<8x64xf32>
    %145 = arith.mulf %143, %144 : vector<8x64xf32>
    %cst_50 = arith.constant 4.471500e-02 : f32
    %146 = vector.broadcast %cst_50 : f32 to vector<8x64xf32>
    %147 = arith.mulf %146, %145 : vector<8x64xf32>
    %148 = arith.addf %143, %147 : vector<8x64xf32>
    %cst_51 = arith.constant 0.797884583 : f32
    %149 = vector.broadcast %cst_51 : f32 to vector<8x64xf32>
    %150 = arith.mulf %149, %148 : vector<8x64xf32>
    %151 = math.tanh %150 : vector<8x64xf32>
    %cst_52 = arith.constant 1.000000e+00 : f32
    %152 = vector.broadcast %cst_52 : f32 to vector<8x64xf32>
    %153 = arith.addf %152, %151 : vector<8x64xf32>
    %cst_53 = arith.constant 5.000000e-01 : f32
    %154 = vector.broadcast %cst_53 : f32 to vector<8x64xf32>
    %155 = arith.mulf %154, %153 : vector<8x64xf32>
    %156 = arith.mulf %143, %155 : vector<8x64xf32>
    %157 = arith.truncf %156 : vector<8x64xf32> to vector<8x64xbf16>
    %c0_54 = arith.constant 0 : index
    %c0_55 = arith.constant 0 : index
    %158 = vector.load %arg11[%c0_54, %c0_55] : memref<64x32xbf16, #tpu.memory_space<vmem>>, vector<64x32xbf16>
    %cst_56 = arith.constant dense<0.000000e+00> : vector<8x32xf32>
    %159 = tpu.matmul %157, %158, %cst_56 {dimension_numbers = #tpu.dot_dimension_numbers<[1], [0], [0], [1], [0, 0, 1, 1], [], []>} : vector<8x64xbf16>, vector<64x32xbf16>, vector<8x32xf32> -> vector<8x32xf32>
    %c0_57 = arith.constant 0 : index
    %c0_58 = arith.constant 0 : index
    %160 = vector.load %arg12[%c0_57, %c0_58] : memref<1x32xf32, #tpu.memory_space<vmem>>, vector<1x32xf32>
    %161 = vector.broadcast %160 : vector<1x32xf32> to vector<8x32xf32>
    %162 = arith.addf %159, %161 : vector<8x32xf32>
    %163 = arith.addf %137, %162 : vector<8x32xf32>
    %c0_59 = arith.constant 0 : index
    %c0_60 = arith.constant 0 : index
    %164 = vector.load %arg13[%c0_59, %c0_60] : memref<1x32xf32, #tpu.memory_space<vmem>>, vector<1x32xf32>
    %c0_61 = arith.constant 0 : index
    %c0_62 = arith.constant 0 : index
    %165 = vector.load %arg14[%c0_61, %c0_62] : memref<1x32xf32, #tpu.memory_space<vmem>>, vector<1x32xf32>
    %cst_63 = arith.constant dense<0.000000e+00> : vector<8xf32>
    %166 = vector.multi_reduction <add>, %163, %cst_63 [1] : vector<8x32xf32> to vector<8xf32>
    %167 = vector.shape_cast %166 : vector<8xf32> to vector<8x1xf32>
    %cst_64 = arith.constant 3.200000e+01 : f32
    %168 = vector.broadcast %cst_64 : f32 to vector<8x1xf32>
    %169 = arith.divf %167, %168 : vector<8x1xf32>
    %170 = vector.broadcast %169 : vector<8x1xf32> to vector<8x32xf32>
    %171 = arith.subf %163, %170 : vector<8x32xf32>
    %172 = arith.mulf %171, %171 : vector<8x32xf32>
    %cst_65 = arith.constant dense<0.000000e+00> : vector<8xf32>
    %173 = vector.multi_reduction <add>, %172, %cst_65 [1] : vector<8x32xf32> to vector<8xf32>
    %174 = vector.shape_cast %173 : vector<8xf32> to vector<8x1xf32>
    %cst_66 = arith.constant 3.200000e+01 : f32
    %175 = vector.broadcast %cst_66 : f32 to vector<8x1xf32>
    %176 = arith.divf %174, %175 : vector<8x1xf32>
    %177 = vector.broadcast %169 : vector<8x1xf32> to vector<8x32xf32>
    %178 = arith.subf %163, %177 : vector<8x32xf32>
    %cst_67 = arith.constant 9.99999996E-13 : f32
    %179 = vector.broadcast %cst_67 : f32 to vector<8x1xf32>
    %180 = arith.addf %176, %179 : vector<8x1xf32>
    %181 = math.rsqrt %180 : vector<8x1xf32>
    %182 = vector.broadcast %181 : vector<8x1xf32> to vector<8x32xf32>
    %183 = arith.mulf %178, %182 : vector<8x32xf32>
    %184 = vector.broadcast %164 : vector<1x32xf32> to vector<8x32xf32>
    %185 = arith.mulf %183, %184 : vector<8x32xf32>
    %186 = vector.broadcast %165 : vector<1x32xf32> to vector<8x32xf32>
    %187 = arith.addf %185, %186 : vector<8x32xf32>
    %c0_68 = arith.constant 0 : index
    %c0_69 = arith.constant 0 : index
    %c0_70 = arith.constant 0 : index
    %188 = vector.load %arg15[%c0_68, %c0_69, %c0_70] : memref<1x8x32xf32, #tpu.memory_space<vmem>>, vector<1x8x32xf32>
    %189 = vector.shape_cast %188 : vector<1x8x32xf32> to vector<8x32xf32>
    %190 = vector.shape_cast %187 : vector<8x32xf32> to vector<1x8x32xf32>
    tpu.vector_store %arg15[%c0_68, %c0_69, %c0_70], %190 {strides = array<i32>} : memref<1x8x32xf32, #tpu.memory_space<vmem>>, vector<1x8x32xf32>,
    return
  }
  func.func @transform_0(%arg0: i32) -> (i32, i32, i32) {
    %c0_i32 = arith.constant 0 : i32
    %c0_i32_0 = arith.constant 0 : i32
    %c0_i32_1 = arith.constant 0 : i32
    return %arg0, %c0_i32, %c0_i32_0 : i32, i32, i32
  }
  func.func @transform_1(%arg0: i32) -> (i32, i32, i32) {
    %c0_i32 = arith.constant 0 : i32
    %c0_i32_0 = arith.constant 0 : i32
    %c0_i32_1 = arith.constant 0 : i32
    return %arg0, %c0_i32, %c0_i32_0 : i32, i32, i32
  }
  func.func @transform_2(%arg0: i32) -> (i32, i32) {
    %c0_i32 = arith.constant 0 : i32
    %c0_i32_0 = arith.constant 0 : i32
    %c0_i32_1 = arith.constant 0 : i32
    return %c0_i32, %c0_i32_0 : i32, i32
  }
  func.func @transform_3(%arg0: i32) -> (i32, i32) {
    %c0_i32 = arith.constant 0 : i32
    %c0_i32_0 = arith.constant 0 : i32
    %c0_i32_1 = arith.constant 0 : i32
    return %c0_i32, %c0_i32_0 : i32, i32
  }
  func.func @transform_4(%arg0: i32) -> (i32, i32) {
    %c0_i32 = arith.constant 0 : i32
    %c0_i32_0 = arith.constant 0 : i32
    %c0_i32_1 = arith.constant 0 : i32
    return %c0_i32, %c0_i32_0 : i32, i32
  }
  func.func @transform_5(%arg0: i32) -> (i32, i32) {
    %c0_i32 = arith.constant 0 : i32
    %c0_i32_0 = arith.constant 0 : i32
    %c0_i32_1 = arith.constant 0 : i32
    return %c0_i32, %c0_i32_0 : i32, i32
  }
  func.func @transform_6(%arg0: i32) -> (i32, i32) {
    %c0_i32 = arith.constant 0 : i32
    %c0_i32_0 = arith.constant 0 : i32
    %c0_i32_1 = arith.constant 0 : i32
    return %c0_i32, %c0_i32_0 : i32, i32
  }
  func.func @transform_7(%arg0: i32) -> (i32, i32) {
    %c0_i32 = arith.constant 0 : i32
    %c0_i32_0 = arith.constant 0 : i32
    %c0_i32_1 = arith.constant 0 : i32
    return %c0_i32, %c0_i32_0 : i32, i32
  }
  func.func @transform_8(%arg0: i32) -> (i32, i32) {
    %c0_i32 = arith.constant 0 : i32
    %c0_i32_0 = arith.constant 0 : i32
    %c0_i32_1 = arith.constant 0 : i32
    return %c0_i32, %c0_i32_0 : i32, i32
  }
  func.func @transform_9(%arg0: i32) -> (i32, i32) {
    %c0_i32 = arith.constant 0 : i32
    %c0_i32_0 = arith.constant 0 : i32
    %c0_i32_1 = arith.constant 0 : i32
    return %c0_i32, %c0_i32_0 : i32, i32
  }
  func.func @transform_10(%arg0: i32) -> (i32, i32) {
    %c0_i32 = arith.constant 0 : i32
    %c0_i32_0 = arith.constant 0 : i32
    %c0_i32_1 = arith.constant 0 : i32
    return %c0_i32, %c0_i32_0 : i32, i32
  }
  func.func @transform_11(%arg0: i32) -> (i32, i32) {
    %c0_i32 = arith.constant 0 : i32
    %c0_i32_0 = arith.constant 0 : i32
    %c0_i32_1 = arith.constant 0 : i32
    return %c0_i32, %c0_i32_0 : i32, i32
  }
  func.func @transform_12(%arg0: i32) -> (i32, i32) {
    %c0_i32 = arith.constant 0 : i32
    %c0_i32_0 = arith.constant 0 : i32
    %c0_i32_1 = arith.constant 0 : i32
    return %c0_i32, %c0_i32_0 : i32, i32
  }
  func.func @transform_13(%arg0: i32) -> (i32, i32) {
    %c0_i32 = arith.constant 0 : i32
    %c0_i32_0 = arith.constant 0 : i32
    %c0_i32_1 = arith.constant 0 : i32
    return %c0_i32, %c0_i32_0 : i32, i32
  }
  func.func @transform_14(%arg0: i32) -> (i32, i32, i32) {
    %c0_i32 = arith.constant 0 : i32
    %c0_i32_0 = arith.constant 0 : i32
    %c0_i32_1 = arith.constant 0 : i32
    return %arg0, %c0_i32, %c0_i32_0 : i32, i32, i32
  }
}

module attributes {stable_mosaic.version = 11 : i64} {
  func.func @_encoder_layer_kernel(%arg0: i32, %arg1: memref<1x8x32xf32, #tpu.memory_space<vmem>>, %arg2: memref<1x1x8xf32, #tpu.memory_space<vmem>>, %arg3: memref<32x96xbf16, #tpu.memory_space<vmem>>, %arg4: memref<1x96xf32, #tpu.memory_space<vmem>>, %arg5: memref<32x32xbf16, #tpu.memory_space<vmem>>, %arg6: memref<1x32xf32, #tpu.memory_space<vmem>>, %arg7: memref<1x32xf32, #tpu.memory_space<vmem>>, %arg8: memref<1x32xf32, #tpu.memory_space<vmem>>, %arg9: memref<32x64xbf16, #tpu.memory_space<vmem>>, %arg10: memref<1x64xf32, #tpu.memory_space<vmem>>, %arg11: memref<64x32xbf16, #tpu.memory_space<vmem>>, %arg12: memref<1x32xf32, #tpu.memory_space<vmem>>, %arg13: memref<1x32xf32, #tpu.memory_space<vmem>>, %arg14: memref<1x32xf32, #tpu.memory_space<vmem>>, %arg15: memref<1x8x32xf32, #tpu.memory_space<vmem>>) attributes {dimension_semantics = [#tpu.dimension_semantics<parallel>], iteration_bounds = array<i64: 2>, scalar_prefetch = 0 : i64, scratch_operands = 0 : i64, tpu.core_type = #tpu.core_type<tc>, window_params = [{transform_indices = @transform_0, window_bounds = array<i64: 1, 8, 32>}, {transform_indices = @transform_1, window_bounds = array<i64: 1, 1, 8>}, {pipeline_mode = #tpu.pipeline_mode<synchronous>, transform_indices = @transform_2, window_bounds = array<i64: 32, 96>}, {pipeline_mode = #tpu.pipeline_mode<synchronous>, transform_indices = @transform_3, window_bounds = array<i64: 1, 96>}, {pipeline_mode = #tpu.pipeline_mode<synchronous>, transform_indices = @transform_4, window_bounds = array<i64: 32, 32>}, {pipeline_mode = #tpu.pipeline_mode<synchronous>, transform_indices = @transform_5, window_bounds = array<i64: 1, 32>}, {pipeline_mode = #tpu.pipeline_mode<synchronous>, transform_indices = @transform_6, window_bounds = array<i64: 1, 32>}, {pipeline_mode = #tpu.pipeline_mode<synchronous>, transform_indices = @transform_7, window_bounds = array<i64: 1, 32>}, {pipeline_mode = #tpu.pipeline_mode<synchronous>, transform_indices = @transform_8, window_bounds = array<i64: 32, 64>}, {pipeline_mode = #tpu.pipeline_mode<synchronous>, transform_indices = @transform_9, window_bounds = array<i64: 1, 64>}, {pipeline_mode = #tpu.pipeline_mode<synchronous>, transform_indices = @transform_10, window_bounds = array<i64: 64, 32>}, {pipeline_mode = #tpu.pipeline_mode<synchronous>, transform_indices = @transform_11, window_bounds = array<i64: 1, 32>}, {pipeline_mode = #tpu.pipeline_mode<synchronous>, transform_indices = @transform_12, window_bounds = array<i64: 1, 32>}, {pipeline_mode = #tpu.pipeline_mode<synchronous>, transform_indices = @transform_13, window_bounds = array<i64: 1, 32>}, {transform_indices = @transform_14, window_bounds = array<i64: 1, 8, 32>}]} {
    %c0 = arith.constant 0 : index
    %c0_0 = arith.constant 0 : index
    %c0_1 = arith.constant 0 : index
    %0 = vector.load %arg1[%c0, %c0_0, %c0_1] : memref<1x8x32xf32, #tpu.memory_space<vmem>>, vector<1x8x32xf32>
    %1 = vector.shape_cast %0 : vector<1x8x32xf32> to vector<8x32xf32>
    %2 = arith.truncf %1 : vector<8x32xf32> to vector<8x32xbf16>
    %c0_2 = arith.constant 0 : index
    %c0_3 = arith.constant 0 : index
    %3 = vector.load %arg3[%c0_2, %c0_3] : memref<32x96xbf16, #tpu.memory_space<vmem>>, vector<32x96xbf16>
    %cst = arith.constant dense<0.000000e+00> : vector<8x96xf32>
    %4 = tpu.matmul %2, %3, %cst {dimension_numbers = #tpu.dot_dimension_numbers<[1], [0], [0], [1], [0, 0, 1, 1], [], []>} : vector<8x32xbf16>, vector<32x96xbf16>, vector<8x96xf32> -> vector<8x96xf32>
    %c0_4 = arith.constant 0 : index
    %c0_5 = arith.constant 0 : index
    %5 = vector.load %arg4[%c0_4, %c0_5] : memref<1x96xf32, #tpu.memory_space<vmem>>, vector<1x96xf32>
    %6 = vector.broadcast %5 : vector<1x96xf32> to vector<8x96xf32>
    %7 = arith.addf %4, %6 : vector<8x96xf32>
    %c0_6 = arith.constant 0 : index
    %c0_7 = arith.constant 0 : index
    %c0_8 = arith.constant 0 : index
    %8 = vector.load %arg2[%c0_6, %c0_7, %c0_8] : memref<1x1x8xf32, #tpu.memory_space<vmem>>, vector<1x1x8xf32>
    %9 = vector.shape_cast %8 : vector<1x1x8xf32> to vector<1x8xf32>
    %cst_9 = arith.constant 1.000000e+00 : f32
    %10 = vector.broadcast %cst_9 : f32 to vector<1x8xf32>
    %11 = arith.subf %10, %9 : vector<1x8xf32>
    %cst_10 = arith.constant -1.000000e+09 : f32
    %12 = vector.broadcast %cst_10 : f32 to vector<1x8xf32>
    %13 = arith.mulf %11, %12 : vector<1x8xf32>
    %14 = vector.extract_strided_slice %7 {offsets = [0, 0], sizes = [8, 8], strides = [1, 1]} : vector<8x96xf32> to vector<8x8xf32>
    %15 = arith.truncf %14 : vector<8x8xf32> to vector<8x8xbf16>
    %16 = vector.extract_strided_slice %7 {offsets = [0, 32], sizes = [8, 8], strides = [1, 1]} : vector<8x96xf32> to vector<8x8xf32>
    %17 = arith.truncf %16 : vector<8x8xf32> to vector<8x8xbf16>
    %18 = vector.extract_strided_slice %7 {offsets = [0, 64], sizes = [8, 8], strides = [1, 1]} : vector<8x96xf32> to vector<8x8xf32>
    %19 = arith.truncf %18 : vector<8x8xf32> to vector<8x8xbf16>
    "tpu.trace_start"() <{level = 10 : i32, message = "qd,kd->qk"}> : () -> ()
    %cst_11 = arith.constant dense<0.000000e+00> : vector<8x8xf32>
    %20 = tpu.matmul %15, %17, %cst_11 {dimension_numbers = #tpu.dot_dimension_numbers<[1], [1], [0], [0], [0, 0, 1, 0], [], []>} : vector<8x8xbf16>, vector<8x8xbf16>, vector<8x8xf32> -> vector<8x8xf32>
    "tpu.trace_stop"() : () -> ()
    %cst_12 = arith.constant 0.353553385 : f32
    %21 = vector.broadcast %cst_12 : f32 to vector<8x8xf32>
    %22 = arith.mulf %20, %21 : vector<8x8xf32>
    %23 = vector.broadcast %13 : vector<1x8xf32> to vector<8x8xf32>
    %24 = arith.addf %22, %23 : vector<8x8xf32>
    %cst_13 = arith.constant dense<0xFF800000> : vector<8xf32>
    %25 = vector.multi_reduction <maximumf>, %24, %cst_13 [1] : vector<8x8xf32> to vector<8xf32>
    %26 = vector.shape_cast %25 : vector<8xf32> to vector<8x1xf32>
    %27 = vector.broadcast %26 : vector<8x1xf32> to vector<8x8xf32>
    %28 = arith.subf %24, %27 : vector<8x8xf32>
    %29 = math.exp %28 : vector<8x8xf32>
    %cst_14 = arith.constant dense<0.000000e+00> : vector<8xf32>
    %30 = vector.multi_reduction <add>, %29, %cst_14 [1] : vector<8x8xf32> to vector<8xf32>
    %31 = vector.shape_cast %30 : vector<8xf32> to vector<8x1xf32>
    %32 = tpu.reciprocal %31 {approx = true} : vector<8x1xf32> -> vector<8x1xf32>
    %33 = vector.broadcast %32 : vector<8x1xf32> to vector<8x8xf32>
    %34 = arith.mulf %29, %33 : vector<8x8xf32>
    %35 = arith.truncf %34 : vector<8x8xf32> to vector<8x8xbf16>
    %cst_15 = arith.constant dense<0.000000e+00> : vector<8x8xf32>
    %36 = tpu.matmul %35, %19, %cst_15 {dimension_numbers = #tpu.dot_dimension_numbers<[1], [0], [0], [1], [0, 0, 1, 1], [], []>} : vector<8x8xbf16>, vector<8x8xbf16>, vector<8x8xf32> -> vector<8x8xf32>
    %37 = vector.extract_strided_slice %7 {offsets = [0, 8], sizes = [8, 8], strides = [1, 1]} : vector<8x96xf32> to vector<8x8xf32>
    %38 = arith.truncf %37 : vector<8x8xf32> to vector<8x8xbf16>
    %39 = vector.extract_strided_slice %7 {offsets = [0, 40], sizes = [8, 8], strides = [1, 1]} : vector<8x96xf32> to vector<8x8xf32>
    %40 = arith.truncf %39 : vector<8x8xf32> to vector<8x8xbf16>
    %41 = vector.extract_strided_slice %7 {offsets = [0, 72], sizes = [8, 8], strides = [1, 1]} : vector<8x96xf32> to vector<8x8xf32>
    %42 = arith.truncf %41 : vector<8x8xf32> to vector<8x8xbf16>
    "tpu.trace_start"() <{level = 10 : i32, message = "qd,kd->qk"}> : () -> ()
    %cst_16 = arith.constant dense<0.000000e+00> : vector<8x8xf32>
    %43 = tpu.matmul %38, %40, %cst_16 {dimension_numbers = #tpu.dot_dimension_numbers<[1], [1], [0], [0], [0, 0, 1, 0], [], []>} : vector<8x8xbf16>, vector<8x8xbf16>, vector<8x8xf32> -> vector<8x8xf32>
    "tpu.trace_stop"() : () -> ()
    %cst_17 = arith.constant 0.353553385 : f32
    %44 = vector.broadcast %cst_17 : f32 to vector<8x8xf32>
    %45 = arith.mulf %43, %44 : vector<8x8xf32>
    %46 = vector.broadcast %13 : vector<1x8xf32> to vector<8x8xf32>
    %47 = arith.addf %45, %46 : vector<8x8xf32>
    %cst_18 = arith.constant dense<0xFF800000> : vector<8xf32>
    %48 = vector.multi_reduction <maximumf>, %47, %cst_18 [1] : vector<8x8xf32> to vector<8xf32>
    %49 = vector.shape_cast %48 : vector<8xf32> to vector<8x1xf32>
    %50 = vector.broadcast %49 : vector<8x1xf32> to vector<8x8xf32>
    %51 = arith.subf %47, %50 : vector<8x8xf32>
    %52 = math.exp %51 : vector<8x8xf32>
    %cst_19 = arith.constant dense<0.000000e+00> : vector<8xf32>
    %53 = vector.multi_reduction <add>, %52, %cst_19 [1] : vector<8x8xf32> to vector<8xf32>
    %54 = vector.shape_cast %53 : vector<8xf32> to vector<8x1xf32>
    %55 = tpu.reciprocal %54 {approx = true} : vector<8x1xf32> -> vector<8x1xf32>
    %56 = vector.broadcast %55 : vector<8x1xf32> to vector<8x8xf32>
    %57 = arith.mulf %52, %56 : vector<8x8xf32>
    %58 = arith.truncf %57 : vector<8x8xf32> to vector<8x8xbf16>
    %cst_20 = arith.constant dense<0.000000e+00> : vector<8x8xf32>
    %59 = tpu.matmul %58, %42, %cst_20 {dimension_numbers = #tpu.dot_dimension_numbers<[1], [0], [0], [1], [0, 0, 1, 1], [], []>} : vector<8x8xbf16>, vector<8x8xbf16>, vector<8x8xf32> -> vector<8x8xf32>
    %60 = vector.extract_strided_slice %7 {offsets = [0, 16], sizes = [8, 8], strides = [1, 1]} : vector<8x96xf32> to vector<8x8xf32>
    %61 = arith.truncf %60 : vector<8x8xf32> to vector<8x8xbf16>
    %62 = vector.extract_strided_slice %7 {offsets = [0, 48], sizes = [8, 8], strides = [1, 1]} : vector<8x96xf32> to vector<8x8xf32>
    %63 = arith.truncf %62 : vector<8x8xf32> to vector<8x8xbf16>
    %64 = vector.extract_strided_slice %7 {offsets = [0, 80], sizes = [8, 8], strides = [1, 1]} : vector<8x96xf32> to vector<8x8xf32>
    %65 = arith.truncf %64 : vector<8x8xf32> to vector<8x8xbf16>
    "tpu.trace_start"() <{level = 10 : i32, message = "qd,kd->qk"}> : () -> ()
    %cst_21 = arith.constant dense<0.000000e+00> : vector<8x8xf32>
    %66 = tpu.matmul %61, %63, %cst_21 {dimension_numbers = #tpu.dot_dimension_numbers<[1], [1], [0], [0], [0, 0, 1, 0], [], []>} : vector<8x8xbf16>, vector<8x8xbf16>, vector<8x8xf32> -> vector<8x8xf32>
    "tpu.trace_stop"() : () -> ()
    %cst_22 = arith.constant 0.353553385 : f32
    %67 = vector.broadcast %cst_22 : f32 to vector<8x8xf32>
    %68 = arith.mulf %66, %67 : vector<8x8xf32>
    %69 = vector.broadcast %13 : vector<1x8xf32> to vector<8x8xf32>
    %70 = arith.addf %68, %69 : vector<8x8xf32>
    %cst_23 = arith.constant dense<0xFF800000> : vector<8xf32>
    %71 = vector.multi_reduction <maximumf>, %70, %cst_23 [1] : vector<8x8xf32> to vector<8xf32>
    %72 = vector.shape_cast %71 : vector<8xf32> to vector<8x1xf32>
    %73 = vector.broadcast %72 : vector<8x1xf32> to vector<8x8xf32>
    %74 = arith.subf %70, %73 : vector<8x8xf32>
    %75 = math.exp %74 : vector<8x8xf32>
    %cst_24 = arith.constant dense<0.000000e+00> : vector<8xf32>
    %76 = vector.multi_reduction <add>, %75, %cst_24 [1] : vector<8x8xf32> to vector<8xf32>
    %77 = vector.shape_cast %76 : vector<8xf32> to vector<8x1xf32>
    %78 = tpu.reciprocal %77 {approx = true} : vector<8x1xf32> -> vector<8x1xf32>
    %79 = vector.broadcast %78 : vector<8x1xf32> to vector<8x8xf32>
    %80 = arith.mulf %75, %79 : vector<8x8xf32>
    %81 = arith.truncf %80 : vector<8x8xf32> to vector<8x8xbf16>
    %cst_25 = arith.constant dense<0.000000e+00> : vector<8x8xf32>
    %82 = tpu.matmul %81, %65, %cst_25 {dimension_numbers = #tpu.dot_dimension_numbers<[1], [0], [0], [1], [0, 0, 1, 1], [], []>} : vector<8x8xbf16>, vector<8x8xbf16>, vector<8x8xf32> -> vector<8x8xf32>
    %83 = vector.extract_strided_slice %7 {offsets = [0, 24], sizes = [8, 8], strides = [1, 1]} : vector<8x96xf32> to vector<8x8xf32>
    %84 = arith.truncf %83 : vector<8x8xf32> to vector<8x8xbf16>
    %85 = vector.extract_strided_slice %7 {offsets = [0, 56], sizes = [8, 8], strides = [1, 1]} : vector<8x96xf32> to vector<8x8xf32>
    %86 = arith.truncf %85 : vector<8x8xf32> to vector<8x8xbf16>
    %87 = vector.extract_strided_slice %7 {offsets = [0, 88], sizes = [8, 8], strides = [1, 1]} : vector<8x96xf32> to vector<8x8xf32>
    %88 = arith.truncf %87 : vector<8x8xf32> to vector<8x8xbf16>
    "tpu.trace_start"() <{level = 10 : i32, message = "qd,kd->qk"}> : () -> ()
    %cst_26 = arith.constant dense<0.000000e+00> : vector<8x8xf32>
    %89 = tpu.matmul %84, %86, %cst_26 {dimension_numbers = #tpu.dot_dimension_numbers<[1], [1], [0], [0], [0, 0, 1, 0], [], []>} : vector<8x8xbf16>, vector<8x8xbf16>, vector<8x8xf32> -> vector<8x8xf32>
    "tpu.trace_stop"() : () -> ()
    %cst_27 = arith.constant 0.353553385 : f32
    %90 = vector.broadcast %cst_27 : f32 to vector<8x8xf32>
    %91 = arith.mulf %89, %90 : vector<8x8xf32>
    %92 = vector.broadcast %13 : vector<1x8xf32> to vector<8x8xf32>
    %93 = arith.addf %91, %92 : vector<8x8xf32>
    %cst_28 = arith.constant dense<0xFF800000> : vector<8xf32>
    %94 = vector.multi_reduction <maximumf>, %93, %cst_28 [1] : vector<8x8xf32> to vector<8xf32>
    %95 = vector.shape_cast %94 : vector<8xf32> to vector<8x1xf32>
    %96 = vector.broadcast %95 : vector<8x1xf32> to vector<8x8xf32>
    %97 = arith.subf %93, %96 : vector<8x8xf32>
    %98 = math.exp %97 : vector<8x8xf32>
    %cst_29 = arith.constant dense<0.000000e+00> : vector<8xf32>
    %99 = vector.multi_reduction <add>, %98, %cst_29 [1] : vector<8x8xf32> to vector<8xf32>
    %100 = vector.shape_cast %99 : vector<8xf32> to vector<8x1xf32>
    %101 = tpu.reciprocal %100 {approx = true} : vector<8x1xf32> -> vector<8x1xf32>
    %102 = vector.broadcast %101 : vector<8x1xf32> to vector<8x8xf32>
    %103 = arith.mulf %98, %102 : vector<8x8xf32>
    %104 = arith.truncf %103 : vector<8x8xf32> to vector<8x8xbf16>
    %cst_30 = arith.constant dense<0.000000e+00> : vector<8x8xf32>
    %105 = tpu.matmul %104, %88, %cst_30 {dimension_numbers = #tpu.dot_dimension_numbers<[1], [0], [0], [1], [0, 0, 1, 1], [], []>} : vector<8x8xbf16>, vector<8x8xbf16>, vector<8x8xf32> -> vector<8x8xf32>
    %106 = tpu.concatenate %36, %59, %82, %105 in 1 : vector<8x8xf32>, vector<8x8xf32>, vector<8x8xf32>, vector<8x8xf32> -> vector<8x32xf32>
    %107 = arith.truncf %106 : vector<8x32xf32> to vector<8x32xbf16>
    %c0_31 = arith.constant 0 : index
    %c0_32 = arith.constant 0 : index
    %108 = vector.load %arg5[%c0_31, %c0_32] : memref<32x32xbf16, #tpu.memory_space<vmem>>, vector<32x32xbf16>
    %cst_33 = arith.constant dense<0.000000e+00> : vector<8x32xf32>
    %109 = tpu.matmul %107, %108, %cst_33 {dimension_numbers = #tpu.dot_dimension_numbers<[1], [0], [0], [1], [0, 0, 1, 1], [], []>} : vector<8x32xbf16>, vector<32x32xbf16>, vector<8x32xf32> -> vector<8x32xf32>
    %c0_34 = arith.constant 0 : index
    %c0_35 = arith.constant 0 : index
    %110 = vector.load %arg6[%c0_34, %c0_35] : memref<1x32xf32, #tpu.memory_space<vmem>>, vector<1x32xf32>
    %111 = vector.broadcast %110 : vector<1x32xf32> to vector<8x32xf32>
    %112 = arith.addf %109, %111 : vector<8x32xf32>
    %113 = arith.addf %1, %112 : vector<8x32xf32>
    %c0_36 = arith.constant 0 : index
    %c0_37 = arith.constant 0 : index
    %114 = vector.load %arg7[%c0_36, %c0_37] : memref<1x32xf32, #tpu.memory_space<vmem>>, vector<1x32xf32>
    %c0_38 = arith.constant 0 : index
    %c0_39 = arith.constant 0 : index
    %115 = vector.load %arg8[%c0_38, %c0_39] : memref<1x32xf32, #tpu.memory_space<vmem>>, vector<1x32xf32>
    %cst_40 = arith.constant dense<0.000000e+00> : vector<8xf32>
    %116 = vector.multi_reduction <add>, %113, %cst_40 [1] : vector<8x32xf32> to vector<8xf32>
    %117 = vector.shape_cast %116 : vector<8xf32> to vector<8x1xf32>
    %cst_41 = arith.constant 3.200000e+01 : f32
    %118 = vector.broadcast %cst_41 : f32 to vector<8x1xf32>
    %119 = arith.divf %117, %118 : vector<8x1xf32>
    %120 = vector.broadcast %119 : vector<8x1xf32> to vector<8x32xf32>
    %121 = arith.subf %113, %120 : vector<8x32xf32>
    %122 = arith.mulf %121, %121 : vector<8x32xf32>
    %cst_42 = arith.constant dense<0.000000e+00> : vector<8xf32>
    %123 = vector.multi_reduction <add>, %122, %cst_42 [1] : vector<8x32xf32> to vector<8xf32>
    %124 = vector.shape_cast %123 : vector<8xf32> to vector<8x1xf32>
    %cst_43 = arith.constant 3.200000e+01 : f32
    %125 = vector.broadcast %cst_43 : f32 to vector<8x1xf32>
    %126 = arith.divf %124, %125 : vector<8x1xf32>
    %127 = vector.broadcast %119 : vector<8x1xf32> to vector<8x32xf32>
    %128 = arith.subf %113, %127 : vector<8x32xf32>
    %cst_44 = arith.constant 9.99999996E-13 : f32
    %129 = vector.broadcast %cst_44 : f32 to vector<8x1xf32>
    %130 = arith.addf %126, %129 : vector<8x1xf32>
    %131 = math.rsqrt %130 : vector<8x1xf32>
    %132 = vector.broadcast %131 : vector<8x1xf32> to vector<8x32xf32>
    %133 = arith.mulf %128, %132 : vector<8x32xf32>
    %134 = vector.broadcast %114 : vector<1x32xf32> to vector<8x32xf32>
    %135 = arith.mulf %133, %134 : vector<8x32xf32>
    %136 = vector.broadcast %115 : vector<1x32xf32> to vector<8x32xf32>
    %137 = arith.addf %135, %136 : vector<8x32xf32>
    %138 = arith.truncf %137 : vector<8x32xf32> to vector<8x32xbf16>
    %c0_45 = arith.constant 0 : index
    %c0_46 = arith.constant 0 : index
    %139 = vector.load %arg9[%c0_45, %c0_46] : memref<32x64xbf16, #tpu.memory_space<vmem>>, vector<32x64xbf16>
    %cst_47 = arith.constant dense<0.000000e+00> : vector<8x64xf32>
    %140 = tpu.matmul %138, %139, %cst_47 {dimension_numbers = #tpu.dot_dimension_numbers<[1], [0], [0], [1], [0, 0, 1, 1], [], []>} : vector<8x32xbf16>, vector<32x64xbf16>, vector<8x64xf32> -> vector<8x64xf32>
    %c0_48 = arith.constant 0 : index
    %c0_49 = arith.constant 0 : index
    %141 = vector.load %arg10[%c0_48, %c0_49] : memref<1x64xf32, #tpu.memory_space<vmem>>, vector<1x64xf32>
    %142 = vector.broadcast %141 : vector<1x64xf32> to vector<8x64xf32>
    %143 = arith.addf %140, %142 : vector<8x64xf32>
    %144 = arith.mulf %143, %143 : vector<8x64xf32>
    %145 = arith.mulf %143, %144 : vector<8x64xf32>
    %cst_50 = arith.constant 4.471500e-02 : f32
    %146 = vector.broadcast %cst_50 : f32 to vector<8x64xf32>
    %147 = arith.mulf %146, %145 : vector<8x64xf32>
    %148 = arith.addf %143, %147 : vector<8x64xf32>
    %cst_51 = arith.constant 0.797884583 : f32
    %149 = vector.broadcast %cst_51 : f32 to vector<8x64xf32>
    %150 = arith.mulf %149, %148 : vector<8x64xf32>
    %151 = math.tanh %150 : vector<8x64xf32>
    %cst_52 = arith.constant 1.000000e+00 : f32
    %152 = vector.broadcast %cst_52 : f32 to vector<8x64xf32>
    %153 = arith.addf %152, %151 : vector<8x64xf32>
    %cst_53 = arith.constant 5.000000e-01 : f32
    %154 = vector.broadcast %cst_53 : f32 to vector<8x64xf32>
    %155 = arith.mulf %154, %153 : vector<8x64xf32>
    %156 = arith.mulf %143, %155 : vector<8x64xf32>
    %157 = arith.truncf %156 : vector<8x64xf32> to vector<8x64xbf16>
    %c0_54 = arith.constant 0 : index
    %c0_55 = arith.constant 0 : index
    %158 = vector.load %arg11[%c0_54, %c0_55] : memref<64x32xbf16, #tpu.memory_space<vmem>>, vector<64x32xbf16>
    %cst_56 = arith.constant dense<0.000000e+00> : vector<8x32xf32>
    %159 = tpu.matmul %157, %158, %cst_56 {dimension_numbers = #tpu.dot_dimension_numbers<[1], [0], [0], [1], [0, 0, 1, 1], [], []>} : vector<8x64xbf16>, vector<64x32xbf16>, vector<8x32xf32> -> vector<8x32xf32>
    %c0_57 = arith.constant 0 : index
    %c0_58 = arith.constant 0 : index
    %160 = vector.load %arg12[%c0_57, %c0_58] : memref<1x32xf32, #tpu.memory_space<vmem>>, vector<1x32xf32>
    %161 = vector.broadcast %160 : vector<1x32xf32> to vector<8x32xf32>
    %162 = arith.addf %159, %161 : vector<8x32xf32>
    %163 = arith.addf %137, %162 : vector<8x32xf32>
    %c0_59 = arith.constant 0 : index
    %c0_60 = arith.constant 0 : index
    %164 = vector.load %arg13[%c0_59, %c0_60] : memref<1x32xf32, #tpu.memory_space<vmem>>, vector<1x32xf32>
    %c0_61 = arith.constant 0 : index
    %c0_62 = arith.constant 0 : index
    %165 = vector.load %arg14[%c0_61, %c0_62] : memref<1x32xf32, #tpu.memory_space<vmem>>, vector<1x32xf32>
    %cst_63 = arith.constant dense<0.000000e+00> : vector<8xf32>
    %166 = vector.multi_reduction <add>, %163, %cst_63 [1] : vector<8x32xf32> to vector<8xf32>
    %167 = vector.shape_cast %166 : vector<8xf32> to vector<8x1xf32>
    %cst_64 = arith.constant 3.200000e+01 : f32
    %168 = vector.broadcast %cst_64 : f32 to vector<8x1xf32>
    %169 = arith.divf %167, %168 : vector<8x1xf32>
    %170 = vector.broadcast %169 : vector<8x1xf32> to vector<8x32xf32>
    %171 = arith.subf %163, %170 : vector<8x32xf32>
    %172 = arith.mulf %171, %171 : vector<8x32xf32>
    %cst_65 = arith.constant dense<0.000000e+00> : vector<8xf32>
    %173 = vector.multi_reduction <add>, %172, %cst_65 [1] : vector<8x32xf32> to vector<8xf32>
    %174 = vector.shape_cast %173 : vector<8xf32> to vector<8x1xf32>
    %cst_66 = arith.constant 3.200000e+01 : f32
    %175 = vector.broadcast %cst_66 : f32 to vector<8x1xf32>
    %176 = arith.divf %174, %175 : vector<8x1xf32>
    %177 = vector.broadcast %169 : vector<8x1xf32> to vector<8x32xf32>
    %178 = arith.subf %163, %177 : vector<8x32xf32>
    %cst_67 = arith.constant 9.99999996E-13 : f32
    %179 = vector.broadcast %cst_67 : f32 to vector<8x1xf32>
    %180 = arith.addf %176, %179 : vector<8x1xf32>
    %181 = math.rsqrt %180 : vector<8x1xf32>
    %182 = vector.broadcast %181 : vector<8x1xf32> to vector<8x32xf32>
    %183 = arith.mulf %178, %182 : vector<8x32xf32>
    %184 = vector.broadcast %164 : vector<1x32xf32> to vector<8x32xf32>
    %185 = arith.mulf %183, %184 : vector<8x32xf32>
    %186 = vector.broadcast %165 : vector<1x32xf32> to vector<8x32xf32>
    %187 = arith.addf %185, %186 : vector<8x32xf32>
    %c0_68 = arith.constant 0 : index
    %c0_69 = arith.constant 0 : index
    %c0_70 = arith.constant 0 : index
    %188 = vector.load %arg15[%c0_68, %c0_69, %c0_70] : memref<1x8x32xf32, #tpu.memory_space<vmem>>, vector<1x8x32xf32>
    %189 = vector.shape_cast %188 : vector<1x8x32xf32> to vector<8x32xf32>
    %190 = vector.shape_cast %187 : vector<8x32xf32> to vector<1x8x32xf32>
    tpu.vector_store %arg15[%c0_68, %c0_69, %c0_70], %190 {strides = array<i32>} : memref<1x8x32xf32, #tpu.memory_space<vmem>>, vector<1x8x32xf32>,
    return
  }
  func.func @transform_0(%arg0: i32) -> (i32, i32, i32) {
    %c0_i32 = arith.constant 0 : i32
    %c0_i32_0 = arith.constant 0 : i32
    %c0_i32_1 = arith.constant 0 : i32
    return %arg0, %c0_i32, %c0_i32_0 : i32, i32, i32
  }
  func.func @transform_1(%arg0: i32) -> (i32, i32, i32) {
    %c0_i32 = arith.constant 0 : i32
    %c0_i32_0 = arith.constant 0 : i32
    %c0_i32_1 = arith.constant 0 : i32
    return %arg0, %c0_i32, %c0_i32_0 : i32, i32, i32
  }
  func.func @transform_2(%arg0: i32) -> (i32, i32) {
    %c0_i32 = arith.constant 0 : i32
    %c0_i32_0 = arith.constant 0 : i32
    %c0_i32_1 = arith.constant 0 : i32
    return %c0_i32, %c0_i32_0 : i32, i32
  }
  func.func @transform_3(%arg0: i32) -> (i32, i32) {
    %c0_i32 = arith.constant 0 : i32
    %c0_i32_0 = arith.constant 0 : i32
    %c0_i32_1 = arith.constant 0 : i32
    return %c0_i32, %c0_i32_0 : i32, i32
  }
  func.func @transform_4(%arg0: i32) -> (i32, i32) {
    %c0_i32 = arith.constant 0 : i32
    %c0_i32_0 = arith.constant 0 : i32
    %c0_i32_1 = arith.constant 0 : i32
    return %c0_i32, %c0_i32_0 : i32, i32
  }
  func.func @transform_5(%arg0: i32) -> (i32, i32) {
    %c0_i32 = arith.constant 0 : i32
    %c0_i32_0 = arith.constant 0 : i32
    %c0_i32_1 = arith.constant 0 : i32
    return %c0_i32, %c0_i32_0 : i32, i32
  }
  func.func @transform_6(%arg0: i32) -> (i32, i32) {
    %c0_i32 = arith.constant 0 : i32
    %c0_i32_0 = arith.constant 0 : i32
    %c0_i32_1 = arith.constant 0 : i32
    return %c0_i32, %c0_i32_0 : i32, i32
  }
  func.func @transform_7(%arg0: i32) -> (i32, i32) {
    %c0_i32 = arith.constant 0 : i32
    %c0_i32_0 = arith.constant 0 : i32
    %c0_i32_1 = arith.constant 0 : i32
    return %c0_i32, %c0_i32_0 : i32, i32
  }
  func.func @transform_8(%arg0: i32) -> (i32, i32) {
    %c0_i32 = arith.constant 0 : i32
    %c0_i32_0 = arith.constant 0 : i32
    %c0_i32_1 = arith.constant 0 : i32
    return %c0_i32, %c0_i32_0 : i32, i32
  }
  func.func @transform_9(%arg0: i32) -> (i32, i32) {
    %c0_i32 = arith.constant 0 : i32
    %c0_i32_0 = arith.constant 0 : i32
    %c0_i32_1 = arith.constant 0 : i32
    return %c0_i32, %c0_i32_0 : i32, i32
  }
  func.func @transform_10(%arg0: i32) -> (i32, i32) {
    %c0_i32 = arith.constant 0 : i32
    %c0_i32_0 = arith.constant 0 : i32
    %c0_i32_1 = arith.constant 0 : i32
    return %c0_i32, %c0_i32_0 : i32, i32
  }
  func.func @transform_11(%arg0: i32) -> (i32, i32) {
    %c0_i32 = arith.constant 0 : i32
    %c0_i32_0 = arith.constant 0 : i32
    %c0_i32_1 = arith.constant 0 : i32
    return %c0_i32, %c0_i32_0 : i32, i32
  }
  func.func @transform_12(%arg0: i32) -> (i32, i32) {
    %c0_i32 = arith.constant 0 : i32
    %c0_i32_0 = arith.constant 0 : i32
    %c0_i32_1 = arith.constant 0 : i32
    return %c0_i32, %c0_i32_0 : i32, i32
  }
  func.func @transform_13(%arg0: i32) -> (i32, i32) {
    %c0_i32 = arith.constant 0 : i32
    %c0_i32_0 = arith.constant 0 : i32
    %c0_i32_1 = arith.constant 0 : i32
    return %c0_i32, %c0_i32_0 : i32, i32
  }
  func.func @transform_14(%arg0: i32) -> (i32, i32, i32) {
    %c0_i32 = arith.constant 0 : i32
    %c0_i32_0 = arith.constant 0 : i32
    %c0_i32_1 = arith.constant 0 : i32
    return %arg0, %c0_i32, %c0_i32_0 : i32, i32, i32
  }
}

module attributes {stable_mosaic.version = 11 : i64} {
  func.func @_fused_head_kernel(%arg0: i32, %arg1: memref<1x8x32xf32, #tpu.memory_space<vmem>>, %arg2: memref<1x1x8xf32, #tpu.memory_space<vmem>>, %arg3: memref<1x1x16xf32, #tpu.memory_space<vmem>>, %arg4: memref<32x40xbf16, #tpu.memory_space<vmem>>, %arg5: memref<1x40xf32, #tpu.memory_space<vmem>>, %arg6: memref<16x16xbf16, #tpu.memory_space<vmem>>, %arg7: memref<1x16xf32, #tpu.memory_space<vmem>>, %arg8: memref<16x40xbf16, #tpu.memory_space<vmem>>, %arg9: memref<1x40xf32, #tpu.memory_space<vmem>>, %arg10: memref<40x40xbf16, #tpu.memory_space<vmem>>, %arg11: memref<1x40xf32, #tpu.memory_space<vmem>>, %arg12: memref<40x40xbf16, #tpu.memory_space<vmem>>, %arg13: memref<1x40xf32, #tpu.memory_space<vmem>>, %arg14: memref<40x40xbf16, #tpu.memory_space<vmem>>, %arg15: memref<40x40xbf16, #tpu.memory_space<vmem>>, %arg16: memref<1x40xf32, #tpu.memory_space<vmem>>, %arg17: memref<40x32xbf16, #tpu.memory_space<vmem>>, %arg18: memref<1x32xf32, #tpu.memory_space<vmem>>, %arg19: memref<32x3xbf16, #tpu.memory_space<vmem>>, %arg20: memref<1x3xf32, #tpu.memory_space<vmem>>, %arg21: memref<1x1x32xf32, #tpu.memory_space<vmem>>, %arg22: memref<1x1x3xf32, #tpu.memory_space<vmem>>) attributes {dimension_semantics = [#tpu.dimension_semantics<parallel>], iteration_bounds = array<i64: 2>, scalar_prefetch = 0 : i64, scratch_operands = 0 : i64, tpu.core_type = #tpu.core_type<tc>, window_params = [{transform_indices = @transform_0, window_bounds = array<i64: 1, 8, 32>}, {transform_indices = @transform_1, window_bounds = array<i64: 1, 1, 8>}, {transform_indices = @transform_2, window_bounds = array<i64: 1, 1, 16>}, {pipeline_mode = #tpu.pipeline_mode<synchronous>, transform_indices = @transform_3, window_bounds = array<i64: 32, 40>}, {pipeline_mode = #tpu.pipeline_mode<synchronous>, transform_indices = @transform_4, window_bounds = array<i64: 1, 40>}, {pipeline_mode = #tpu.pipeline_mode<synchronous>, transform_indices = @transform_5, window_bounds = array<i64: 16, 16>}, {pipeline_mode = #tpu.pipeline_mode<synchronous>, transform_indices = @transform_6, window_bounds = array<i64: 1, 16>}, {pipeline_mode = #tpu.pipeline_mode<synchronous>, transform_indices = @transform_7, window_bounds = array<i64: 16, 40>}, {pipeline_mode = #tpu.pipeline_mode<synchronous>, transform_indices = @transform_8, window_bounds = array<i64: 1, 40>}, {pipeline_mode = #tpu.pipeline_mode<synchronous>, transform_indices = @transform_9, window_bounds = array<i64: 40, 40>}, {pipeline_mode = #tpu.pipeline_mode<synchronous>, transform_indices = @transform_10, window_bounds = array<i64: 1, 40>}, {pipeline_mode = #tpu.pipeline_mode<synchronous>, transform_indices = @transform_11, window_bounds = array<i64: 40, 40>}, {pipeline_mode = #tpu.pipeline_mode<synchronous>, transform_indices = @transform_12, window_bounds = array<i64: 1, 40>}, {pipeline_mode = #tpu.pipeline_mode<synchronous>, transform_indices = @transform_13, window_bounds = array<i64: 40, 40>}, {pipeline_mode = #tpu.pipeline_mode<synchronous>, transform_indices = @transform_14, window_bounds = array<i64: 40, 40>}, {pipeline_mode = #tpu.pipeline_mode<synchronous>, transform_indices = @transform_15, window_bounds = array<i64: 1, 40>}, {pipeline_mode = #tpu.pipeline_mode<synchronous>, transform_indices = @transform_16, window_bounds = array<i64: 40, 32>}, {pipeline_mode = #tpu.pipeline_mode<synchronous>, transform_indices = @transform_17, window_bounds = array<i64: 1, 32>}, {pipeline_mode = #tpu.pipeline_mode<synchronous>, transform_indices = @transform_18, window_bounds = array<i64: 32, 3>}, {pipeline_mode = #tpu.pipeline_mode<synchronous>, transform_indices = @transform_19, window_bounds = array<i64: 1, 3>}, {transform_indices = @transform_20, window_bounds = array<i64: 1, 1, 32>}, {transform_indices = @transform_21, window_bounds = array<i64: 1, 1, 3>}]} {
    %c0 = arith.constant 0 : index
    %c0_0 = arith.constant 0 : index
    %c0_1 = arith.constant 0 : index
    %0 = vector.load %arg1[%c0, %c0_0, %c0_1] : memref<1x8x32xf32, #tpu.memory_space<vmem>>, vector<1x8x32xf32>
    %1 = vector.shape_cast %0 : vector<1x8x32xf32> to vector<8x32xf32>
    %c0_2 = arith.constant 0 : index
    %c0_3 = arith.constant 0 : index
    %c0_4 = arith.constant 0 : index
    %2 = vector.load %arg2[%c0_2, %c0_3, %c0_4] : memref<1x1x8xf32, #tpu.memory_space<vmem>>, vector<1x1x8xf32>
    %3 = vector.shape_cast %2 : vector<1x1x8xf32> to vector<1x8xf32>
    %cst = arith.constant dense<0.000000e+00> : vector<1x32xf32>
    %4 = tpu.matmul %3, %1, %cst {dimension_numbers = #tpu.dot_dimension_numbers<[1], [0], [0], [1], [0, 0, 1, 1], [], []>} : vector<1x8xf32>, vector<8x32xf32>, vector<1x32xf32> -> vector<1x32xf32>
    %cst_5 = arith.constant dense<0.000000e+00> : vector<1xf32>
    %5 = vector.multi_reduction <add>, %3, %cst_5 [1] : vector<1x8xf32> to vector<1xf32>
    %6 = vector.shape_cast %5 : vector<1xf32> to vector<1x1xf32>
    %cst_6 = arith.constant 9.99999971E-10 : f32
    %7 = vector.broadcast %cst_6 : f32 to vector<1x1xf32>
    %8 = arith.maximumf %6, %7 : vector<1x1xf32>
    %9 = vector.broadcast %8 : vector<1x1xf32> to vector<1x32xf32>
    %10 = arith.divf %4, %9 : vector<1x32xf32>
    %11 = arith.truncf %10 : vector<1x32xf32> to vector<1x32xbf16>
    %c0_7 = arith.constant 0 : index
    %c0_8 = arith.constant 0 : index
    %12 = vector.load %arg4[%c0_7, %c0_8] : memref<32x40xbf16, #tpu.memory_space<vmem>>, vector<32x40xbf16>
    %cst_9 = arith.constant dense<0.000000e+00> : vector<1x40xf32>
    %13 = tpu.matmul %11, %12, %cst_9 {dimension_numbers = #tpu.dot_dimension_numbers<[1], [0], [0], [1], [0, 0, 1, 1], [], []>} : vector<1x32xbf16>, vector<32x40xbf16>, vector<1x40xf32> -> vector<1x40xf32>
    %c0_10 = arith.constant 0 : index
    %c0_11 = arith.constant 0 : index
    %14 = vector.load %arg5[%c0_10, %c0_11] : memref<1x40xf32, #tpu.memory_space<vmem>>, vector<1x40xf32>
    %15 = arith.addf %13, %14 : vector<1x40xf32>
    %cst_12 = arith.constant 0.000000e+00 : f32
    %16 = vector.broadcast %cst_12 : f32 to vector<1x40xf32>
    %17 = arith.maximumf %15, %16 : vector<1x40xf32>
    %c0_13 = arith.constant 0 : index
    %c0_14 = arith.constant 0 : index
    %c0_15 = arith.constant 0 : index
    %18 = vector.load %arg3[%c0_13, %c0_14, %c0_15] : memref<1x1x16xf32, #tpu.memory_space<vmem>>, vector<1x1x16xf32>
    %19 = vector.shape_cast %18 : vector<1x1x16xf32> to vector<1x16xf32>
    %20 = arith.truncf %19 : vector<1x16xf32> to vector<1x16xbf16>
    %c0_16 = arith.constant 0 : index
    %c0_17 = arith.constant 0 : index
    %21 = vector.load %arg6[%c0_16, %c0_17] : memref<16x16xbf16, #tpu.memory_space<vmem>>, vector<16x16xbf16>
    %cst_18 = arith.constant dense<0.000000e+00> : vector<1x16xf32>
    %22 = tpu.matmul %20, %21, %cst_18 {dimension_numbers = #tpu.dot_dimension_numbers<[1], [0], [0], [1], [0, 0, 1, 1], [], []>} : vector<1x16xbf16>, vector<16x16xbf16>, vector<1x16xf32> -> vector<1x16xf32>
    %c0_19 = arith.constant 0 : index
    %c0_20 = arith.constant 0 : index
    %23 = vector.load %arg7[%c0_19, %c0_20] : memref<1x16xf32, #tpu.memory_space<vmem>>, vector<1x16xf32>
    %24 = arith.addf %22, %23 : vector<1x16xf32>
    %cst_21 = arith.constant 0.000000e+00 : f32
    %25 = vector.broadcast %cst_21 : f32 to vector<1x16xf32>
    %26 = arith.maximumf %24, %25 : vector<1x16xf32>
    %27 = arith.truncf %26 : vector<1x16xf32> to vector<1x16xbf16>
    %c0_22 = arith.constant 0 : index
    %c0_23 = arith.constant 0 : index
    %28 = vector.load %arg8[%c0_22, %c0_23] : memref<16x40xbf16, #tpu.memory_space<vmem>>, vector<16x40xbf16>
    %cst_24 = arith.constant dense<0.000000e+00> : vector<1x40xf32>
    %29 = tpu.matmul %27, %28, %cst_24 {dimension_numbers = #tpu.dot_dimension_numbers<[1], [0], [0], [1], [0, 0, 1, 1], [], []>} : vector<1x16xbf16>, vector<16x40xbf16>, vector<1x40xf32> -> vector<1x40xf32>
    %c0_25 = arith.constant 0 : index
    %c0_26 = arith.constant 0 : index
    %30 = vector.load %arg9[%c0_25, %c0_26] : memref<1x40xf32, #tpu.memory_space<vmem>>, vector<1x40xf32>
    %31 = arith.addf %29, %30 : vector<1x40xf32>
    %cst_27 = arith.constant 0.000000e+00 : f32
    %32 = vector.broadcast %cst_27 : f32 to vector<1x40xf32>
    %33 = arith.maximumf %31, %32 : vector<1x40xf32>
    %34 = arith.truncf %33 : vector<1x40xf32> to vector<1x40xbf16>
    %c0_28 = arith.constant 0 : index
    %c0_29 = arith.constant 0 : index
    %35 = vector.load %arg10[%c0_28, %c0_29] : memref<40x40xbf16, #tpu.memory_space<vmem>>, vector<40x40xbf16>
    %cst_30 = arith.constant dense<0.000000e+00> : vector<1x40xf32>
    %36 = tpu.matmul %34, %35, %cst_30 {dimension_numbers = #tpu.dot_dimension_numbers<[1], [0], [0], [1], [0, 0, 1, 1], [], []>} : vector<1x40xbf16>, vector<40x40xbf16>, vector<1x40xf32> -> vector<1x40xf32>
    %c0_31 = arith.constant 0 : index
    %c0_32 = arith.constant 0 : index
    %37 = vector.load %arg11[%c0_31, %c0_32] : memref<1x40xf32, #tpu.memory_space<vmem>>, vector<1x40xf32>
    %38 = arith.addf %36, %37 : vector<1x40xf32>
    %cst_33 = arith.constant 0.000000e+00 : f32
    %39 = vector.broadcast %cst_33 : f32 to vector<1x40xf32>
    %40 = arith.maximumf %38, %39 : vector<1x40xf32>
    %41 = arith.truncf %40 : vector<1x40xf32> to vector<1x40xbf16>
    %c0_34 = arith.constant 0 : index
    %c0_35 = arith.constant 0 : index
    %42 = vector.load %arg12[%c0_34, %c0_35] : memref<40x40xbf16, #tpu.memory_space<vmem>>, vector<40x40xbf16>
    %cst_36 = arith.constant dense<0.000000e+00> : vector<1x40xf32>
    %43 = tpu.matmul %41, %42, %cst_36 {dimension_numbers = #tpu.dot_dimension_numbers<[1], [0], [0], [1], [0, 0, 1, 1], [], []>} : vector<1x40xbf16>, vector<40x40xbf16>, vector<1x40xf32> -> vector<1x40xf32>
    %c0_37 = arith.constant 0 : index
    %c0_38 = arith.constant 0 : index
    %44 = vector.load %arg13[%c0_37, %c0_38] : memref<1x40xf32, #tpu.memory_space<vmem>>, vector<1x40xf32>
    %45 = arith.addf %43, %44 : vector<1x40xf32>
    %cst_39 = arith.constant 0.000000e+00 : f32
    %46 = vector.broadcast %cst_39 : f32 to vector<1x40xf32>
    %47 = arith.maximumf %45, %46 : vector<1x40xf32>
    %48 = arith.truncf %17 : vector<1x40xf32> to vector<1x40xbf16>
    %c0_40 = arith.constant 0 : index
    %c0_41 = arith.constant 0 : index
    %49 = vector.load %arg14[%c0_40, %c0_41] : memref<40x40xbf16, #tpu.memory_space<vmem>>, vector<40x40xbf16>
    %cst_42 = arith.constant dense<0.000000e+00> : vector<1x40xf32>
    %50 = tpu.matmul %48, %49, %cst_42 {dimension_numbers = #tpu.dot_dimension_numbers<[1], [0], [0], [1], [0, 0, 1, 1], [], []>} : vector<1x40xbf16>, vector<40x40xbf16>, vector<1x40xf32> -> vector<1x40xf32>
    %51 = arith.truncf %47 : vector<1x40xf32> to vector<1x40xbf16>
    %c0_43 = arith.constant 0 : index
    %c0_44 = arith.constant 0 : index
    %52 = vector.load %arg15[%c0_43, %c0_44] : memref<40x40xbf16, #tpu.memory_space<vmem>>, vector<40x40xbf16>
    %cst_45 = arith.constant dense<0.000000e+00> : vector<1x40xf32>
    %53 = tpu.matmul %51, %52, %cst_45 {dimension_numbers = #tpu.dot_dimension_numbers<[1], [0], [0], [1], [0, 0, 1, 1], [], []>} : vector<1x40xbf16>, vector<40x40xbf16>, vector<1x40xf32> -> vector<1x40xf32>
    %54 = arith.addf %50, %53 : vector<1x40xf32>
    %c0_46 = arith.constant 0 : index
    %c0_47 = arith.constant 0 : index
    %55 = vector.load %arg16[%c0_46, %c0_47] : memref<1x40xf32, #tpu.memory_space<vmem>>, vector<1x40xf32>
    %56 = arith.addf %54, %55 : vector<1x40xf32>
    %cst_48 = arith.constant 0.000000e+00 : f32
    %57 = vector.broadcast %cst_48 : f32 to vector<1x40xf32>
    %58 = arith.maximumf %56, %57 : vector<1x40xf32>
    %59 = arith.truncf %58 : vector<1x40xf32> to vector<1x40xbf16>
    %c0_49 = arith.constant 0 : index
    %c0_50 = arith.constant 0 : index
    %60 = vector.load %arg17[%c0_49, %c0_50] : memref<40x32xbf16, #tpu.memory_space<vmem>>, vector<40x32xbf16>
    %cst_51 = arith.constant dense<0.000000e+00> : vector<1x32xf32>
    %61 = tpu.matmul %59, %60, %cst_51 {dimension_numbers = #tpu.dot_dimension_numbers<[1], [0], [0], [1], [0, 0, 1, 1], [], []>} : vector<1x40xbf16>, vector<40x32xbf16>, vector<1x32xf32> -> vector<1x32xf32>
    %c0_52 = arith.constant 0 : index
    %c0_53 = arith.constant 0 : index
    %62 = vector.load %arg18[%c0_52, %c0_53] : memref<1x32xf32, #tpu.memory_space<vmem>>, vector<1x32xf32>
    %63 = arith.addf %61, %62 : vector<1x32xf32>
    %cst_54 = arith.constant 0.000000e+00 : f32
    %64 = vector.broadcast %cst_54 : f32 to vector<1x32xf32>
    %65 = arith.maximumf %63, %64 : vector<1x32xf32>
    %66 = arith.truncf %65 : vector<1x32xf32> to vector<1x32xbf16>
    %c0_55 = arith.constant 0 : index
    %c0_56 = arith.constant 0 : index
    %67 = vector.load %arg19[%c0_55, %c0_56] : memref<32x3xbf16, #tpu.memory_space<vmem>>, vector<32x3xbf16>
    %cst_57 = arith.constant dense<0.000000e+00> : vector<1x3xf32>
    %68 = tpu.matmul %66, %67, %cst_57 {dimension_numbers = #tpu.dot_dimension_numbers<[1], [0], [0], [1], [0, 0, 1, 1], [], []>} : vector<1x32xbf16>, vector<32x3xbf16>, vector<1x3xf32> -> vector<1x3xf32>
    %c0_58 = arith.constant 0 : index
    %c0_59 = arith.constant 0 : index
    %69 = vector.load %arg20[%c0_58, %c0_59] : memref<1x3xf32, #tpu.memory_space<vmem>>, vector<1x3xf32>
    %70 = arith.addf %68, %69 : vector<1x3xf32>
    %c0_60 = arith.constant 0 : index
    %c0_61 = arith.constant 0 : index
    %c0_62 = arith.constant 0 : index
    %71 = vector.load %arg21[%c0_60, %c0_61, %c0_62] : memref<1x1x32xf32, #tpu.memory_space<vmem>>, vector<1x1x32xf32>
    %72 = vector.shape_cast %71 : vector<1x1x32xf32> to vector<1x32xf32>
    %73 = vector.shape_cast %65 : vector<1x32xf32> to vector<1x1x32xf32>
    tpu.vector_store %arg21[%c0_60, %c0_61, %c0_62], %73 {strides = array<i32>} : memref<1x1x32xf32, #tpu.memory_space<vmem>>, vector<1x1x32xf32>,
    %c0_63 = arith.constant 0 : index
    %c0_64 = arith.constant 0 : index
    %c0_65 = arith.constant 0 : index
    %74 = vector.load %arg22[%c0_63, %c0_64, %c0_65] : memref<1x1x3xf32, #tpu.memory_space<vmem>>, vector<1x1x3xf32>
    %75 = vector.shape_cast %74 : vector<1x1x3xf32> to vector<1x3xf32>
    %76 = vector.shape_cast %70 : vector<1x3xf32> to vector<1x1x3xf32>
    tpu.vector_store %arg22[%c0_63, %c0_64, %c0_65], %76 {strides = array<i32>} : memref<1x1x3xf32, #tpu.memory_space<vmem>>, vector<1x1x3xf32>,
    return
  }
  func.func @transform_0(%arg0: i32) -> (i32, i32, i32) {
    %c0_i32 = arith.constant 0 : i32
    %c0_i32_0 = arith.constant 0 : i32
    %c0_i32_1 = arith.constant 0 : i32
    return %arg0, %c0_i32, %c0_i32_0 : i32, i32, i32
  }
  func.func @transform_1(%arg0: i32) -> (i32, i32, i32) {
    %c0_i32 = arith.constant 0 : i32
    %c0_i32_0 = arith.constant 0 : i32
    %c0_i32_1 = arith.constant 0 : i32
    return %arg0, %c0_i32, %c0_i32_0 : i32, i32, i32
  }
  func.func @transform_2(%arg0: i32) -> (i32, i32, i32) {
    %c0_i32 = arith.constant 0 : i32
    %c0_i32_0 = arith.constant 0 : i32
    %c0_i32_1 = arith.constant 0 : i32
    return %arg0, %c0_i32, %c0_i32_0 : i32, i32, i32
  }
  func.func @transform_3(%arg0: i32) -> (i32, i32) {
    %c0_i32 = arith.constant 0 : i32
    %c0_i32_0 = arith.constant 0 : i32
    %c0_i32_1 = arith.constant 0 : i32
    return %c0_i32, %c0_i32_0 : i32, i32
  }
  func.func @transform_4(%arg0: i32) -> (i32, i32) {
    %c0_i32 = arith.constant 0 : i32
    %c0_i32_0 = arith.constant 0 : i32
    %c0_i32_1 = arith.constant 0 : i32
    return %c0_i32, %c0_i32_0 : i32, i32
  }
  func.func @transform_5(%arg0: i32) -> (i32, i32) {
    %c0_i32 = arith.constant 0 : i32
    %c0_i32_0 = arith.constant 0 : i32
    %c0_i32_1 = arith.constant 0 : i32
    return %c0_i32, %c0_i32_0 : i32, i32
  }
  func.func @transform_6(%arg0: i32) -> (i32, i32) {
    %c0_i32 = arith.constant 0 : i32
    %c0_i32_0 = arith.constant 0 : i32
    %c0_i32_1 = arith.constant 0 : i32
    return %c0_i32, %c0_i32_0 : i32, i32
  }
  func.func @transform_7(%arg0: i32) -> (i32, i32) {
    %c0_i32 = arith.constant 0 : i32
    %c0_i32_0 = arith.constant 0 : i32
    %c0_i32_1 = arith.constant 0 : i32
    return %c0_i32, %c0_i32_0 : i32, i32
  }
  func.func @transform_8(%arg0: i32) -> (i32, i32) {
    %c0_i32 = arith.constant 0 : i32
    %c0_i32_0 = arith.constant 0 : i32
    %c0_i32_1 = arith.constant 0 : i32
    return %c0_i32, %c0_i32_0 : i32, i32
  }
  func.func @transform_9(%arg0: i32) -> (i32, i32) {
    %c0_i32 = arith.constant 0 : i32
    %c0_i32_0 = arith.constant 0 : i32
    %c0_i32_1 = arith.constant 0 : i32
    return %c0_i32, %c0_i32_0 : i32, i32
  }
  func.func @transform_10(%arg0: i32) -> (i32, i32) {
    %c0_i32 = arith.constant 0 : i32
    %c0_i32_0 = arith.constant 0 : i32
    %c0_i32_1 = arith.constant 0 : i32
    return %c0_i32, %c0_i32_0 : i32, i32
  }
  func.func @transform_11(%arg0: i32) -> (i32, i32) {
    %c0_i32 = arith.constant 0 : i32
    %c0_i32_0 = arith.constant 0 : i32
    %c0_i32_1 = arith.constant 0 : i32
    return %c0_i32, %c0_i32_0 : i32, i32
  }
  func.func @transform_12(%arg0: i32) -> (i32, i32) {
    %c0_i32 = arith.constant 0 : i32
    %c0_i32_0 = arith.constant 0 : i32
    %c0_i32_1 = arith.constant 0 : i32
    return %c0_i32, %c0_i32_0 : i32, i32
  }
  func.func @transform_13(%arg0: i32) -> (i32, i32) {
    %c0_i32 = arith.constant 0 : i32
    %c0_i32_0 = arith.constant 0 : i32
    %c0_i32_1 = arith.constant 0 : i32
    return %c0_i32, %c0_i32_0 : i32, i32
  }
  func.func @transform_14(%arg0: i32) -> (i32, i32) {
    %c0_i32 = arith.constant 0 : i32
    %c0_i32_0 = arith.constant 0 : i32
    %c0_i32_1 = arith.constant 0 : i32
    return %c0_i32, %c0_i32_0 : i32, i32
  }
  func.func @transform_15(%arg0: i32) -> (i32, i32) {
    %c0_i32 = arith.constant 0 : i32
    %c0_i32_0 = arith.constant 0 : i32
    %c0_i32_1 = arith.constant 0 : i32
    return %c0_i32, %c0_i32_0 : i32, i32
  }
  func.func @transform_16(%arg0: i32) -> (i32, i32) {
    %c0_i32 = arith.constant 0 : i32
    %c0_i32_0 = arith.constant 0 : i32
    %c0_i32_1 = arith.constant 0 : i32
    return %c0_i32, %c0_i32_0 : i32, i32
  }
  func.func @transform_17(%arg0: i32) -> (i32, i32) {
    %c0_i32 = arith.constant 0 : i32
    %c0_i32_0 = arith.constant 0 : i32
    %c0_i32_1 = arith.constant 0 : i32
    return %c0_i32, %c0_i32_0 : i32, i32
  }
  func.func @transform_18(%arg0: i32) -> (i32, i32) {
    %c0_i32 = arith.constant 0 : i32
    %c0_i32_0 = arith.constant 0 : i32
    %c0_i32_1 = arith.constant 0 : i32
    return %c0_i32, %c0_i32_0 : i32, i32
  }
  func.func @transform_19(%arg0: i32) -> (i32, i32) {
    %c0_i32 = arith.constant 0 : i32
    %c0_i32_0 = arith.constant 0 : i32
    %c0_i32_1 = arith.constant 0 : i32
    return %c0_i32, %c0_i32_0 : i32, i32
  }
  func.func @transform_20(%arg0: i32) -> (i32, i32, i32) {
    %c0_i32 = arith.constant 0 : i32
    %c0_i32_0 = arith.constant 0 : i32
    %c0_i32_1 = arith.constant 0 : i32
    return %arg0, %c0_i32, %c0_i32_0 : i32, i32, i32
  }
  func.func @transform_21(%arg0: i32) -> (i32, i32, i32) {
    %c0_i32 = arith.constant 0 : i32
    %c0_i32_0 = arith.constant 0 : i32
    %c0_i32_1 = arith.constant 0 : i32
    return %arg0, %c0_i32, %c0_i32_0 : i32, i32, i32
  }
}

</mosaic_0001>

<llo_original>
// kernel: fine_tuned_bert_forward.4
$region0: #{fine_tuned_bert_forward.4}
  #allocation0 [shape = 'u32[]', space=smem, size = 0x4, offset = 0x4, fixed_abs, tag = 'smem constant byte address 0x4 - core index']
  #allocation1 [shape = 'u32[72,128]{1,0:T(1,128)}', space=vmem, size = 0x9000, scoped, tag = 'internal scratch']
  %s0 = inlined_call_operand.vmem [shape: f32[2,8,32], index: 0, kind: input, shape index: {}]
  %s1 = inlined_call_operand.vmem [shape: f32[8,32], index: 1, kind: input, shape index: {}]
  %s2 = inlined_call_operand.vmem [shape: f32[1,32], index: 2, kind: input, shape index: {}]
  %s3 = inlined_call_operand.vmem [shape: f32[1,32], index: 3, kind: input, shape index: {}]
  %s4 = inlined_call_operand.vmem [shape: f32[1,32], index: 4, kind: input, shape index: {}]
  %s5 = inlined_call_operand.vmem [shape: f32[2,8,32], index: 5, kind: output, shape index: {}]
  %s6 = sld [smem:[#allocation0]]
  $region53: #{fine_tuned_bert_forward.4} parent=0
    _
  %s8 = ssub.s32 1, %s6
  %s9 = scalar_select 0, %s8, %s6
  loop: start=0, step=1, limit=4
  $region2: #{fine_tuned_bert_forward.4} parent=0 // loop_pre_header
    _
  $region3: #{fine_tuned_bert_forward.4} parent=0 // loop_header
    %s11 = sphi 0, %s15
    %p12 = scmp.ge.s32.totalorder %s11, 4
    %s21 = sphi 0, %s23
    %s24 = sphi 0, %s21
    %s25 = sphi 0, %s24
    %s41 = sphi 0, %s25
    %s45 = sphi 0, %s45
    %s47 = sphi 0, %s45
    %s48 = sphi 0, %s47
    %s62 = sphi 0, %s48
    %s66 = sphi 0, %s66
    %s68 = sphi 0, %s66
    %s69 = sphi 0, %s68
    %s83 = sphi 0, %s69
    %s87 = sphi 0, %s87
    %s89 = sphi 0, %s87
    %s90 = sphi 0, %s89
    %s104 = sphi 0, %s90
    %s108 = sphi 0, %s108
    %s110 = sphi 0, %s108
    %s111 = sphi 0, %s110
    %s125 = sphi 0, %s111
    %s131 = sphi 0, %s133
    %s134 = sphi 0, %s131
    %s135 = sphi 0, %s134
    %s151 = sphi 0, %s135
  $region4: #{fine_tuned_bert_forward.4} parent=0 // loop_header_branch
    %14 = sbr.rel (%p12) target = $region8
  $region5: #{fine_tuned_bert_forward.4} parent=0 // loop_body
    %s16 = ssub.s32 %s11, 1
    %s17 = ssub.s32 %s11, 2
    %s18 = sadd.s32 %s11, 1
    %s19 = ssub.s32 %s11, %s18
    %p20 = scmp.eq.s32.totalorder %s19, 0
    %s22 = sadd.s32 %s21, 1
    %s23 = scalar_select %p20, %s21, %s22
    %p26 = pneg %p20
    %p27 = scmp.eq.s32.totalorder %s11, 1
    %p28 = por %p26, %p27
    %p29 = scmp.ne.s32.totalorder %s21, %s24
    %p30 = scmp.eq.s32.totalorder %s11, 0
    %p31 = por %p29, %p30
    %p32 = scmp.ne.s32.totalorder %s21, %s24
    %p33 = scmp.eq.s32.totalorder %s16, 1
    %p34 = por %p32, %p33
    %p35 = scmp.ne.s32.totalorder %s24, %s25
    %p36 = scmp.eq.s32.totalorder %s16, 0
    %p37 = por %p35, %p36
    %p38 = scmp.ne.s32.totalorder %s24, %s25
    %p39 = scmp.eq.s32.totalorder %s17, 1
    %p40 = por %p38, %p39
    %p42 = scmp.ne.s32.totalorder %s25, %s41
    %p43 = scmp.eq.s32.totalorder %s17, 0
    %p44 = por %p42, %p43
    %s46 = sadd.s32 %s45, 1
    %p49 = scmp.eq.s32.totalorder %s11, 1
    %p50 = scmp.ne.s32.totalorder %s45, %s47
    %p51 = scmp.eq.s32.totalorder %s11, 0
    %p52 = por %p50, %p51
    %p53 = scmp.ne.s32.totalorder %s45, %s47
    %p54 = scmp.eq.s32.totalorder %s16, 1
    %p55 = por %p53, %p54
    %p56 = scmp.ne.s32.totalorder %s47, %s48
    %p57 = scmp.eq.s32.totalorder %s16, 0
    %p58 = por %p56, %p57
    %p59 = scmp.ne.s32.totalorder %s47, %s48
    %p60 = scmp.eq.s32.totalorder %s17, 1
    %p61 = por %p59, %p60
    %p63 = scmp.ne.s32.totalorder %s48, %s62
    %p64 = scmp.eq.s32.totalorder %s17, 0
    %p65 = por %p63, %p64
    %s67 = sadd.s32 %s66, 1
    %p70 = scmp.eq.s32.totalorder %s11, 1
    %p71 = scmp.ne.s32.totalorder %s66, %s68
    %p72 = scmp.eq.s32.totalorder %s11, 0
    %p73 = por %p71, %p72
    %p74 = scmp.ne.s32.totalorder %s66, %s68
    %p75 = scmp.eq.s32.totalorder %s16, 1
    %p76 = por %p74, %p75
    %p77 = scmp.ne.s32.totalorder %s68, %s69
    %p78 = scmp.eq.s32.totalorder %s16, 0
    %p79 = por %p77, %p78
    %p80 = scmp.ne.s32.totalorder %s68, %s69
    %p81 = scmp.eq.s32.totalorder %s17, 1
    %p82 = por %p80, %p81
    %p84 = scmp.ne.s32.totalorder %s69, %s83
    %p85 = scmp.eq.s32.totalorder %s17, 0
    %p86 = por %p84, %p85
    %s88 = sadd.s32 %s87, 1
    %p91 = scmp.eq.s32.totalorder %s11, 1
    %p92 = scmp.ne.s32.totalorder %s87, %s89
    %p93 = scmp.eq.s32.totalorder %s11, 0
    %p94 = por %p92, %p93
    %p95 = scmp.ne.s32.totalorder %s87, %s89
    %p96 = scmp.eq.s32.totalorder %s16, 1
    %p97 = por %p95, %p96
    %p98 = scmp.ne.s32.totalorder %s89, %s90
    %p99 = scmp.eq.s32.totalorder %s16, 0
    %p100 = por %p98, %p99
    %p101 = scmp.ne.s32.totalorder %s89, %s90
    %p102 = scmp.eq.s32.totalorder %s17, 1
    %p103 = por %p101, %p102
    %p105 = scmp.ne.s32.totalorder %s90, %s104
    %p106 = scmp.eq.s32.totalorder %s17, 0
    %p107 = por %p105, %p106
    %s109 = sadd.s32 %s108, 1
    %p112 = scmp.eq.s32.totalorder %s11, 1
    %p113 = scmp.ne.s32.totalorder %s108, %s110
    %p114 = scmp.eq.s32.totalorder %s11, 0
    %p115 = por %p113, %p114
    %p116 = scmp.ne.s32.totalorder %s108, %s110
    %p117 = scmp.eq.s32.totalorder %s16, 1
    %p118 = por %p116, %p117
    %p119 = scmp.ne.s32.totalorder %s110, %s111
    %p120 = scmp.eq.s32.totalorder %s16, 0
    %p121 = por %p119, %p120
    %p122 = scmp.ne.s32.totalorder %s110, %s111
    %p123 = scmp.eq.s32.totalorder %s17, 1
    %p124 = por %p122, %p123
    %p126 = scmp.ne.s32.totalorder %s111, %s125
    %p127 = scmp.eq.s32.totalorder %s17, 0
    %p128 = por %p126, %p127
    %s129 = ssub.s32 %s11, %s18
    %p130 = scmp.eq.s32.totalorder %s129, 0
    %s132 = sadd.s32 %s131, 1
    %s133 = scalar_select %p130, %s131, %s132
    %p136 = pneg %p130
    %p137 = scmp.eq.s32.totalorder %s11, 1
    %p138 = por %p136, %p137
    %p139 = scmp.ne.s32.totalorder %s131, %s134
    %p140 = scmp.eq.s32.totalorder %s11, 0
    %p141 = por %p139, %p140
    %p142 = scmp.ne.s32.totalorder %s131, %s134
    %p143 = scmp.eq.s32.totalorder %s16, 1
    %p144 = por %p142, %p143
    %p145 = scmp.ne.s32.totalorder %s134, %s135
    %p146 = scmp.eq.s32.totalorder %s16, 0
    %p147 = por %p145, %p146
    %p148 = scmp.ne.s32.totalorder %s134, %s135
    %p149 = scmp.eq.s32.totalorder %s17, 1
    %p150 = por %p148, %p149
    %p152 = scmp.ne.s32.totalorder %s135, %s151
    %p153 = scmp.eq.s32.totalorder %s17, 0
    %p154 = por %p152, %p153
    %p155 = scmp.le.s32.totalorder 1, %s11
    %p156 = scmp.lt.s32.totalorder %s11, 3
    %p157 = pnand %p155, %p156
    %p158 = pneg %p157
    // Predicated region
    $region9: #{fine_tuned_bert_forward.4} parent=5 // pred_check
      _
    $region10: #{fine_tuned_bert_forward.4} parent=5 // pred_check_branch
      %160 = sbr.rel (%p157) target = $region12
    $region11: #{fine_tuned_bert_forward.4} parent=5 // pred_region
      %s161 = ssub.s32 %s11, 1
      // Predicated region
      $region13: #{fine_tuned_bert_forward.4} parent=11 // pred_check
        %p162 = pneg %p58
      $region14: #{fine_tuned_bert_forward.4} parent=11 // pred_check_branch
        %164 = sbr.rel (%p162) target = $region16
      $region15: #{fine_tuned_bert_forward.4} parent=11 // pred_region
        _
      $region16: #{fine_tuned_bert_forward.4} parent=11 // pred_fallthru
        _
      // Predicated region
      $region17: #{fine_tuned_bert_forward.4} parent=11 // pred_check
        %p165 = pneg %p79
      $region18: #{fine_tuned_bert_forward.4} parent=11 // pred_check_branch
        %167 = sbr.rel (%p165) target = $region20
      $region19: #{fine_tuned_bert_forward.4} parent=11 // pred_region
        _
      $region20: #{fine_tuned_bert_forward.4} parent=11 // pred_fallthru
        _
      // Predicated region
      $region21: #{fine_tuned_bert_forward.4} parent=11 // pred_check
        %p168 = pneg %p100
      $region22: #{fine_tuned_bert_forward.4} parent=11 // pred_check_branch
        %170 = sbr.rel (%p168) target = $region24
      $region23: #{fine_tuned_bert_forward.4} parent=11 // pred_region
        _
      $region24: #{fine_tuned_bert_forward.4} parent=11 // pred_fallthru
        _
      // Predicated region
      $region25: #{fine_tuned_bert_forward.4} parent=11 // pred_check
        %p171 = pneg %p121
      $region26: #{fine_tuned_bert_forward.4} parent=11 // pred_check_branch
        %173 = sbr.rel (%p171) target = $region28
      $region27: #{fine_tuned_bert_forward.4} parent=11 // pred_region
        _
      $region28: #{fine_tuned_bert_forward.4} parent=11 // pred_fallthru
        _
    $region12: #{fine_tuned_bert_forward.4} parent=5 // pred_fallthru
      _
    %p174 = scmp.lt.s32.totalorder %s11, 2
    // Predicated region
    $region29: #{fine_tuned_bert_forward.4} parent=5 // pred_check
      %p175 = pneg %p174
    $region30: #{fine_tuned_bert_forward.4} parent=5 // pred_check_branch
      %177 = sbr.rel (%p175) target = $region32
    $region31: #{fine_tuned_bert_forward.4} parent=5 // pred_region
      // Predicated region
      $region33: #{fine_tuned_bert_forward.4} parent=31 // pred_check
        %p178 = pneg %p31
      $region34: #{fine_tuned_bert_forward.4} parent=31 // pred_check_branch
        %180 = sbr.rel (%p178) target = $region36
      $region35: #{fine_tuned_bert_forward.4} parent=31 // pred_region
        %p181 = scmp.lt.s32.totalorder %s11, 1
        %s182 = scalar_select %p181, %s11, 1
        %s183 = smul.addr %s182, 8
        %s184 = scalar_lea.vmem %s0, %s183
      $region36: #{fine_tuned_bert_forward.4} parent=31 // pred_fallthru
        _
    $region32: #{fine_tuned_bert_forward.4} parent=5 // pred_fallthru
      _
    %p185 = scmp.le.s32.totalorder 1, %s11
    %p186 = scmp.lt.s32.totalorder %s11, 3
    %p187 = pnand %p185, %p186
    %p188 = pneg %p187
    // Predicated region
    $region37: #{fine_tuned_bert_forward.4} parent=5 // pred_check
      _
    $region38: #{fine_tuned_bert_forward.4} parent=5 // pred_check_branch
      %190 = sbr.rel (%p187) target = $region40
    $region39: #{fine_tuned_bert_forward.4} parent=5 // pred_region
      %s191 = ssub.s32 %s11, 1
      %p192 = scmp.lt.s32.totalorder %s16, 1
      %s193 = scalar_select %p192, %s16, 1
      %s194 = smul.addr %s193, 8
      %s195 = scalar_lea.vmem %s0, %s194
      %p196 = pneg %p37
      %p197 = pneg %p34
      %p198 = pneg %p58
      %p199 = pneg %p55
      %p200 = pneg %p79
      %p201 = pneg %p76
      %p202 = pneg %p100
      %p203 = pneg %p97
      %p204 = pneg %p121
      %p205 = pneg %p118
      %p206 = pneg %p147
      %p207 = pneg %p144
      %p208 = scmp.lt.s32.totalorder %s16, 1
      %s209 = scalar_select %p208, %s16, 1
      %s210 = smul.addr %s209, 8
      %s211 = scalar_lea.vmem %s5, %s210
      %p212 = scmp.lt.s32.totalorder %s16, 1
      %s213 = scalar_select %p212, %s16, 1
      %s214 = smul.addr %s213, 8
      %s215 = scalar_lea.vmem %s0, %s214
      %p216 = scmp.lt.s32.totalorder %s16, 1
      %s217 = scalar_select %p216, %s16, 1
      %s218 = smul.addr %s217, 8
      %s219 = scalar_lea.vmem %s5, %s218
      %v220 = vld [vmem:[%s215] sm:$0xff]
      %v221 = vld [vmem:[%s1] sm:$0xff]
      %v222 = vadd.f32 %v220, %v221
      %v223 = vld [vmem:[%s2] sm:$0x1]
      %v225 = vperm.slane %v223, 0
      %v227 = vadd.f32 %v222, %v225
      %v228 = vld [vmem:[%s3] sm:$0x1]
      %v229 = vld [vmem:[%s4] sm:$0x1]
      %vm230 = vcmask 261120
      %v231 = vsel %vm230, %v227, 0.0
      %232 = vadd.xlane.f32.xlu0 %v231
      %v233 = vpop.xlane.xlu0 %232
      %v234 = vrcp.pop 32.0
      %v235 = vmul.f32 32.0, %v234
      %v236 = vsub.f32 1.0, %v235
      %v237 = vmul.f32 %v234, %v236
      %v238 = vadd.f32 %v234, %v237
      %vm239 = vweird.f32 %v234
      %v240 = vsel %vm239, %v234, %v238
      %v241 = vmul.f32 %v233, %v240
      %v242 = vsub.f32 %v227, %v241
      %v243 = vmul.f32 %v242, %v242
      %v244 = vsel %vm230, %v243, 0.0
      %245 = vadd.xlane.f32.xlu0 %v244
      %v246 = vpop.xlane.xlu0 %245
      %v247 = vmul.f32 %v246, %v240
      %v248 = vadd.f32 %v247, 1e-12
      %v249 = vrsqrt.pop %v248
      %v250 = vmul.f32 %v249, %v248
      %v251 = vmul.f32 %v250, %v249
      %v252 = vmul.f32 0.5, %v251
      %v253 = vsub.f32 1.5, %v252
      %v254 = vmul.f32 %v249, %v253
      %vm255 = vweird.f32 %v248
      %vm256 = vweird.f32 %v249
      %vm257 = vmor %vm255, %vm256
      %v258 = vsel %vm257, %v249, %v254
      %v259 = vmul.f32 %v242, %v258
      %v261 = vperm.slane %v228, 0
      %v263 = vmul.f32 %v259, %v261
      %v265 = vperm.slane %v229, 0
      %v267 = vadd.f32 %v263, %v265
      %268 = vst.msk [vmem:[%s219] sm:$0xff] %vm230, %v267
      %p269 = scmp.lt.s32.totalorder %s16, 1
      %s270 = scalar_select %p269, %s16, 1
      %s271 = smul.addr %s270, 8
      %s272 = scalar_lea.vmem %s5, %s271
      // Predicated region
      $region41: #{fine_tuned_bert_forward.4} parent=39 // pred_check
        %p273 = pneg %p144
      $region42: #{fine_tuned_bert_forward.4} parent=39 // pred_check_branch
        %275 = sbr.rel (%p273) target = $region44
      $region43: #{fine_tuned_bert_forward.4} parent=39 // pred_region
        _
      $region44: #{fine_tuned_bert_forward.4} parent=39 // pred_fallthru
        _
    $region40: #{fine_tuned_bert_forward.4} parent=5 // pred_fallthru
      _
    %p276 = scmp.le.s32.totalorder 2, %s11
    // Predicated region
    $region45: #{fine_tuned_bert_forward.4} parent=5 // pred_check
      %p277 = pneg %p276
    $region46: #{fine_tuned_bert_forward.4} parent=5 // pred_check_branch
      %279 = sbr.rel (%p277) target = $region48
    $region47: #{fine_tuned_bert_forward.4} parent=5 // pred_region
      %s280 = ssub.s32 %s11, 2
      // Predicated region
      $region49: #{fine_tuned_bert_forward.4} parent=47 // pred_check
        %p281 = pneg %p150
      $region50: #{fine_tuned_bert_forward.4} parent=47 // pred_check_branch
        %283 = sbr.rel (%p281) target = $region52
      $region51: #{fine_tuned_bert_forward.4} parent=47 // pred_region
        %p284 = scmp.lt.s32.totalorder %s17, 1
        %s285 = scalar_select %p284, %s17, 1
        %s286 = smul.addr %s285, 8
        %s287 = scalar_lea.vmem %s5, %s286
      $region52: #{fine_tuned_bert_forward.4} parent=47 // pred_fallthru
        _
    $region48: #{fine_tuned_bert_forward.4} parent=5 // pred_fallthru
      _
  $region6: #{fine_tuned_bert_forward.4} parent=0 // loop_footer
    %s15 = sadd.s32 1, %s11
  $region7: #{fine_tuned_bert_forward.4} parent=0 // loop_footer_branch
    %10 = sbr.rel target = $region3
  $region8: #{fine_tuned_bert_forward.4} parent=0 // loop_exit
    _

// kernel: fine_tuned_bert_forward.5
$region0: #{fine_tuned_bert_forward.5}
  #allocation0 [shape = 'u32[]', space=smem, size = 0x4, offset = 0x4, fixed_abs, tag = 'smem constant byte address 0x4 - core index']
  #allocation1 [shape = 'u32[72,128]{1,0:T(1,128)}', space=vmem, size = 0x9000, scoped, tag = 'internal scratch']
  %s0 = inlined_call_operand.vmem [shape: f32[2,8,32], index: 0, kind: input, shape index: {}]
  %s1 = inlined_call_operand.vmem [shape: f32[2,1,8], index: 1, kind: input, shape index: {}]
  %s2 = inlined_call_operand.hbm [shape: bf16[32,96], index: 2, kind: input, shape index: {}]
  %s3 = inlined_call_operand.hbm [shape: f32[1,96], index: 3, kind: input, shape index: {}]
  %s4 = inlined_call_operand.hbm [shape: bf16[32,32], index: 4, kind: input, shape index: {}]
  %s5 = inlined_call_operand.hbm [shape: f32[1,32], index: 5, kind: input, shape index: {}]
  %s6 = inlined_call_operand.vmem [shape: f32[1,32], index: 6, kind: input, shape index: {}, may-alias: {6,12}]
  %s7 = inlined_call_operand.vmem [shape: f32[1,32], index: 7, kind: input, shape index: {}, may-alias: {7,13}]
  %s8 = inlined_call_operand.vmem [shape: bf16[32,64], index: 8, kind: input, shape index: {}]
  %s9 = inlined_call_operand.hbm [shape: f32[1,64], index: 9, kind: input, shape index: {}]
  %s10 = inlined_call_operand.vmem [shape: bf16[64,32], index: 10, kind: input, shape index: {}]
  %s11 = inlined_call_operand.hbm [shape: f32[1,32], index: 11, kind: input, shape index: {}]
  %s12 = inlined_call_operand.vmem [shape: f32[1,32], index: 12, kind: input, shape index: {}, may-alias: {6,12}]
  %s13 = inlined_call_operand.vmem [shape: f32[1,32], index: 13, kind: input, shape index: {}, may-alias: {7,13}]
  %s14 = inlined_call_operand.vmem [shape: f32[2,8,32], index: 14, kind: output, shape index: {}]
  %s15 = sld [smem:[#allocation0]]
  $region113: #{fine_tuned_bert_forward.5} parent=0
    _
  %s17 = ssub.s32 1, %s15
  %s18 = scalar_select 0, %s17, %s15
  $region1: #{fine_tuned_bert_forward.5} parent=0
    #allocation2 [shape = 'u8[8192]{0}', space=vmem, size = 0x2000, scoped, tag = 'input window, operand 2, single buffered']
    #allocation3 [shape = 's32[2]{0}', space=sflag, size = 0x8, scoped, tag = 'scoped memory for fine_tuned_bert_forward.5']
    #allocation4 [shape = 'u8[512]{0}', space=vmem, size = 0x400, scoped, tag = 'input window, operand 3, single buffered']
    #allocation5 [shape = 's32[1]{0}', space=sflag, size = 0x4, scoped, tag = 'scoped memory for fine_tuned_bert_forward.5']
    #allocation6 [shape = 'u8[8192]{0}', space=vmem, size = 0x2000, scoped, tag = 'input window, operand 4, single buffered']
    #allocation7 [shape = 'u8[512]{0}', space=vmem, size = 0x400, scoped, tag = 'input window, operand 5, single buffered']
    #allocation8 [shape = 's32[1]{0}', space=sflag, size = 0x4, scoped, tag = 'scoped memory for fine_tuned_bert_forward.5']
    #allocation9 [shape = 'u8[512]{0}', space=vmem, size = 0x400, scoped, tag = 'input window, operand 9, single buffered']
    #allocation10 [shape = 'u8[512]{0}', space=vmem, size = 0x400, scoped, tag = 'input window, operand 11, single buffered']
    #allocation11 [shape = 's32[1]{0}', space=sflag, size = 0x4, scoped, tag = 'scoped memory for fine_tuned_bert_forward.5']
    %19 = vsyncpa [#allocation3], 0
    %20 = vsyncpa [#allocation5], 0
    %21 = vsyncpa [#allocation8], 0
    %22 = vsyncpa [#allocation11], 0
    loop: start=0, step=1, limit=4
    $region2: #{fine_tuned_bert_forward.5} parent=1 // loop_pre_header
      _
    $region3: #{fine_tuned_bert_forward.5} parent=1 // loop_header
      %s24 = sphi 0, %s28
      %p25 = scmp.ge.s32.totalorder %s24, 4
      %s34 = sphi 0, %s36
      %s37 = sphi 0, %s34
      %s38 = sphi 0, %s37
      %s54 = sphi 0, %s38
      %s60 = sphi 0, %s62
      %s63 = sphi 0, %s60
      %s64 = sphi 0, %s63
      %s80 = sphi 0, %s64
      %s84 = sphi 0, %s84
      %s86 = sphi 0, %s84
      %s87 = sphi 0, %s86
      %s101 = sphi 0, %s87
      %s105 = sphi 0, %s105
      %s107 = sphi 0, %s105
      %s108 = sphi 0, %s107
      %s122 = sphi 0, %s108
      %s126 = sphi 0, %s126
      %s128 = sphi 0, %s126
      %s129 = sphi 0, %s128
      %s143 = sphi 0, %s129
      %s147 = sphi 0, %s147
      %s149 = sphi 0, %s147
      %s150 = sphi 0, %s149
      %s164 = sphi 0, %s150
      %s168 = sphi 0, %s168
      %s170 = sphi 0, %s168
      %s171 = sphi 0, %s170
      %s185 = sphi 0, %s171
      %s189 = sphi 0, %s189
      %s191 = sphi 0, %s189
      %s192 = sphi 0, %s191
      %s206 = sphi 0, %s192
      %s210 = sphi 0, %s210
      %s212 = sphi 0, %s210
      %s213 = sphi 0, %s212
      %s227 = sphi 0, %s213
      %s231 = sphi 0, %s231
      %s233 = sphi 0, %s231
      %s234 = sphi 0, %s233
      %s248 = sphi 0, %s234
      %s252 = sphi 0, %s252
      %s254 = sphi 0, %s252
      %s255 = sphi 0, %s254
      %s269 = sphi 0, %s255
      %s273 = sphi 0, %s273
      %s275 = sphi 0, %s273
      %s276 = sphi 0, %s275
      %s290 = sphi 0, %s276
      %s294 = sphi 0, %s294
      %s296 = sphi 0, %s294
      %s297 = sphi 0, %s296
      %s311 = sphi 0, %s297
      %s315 = sphi 0, %s315
      %s317 = sphi 0, %s315
      %s318 = sphi 0, %s317
      %s332 = sphi 0, %s318
      %s338 = sphi 0, %s340
      %s341 = sphi 0, %s338
      %s342 = sphi 0, %s341
      %s358 = sphi 0, %s342
    $region4: #{fine_tuned_bert_forward.5} parent=1 // loop_header_branch
      %27 = sbr.rel (%p25) target = $region8
    $region5: #{fine_tuned_bert_forward.5} parent=1 // loop_body
      %s29 = ssub.s32 %s24, 1
      %s30 = ssub.s32 %s24, 2
      %s31 = sadd.s32 %s24, 1
      %s32 = ssub.s32 %s24, %s31
      %p33 = scmp.eq.s32.totalorder %s32, 0
      %s35 = sadd.s32 %s34, 1
      %s36 = scalar_select %p33, %s34, %s35
      %p39 = pneg %p33
      %p40 = scmp.eq.s32.totalorder %s24, 1
      %p41 = por %p39, %p40
      %p42 = scmp.ne.s32.totalorder %s34, %s37
      %p43 = scmp.eq.s32.totalorder %s24, 0
      %p44 = por %p42, %p43
      %p45 = scmp.ne.s32.totalorder %s34, %s37
      %p46 = scmp.eq.s32.totalorder %s29, 1
      %p47 = por %p45, %p46
      %p48 = scmp.ne.s32.totalorder %s37, %s38
      %p49 = scmp.eq.s32.totalorder %s29, 0
      %p50 = por %p48, %p49
      %p51 = scmp.ne.s32.totalorder %s37, %s38
      %p52 = scmp.eq.s32.totalorder %s30, 1
      %p53 = por %p51, %p52
      %p55 = scmp.ne.s32.totalorder %s38, %s54
      %p56 = scmp.eq.s32.totalorder %s30, 0
      %p57 = por %p55, %p56
      %s58 = ssub.s32 %s24, %s31
      %p59 = scmp.eq.s32.totalorder %s58, 0
      %s61 = sadd.s32 %s60, 1
      %s62 = scalar_select %p59, %s60, %s61
      %p65 = pneg %p59
      %p66 = scmp.eq.s32.totalorder %s24, 1
      %p67 = por %p65, %p66
      %p68 = scmp.ne.s32.totalorder %s60, %s63
      %p69 = scmp.eq.s32.totalorder %s24, 0
      %p70 = por %p68, %p69
      %p71 = scmp.ne.s32.totalorder %s60, %s63
      %p72 = scmp.eq.s32.totalorder %s29, 1
      %p73 = por %p71, %p72
      %p74 = scmp.ne.s32.totalorder %s63, %s64
      %p75 = scmp.eq.s32.totalorder %s29, 0
      %p76 = por %p74, %p75
      %p77 = scmp.ne.s32.totalorder %s63, %s64
      %p78 = scmp.eq.s32.totalorder %s30, 1
      %p79 = por %p77, %p78
      %p81 = scmp.ne.s32.totalorder %s64, %s80
      %p82 = scmp.eq.s32.totalorder %s30, 0
      %p83 = por %p81, %p82
      %s85 = sadd.s32 %s84, 1
      %p88 = scmp.eq.s32.totalorder %s24, 1
      %p89 = scmp.ne.s32.totalorder %s84, %s86
      %p90 = scmp.eq.s32.totalorder %s24, 0
      %p91 = por %p89, %p90
      %p92 = scmp.ne.s32.totalorder %s84, %s86
      %p93 = scmp.eq.s32.totalorder %s29, 1
      %p94 = por %p92, %p93
      %p95 = scmp.ne.s32.totalorder %s86, %s87
      %p96 = scmp.eq.s32.totalorder %s29, 0
      %p97 = por %p95, %p96
      %p98 = scmp.ne.s32.totalorder %s86, %s87
      %p99 = scmp.eq.s32.totalorder %s30, 1
      %p100 = por %p98, %p99
      %p102 = scmp.ne.s32.totalorder %s87, %s101
      %p103 = scmp.eq.s32.totalorder %s30, 0
      %p104 = por %p102, %p103
      %s106 = sadd.s32 %s105, 1
      %p109 = scmp.eq.s32.totalorder %s24, 1
      %p110 = scmp.ne.s32.totalorder %s105, %s107
      %p111 = scmp.eq.s32.totalorder %s24, 0
      %p112 = por %p110, %p111
      %p113 = scmp.ne.s32.totalorder %s105, %s107
      %p114 = scmp.eq.s32.totalorder %s29, 1
      %p115 = por %p113, %p114
      %p116 = scmp.ne.s32.totalorder %s107, %s108
      %p117 = scmp.eq.s32.totalorder %s29, 0
      %p118 = por %p116, %p117
      %p119 = scmp.ne.s32.totalorder %s107, %s108
      %p120 = scmp.eq.s32.totalorder %s30, 1
      %p121 = por %p119, %p120
      %p123 = scmp.ne.s32.totalorder %s108, %s122
      %p124 = scmp.eq.s32.totalorder %s30, 0
      %p125 = por %p123, %p124
      %s127 = sadd.s32 %s126, 1
      %p130 = scmp.eq.s32.totalorder %s24, 1
      %p131 = scmp.ne.s32.totalorder %s126, %s128
      %p132 = scmp.eq.s32.totalorder %s24, 0
      %p133 = por %p131, %p132
      %p134 = scmp.ne.s32.totalorder %s126, %s128
      %p135 = scmp.eq.s32.totalorder %s29, 1
      %p136 = por %p134, %p135
      %p137 = scmp.ne.s32.totalorder %s128, %s129
      %p138 = scmp.eq.s32.totalorder %s29, 0
      %p139 = por %p137, %p138
      %p140 = scmp.ne.s32.totalorder %s128, %s129
      %p141 = scmp.eq.s32.totalorder %s30, 1
      %p142 = por %p140, %p141
      %p144 = scmp.ne.s32.totalorder %s129, %s143
      %p145 = scmp.eq.s32.totalorder %s30, 0
      %p146 = por %p144, %p145
      %s148 = sadd.s32 %s147, 1
      %p151 = scmp.eq.s32.totalorder %s24, 1
      %p152 = scmp.ne.s32.totalorder %s147, %s149
      %p153 = scmp.eq.s32.totalorder %s24, 0
      %p154 = por %p152, %p153
      %p155 = scmp.ne.s32.totalorder %s147, %s149
      %p156 = scmp.eq.s32.totalorder %s29, 1
      %p157 = por %p155, %p156
      %p158 = scmp.ne.s32.totalorder %s149, %s150
      %p159 = scmp.eq.s32.totalorder %s29, 0
      %p160 = por %p158, %p159
      %p161 = scmp.ne.s32.totalorder %s149, %s150
      %p162 = scmp.eq.s32.totalorder %s30, 1
      %p163 = por %p161, %p162
      %p165 = scmp.ne.s32.totalorder %s150, %s164
      %p166 = scmp.eq.s32.totalorder %s30, 0
      %p167 = por %p165, %p166
      %s169 = sadd.s32 %s168, 1
      %p172 = scmp.eq.s32.totalorder %s24, 1
      %p173 = scmp.ne.s32.totalorder %s168, %s170
      %p174 = scmp.eq.s32.totalorder %s24, 0
      %p175 = por %p173, %p174
      %p176 = scmp.ne.s32.totalorder %s168, %s170
      %p177 = scmp.eq.s32.totalorder %s29, 1
      %p178 = por %p176, %p177
      %p179 = scmp.ne.s32.totalorder %s170, %s171
      %p180 = scmp.eq.s32.totalorder %s29, 0
      %p181 = por %p179, %p180
      %p182 = scmp.ne.s32.totalorder %s170, %s171
      %p183 = scmp.eq.s32.totalorder %s30, 1
      %p184 = por %p182, %p183
      %p186 = scmp.ne.s32.totalorder %s171, %s185
      %p187 = scmp.eq.s32.totalorder %s30, 0
      %p188 = por %p186, %p187
      %s190 = sadd.s32 %s189, 1
      %p193 = scmp.eq.s32.totalorder %s24, 1
      %p194 = scmp.ne.s32.totalorder %s189, %s191
      %p195 = scmp.eq.s32.totalorder %s24, 0
      %p196 = por %p194, %p195
      %p197 = scmp.ne.s32.totalorder %s189, %s191
      %p198 = scmp.eq.s32.totalorder %s29, 1
      %p199 = por %p197, %p198
      %p200 = scmp.ne.s32.totalorder %s191, %s192
      %p201 = scmp.eq.s32.totalorder %s29, 0
      %p202 = por %p200, %p201
      %p203 = scmp.ne.s32.totalorder %s191, %s192
      %p204 = scmp.eq.s32.totalorder %s30, 1
      %p205 = por %p203, %p204
      %p207 = scmp.ne.s32.totalorder %s192, %s206
      %p208 = scmp.eq.s32.totalorder %s30, 0
      %p209 = por %p207, %p208
      %s211 = sadd.s32 %s210, 1
      %p214 = scmp.eq.s32.totalorder %s24, 1
      %p215 = scmp.ne.s32.totalorder %s210, %s212
      %p216 = scmp.eq.s32.totalorder %s24, 0
      %p217 = por %p215, %p216
      %p218 = scmp.ne.s32.totalorder %s210, %s212
      %p219 = scmp.eq.s32.totalorder %s29, 1
      %p220 = por %p218, %p219
      %p221 = scmp.ne.s32.totalorder %s212, %s213
      %p222 = scmp.eq.s32.totalorder %s29, 0
      %p223 = por %p221, %p222
      %p224 = scmp.ne.s32.totalorder %s212, %s213
      %p225 = scmp.eq.s32.totalorder %s30, 1
      %p226 = por %p224, %p225
      %p228 = scmp.ne.s32.totalorder %s213, %s227
      %p229 = scmp.eq.s32.totalorder %s30, 0
      %p230 = por %p228, %p229
      %s232 = sadd.s32 %s231, 1
      %p235 = scmp.eq.s32.totalorder %s24, 1
      %p236 = scmp.ne.s32.totalorder %s231, %s233
      %p237 = scmp.eq.s32.totalorder %s24, 0
      %p238 = por %p236, %p237
      %p239 = scmp.ne.s32.totalorder %s231, %s233
      %p240 = scmp.eq.s32.totalorder %s29, 1
      %p241 = por %p239, %p240
      %p242 = scmp.ne.s32.totalorder %s233, %s234
      %p243 = scmp.eq.s32.totalorder %s29, 0
      %p244 = por %p242, %p243
      %p245 = scmp.ne.s32.totalorder %s233, %s234
      %p246 = scmp.eq.s32.totalorder %s30, 1
      %p247 = por %p245, %p246
      %p249 = scmp.ne.s32.totalorder %s234, %s248
      %p250 = scmp.eq.s32.totalorder %s30, 0
      %p251 = por %p249, %p250
      %s253 = sadd.s32 %s252, 1
      %p256 = scmp.eq.s32.totalorder %s24, 1
      %p257 = scmp.ne.s32.totalorder %s252, %s254
      %p258 = scmp.eq.s32.totalorder %s24, 0
      %p259 = por %p257, %p258
      %p260 = scmp.ne.s32.totalorder %s252, %s254
      %p261 = scmp.eq.s32.totalorder %s29, 1
      %p262 = por %p260, %p261
      %p263 = scmp.ne.s32.totalorder %s254, %s255
      %p264 = scmp.eq.s32.totalorder %s29, 0
      %p265 = por %p263, %p264
      %p266 = scmp.ne.s32.totalorder %s254, %s255
      %p267 = scmp.eq.s32.totalorder %s30, 1
      %p268 = por %p266, %p267
      %p270 = scmp.ne.s32.totalorder %s255, %s269
      %p271 = scmp.eq.s32.totalorder %s30, 0
      %p272 = por %p270, %p271
      %s274 = sadd.s32 %s273, 1
      %p277 = scmp.eq.s32.totalorder %s24, 1
      %p278 = scmp.ne.s32.totalorder %s273, %s275
      %p279 = scmp.eq.s32.totalorder %s24, 0
      %p280 = por %p278, %p279
      %p281 = scmp.ne.s32.totalorder %s273, %s275
      %p282 = scmp.eq.s32.totalorder %s29, 1
      %p283 = por %p281, %p282
      %p284 = scmp.ne.s32.totalorder %s275, %s276
      %p285 = scmp.eq.s32.totalorder %s29, 0
      %p286 = por %p284, %p285
      %p287 = scmp.ne.s32.totalorder %s275, %s276
      %p288 = scmp.eq.s32.totalorder %s30, 1
      %p289 = por %p287, %p288
      %p291 = scmp.ne.s32.totalorder %s276, %s290
      %p292 = scmp.eq.s32.totalorder %s30, 0
      %p293 = por %p291, %p292
      %s295 = sadd.s32 %s294, 1
      %p298 = scmp.eq.s32.totalorder %s24, 1
      %p299 = scmp.ne.s32.totalorder %s294, %s296
      %p300 = scmp.eq.s32.totalorder %s24, 0
      %p301 = por %p299, %p300
      %p302 = scmp.ne.s32.totalorder %s294, %s296
      %p303 = scmp.eq.s32.totalorder %s29, 1
      %p304 = por %p302, %p303
      %p305 = scmp.ne.s32.totalorder %s296, %s297
      %p306 = scmp.eq.s32.totalorder %s29, 0
      %p307 = por %p305, %p306
      %p308 = scmp.ne.s32.totalorder %s296, %s297
      %p309 = scmp.eq.s32.totalorder %s30, 1
      %p310 = por %p308, %p309
      %p312 = scmp.ne.s32.totalorder %s297, %s311
      %p313 = scmp.eq.s32.totalorder %s30, 0
      %p314 = por %p312, %p313
      %s316 = sadd.s32 %s315, 1
      %p319 = scmp.eq.s32.totalorder %s24, 1
      %p320 = scmp.ne.s32.totalorder %s315, %s317
      %p321 = scmp.eq.s32.totalorder %s24, 0
      %p322 = por %p320, %p321
      %p323 = scmp.ne.s32.totalorder %s315, %s317
      %p324 = scmp.eq.s32.totalorder %s29, 1
      %p325 = por %p323, %p324
      %p326 = scmp.ne.s32.totalorder %s317, %s318
      %p327 = scmp.eq.s32.totalorder %s29, 0
      %p328 = por %p326, %p327
      %p329 = scmp.ne.s32.totalorder %s317, %s318
      %p330 = scmp.eq.s32.totalorder %s30, 1
      %p331 = por %p329, %p330
      %p333 = scmp.ne.s32.totalorder %s318, %s332
      %p334 = scmp.eq.s32.totalorder %s30, 0
      %p335 = por %p333, %p334
      %s336 = ssub.s32 %s24, %s31
      %p337 = scmp.eq.s32.totalorder %s336, 0
      %s339 = sadd.s32 %s338, 1
      %s340 = scalar_select %p337, %s338, %s339
      %p343 = pneg %p337
      %p344 = scmp.eq.s32.totalorder %s24, 1
      %p345 = por %p343, %p344
      %p346 = scmp.ne.s32.totalorder %s338, %s341
      %p347 = scmp.eq.s32.totalorder %s24, 0
      %p348 = por %p346, %p347
      %p349 = scmp.ne.s32.totalorder %s338, %s341
      %p350 = scmp.eq.s32.totalorder %s29, 1
      %p351 = por %p349, %p350
      %p352 = scmp.ne.s32.totalorder %s341, %s342
      %p353 = scmp.eq.s32.totalorder %s29, 0
      %p354 = por %p352, %p353
      %p355 = scmp.ne.s32.totalorder %s341, %s342
      %p356 = scmp.eq.s32.totalorder %s30, 1
      %p357 = por %p355, %p356
      %p359 = scmp.ne.s32.totalorder %s342, %s358
      %p360 = scmp.eq.s32.totalorder %s30, 0
      %p361 = por %p359, %p360
      %p362 = scmp.le.s32.totalorder 1, %s24
      %p363 = scmp.lt.s32.totalorder %s24, 3
      %p364 = pnand %p362, %p363
      %p365 = pneg %p364
      // Predicated region
      $region9: #{fine_tuned_bert_forward.5} parent=5 // pred_check
        _
      $region10: #{fine_tuned_bert_forward.5} parent=5 // pred_check_branch
        %367 = sbr.rel (%p364) target = $region12
      $region11: #{fine_tuned_bert_forward.5} parent=5 // pred_region
        %s368 = ssub.s32 %s24, 1
        // Predicated region
        $region13: #{fine_tuned_bert_forward.5} parent=11 // pred_check
          %p369 = pneg %p97
        $region14: #{fine_tuned_bert_forward.5} parent=11 // pred_check_branch
          %371 = sbr.rel (%p369) target = $region16
        $region15: #{fine_tuned_bert_forward.5} parent=11 // pred_region
          %373 = vsyncadd [#allocation3], 0
          %s374 = sshll.u32 %s2, 4
          %s375 = int_to_ptr.hbm [resolvable:$true] %s374
          %s376 = sshll.u32 [#allocation2], 4
          %s377 = int_to_ptr.vmem [resolvable:$true] %s376
          %382 = dma.hbm_to_vmem [thread:$0]  %s375, 256, %s377, [#allocation3], 64, 64, 4
        $region16: #{fine_tuned_bert_forward.5} parent=11 // pred_fallthru
          _
        // Predicated region
        $region17: #{fine_tuned_bert_forward.5} parent=11 // pred_check
          %p383 = pneg %p118
        $region18: #{fine_tuned_bert_forward.5} parent=11 // pred_check_branch
          %385 = sbr.rel (%p383) target = $region20
        $region19: #{fine_tuned_bert_forward.5} parent=11 // pred_region
          %387 = vsyncadd [#allocation5], 0
          %s389 = sshll.u32 %s3, 4
          %s390 = int_to_ptr.hbm [resolvable:$true] %s389
          %s391 = sshll.u32 [#allocation4], 4
          %s392 = int_to_ptr.vmem [resolvable:$true] %s391
          %394 = dma.hbm_to_vmem [thread:$0]  %s390, 16, %s392, [#allocation5]
        $region20: #{fine_tuned_bert_forward.5} parent=11 // pred_fallthru
          _
        // Predicated region
        $region21: #{fine_tuned_bert_forward.5} parent=11 // pred_check
          %p395 = pneg %p139
        $region22: #{fine_tuned_bert_forward.5} parent=11 // pred_check_branch
          %397 = sbr.rel (%p395) target = $region24
        $region23: #{fine_tuned_bert_forward.5} parent=11 // pred_region
          %399 = vsyncadd [#allocation5], 0
          %s400 = sshll.u32 %s4, 4
          %s401 = int_to_ptr.hbm [resolvable:$true] %s400
          %s402 = sshll.u32 [#allocation6], 4
          %s403 = int_to_ptr.vmem [resolvable:$true] %s402
          %408 = dma.hbm_to_vmem [thread:$0]  %s401, 256, %s403, [#allocation5], 64, 64, 4
        $region24: #{fine_tuned_bert_forward.5} parent=11 // pred_fallthru
          _
        // Predicated region
        $region25: #{fine_tuned_bert_forward.5} parent=11 // pred_check
          %p409 = pneg %p160
        $region26: #{fine_tuned_bert_forward.5} parent=11 // pred_check_branch
          %411 = sbr.rel (%p409) target = $region28
        $region27: #{fine_tuned_bert_forward.5} parent=11 // pred_region
          %413 = vsyncadd [#allocation8], 0
          %s415 = sshll.u32 %s5, 4
          %s416 = int_to_ptr.hbm [resolvable:$true] %s415
          %s417 = sshll.u32 [#allocation7], 4
          %s418 = int_to_ptr.vmem [resolvable:$true] %s417
          %420 = dma.hbm_to_vmem [thread:$0]  %s416, 16, %s418, [#allocation8]
        $region28: #{fine_tuned_bert_forward.5} parent=11 // pred_fallthru
          _
        // Predicated region
        $region29: #{fine_tuned_bert_forward.5} parent=11 // pred_check
          %p421 = pneg %p181
        $region30: #{fine_tuned_bert_forward.5} parent=11 // pred_check_branch
          %423 = sbr.rel (%p421) target = $region32
        $region31: #{fine_tuned_bert_forward.5} parent=11 // pred_region
          _
        $region32: #{fine_tuned_bert_forward.5} parent=11 // pred_fallthru
          _
        // Predicated region
        $region33: #{fine_tuned_bert_forward.5} parent=11 // pred_check
          %p424 = pneg %p202
        $region34: #{fine_tuned_bert_forward.5} parent=11 // pred_check_branch
          %426 = sbr.rel (%p424) target = $region36
        $region35: #{fine_tuned_bert_forward.5} parent=11 // pred_region
          _
        $region36: #{fine_tuned_bert_forward.5} parent=11 // pred_fallthru
          _
        // Predicated region
        $region37: #{fine_tuned_bert_forward.5} parent=11 // pred_check
          %p427 = pneg %p223
        $region38: #{fine_tuned_bert_forward.5} parent=11 // pred_check_branch
          %429 = sbr.rel (%p427) target = $region40
        $region39: #{fine_tuned_bert_forward.5} parent=11 // pred_region
          _
        $region40: #{fine_tuned_bert_forward.5} parent=11 // pred_fallthru
          _
        // Predicated region
        $region41: #{fine_tuned_bert_forward.5} parent=11 // pred_check
          %p430 = pneg %p244
        $region42: #{fine_tuned_bert_forward.5} parent=11 // pred_check_branch
          %432 = sbr.rel (%p430) target = $region44
        $region43: #{fine_tuned_bert_forward.5} parent=11 // pred_region
          %434 = vsyncadd [#allocation8], 0
          %s436 = sshll.u32 %s9, 4
          %s437 = int_to_ptr.hbm [resolvable:$true] %s436
          %s438 = sshll.u32 [#allocation9], 4
          %s439 = int_to_ptr.vmem [resolvable:$true] %s438
          %441 = dma.hbm_to_vmem [thread:$0]  %s437, 16, %s439, [#allocation8]
        $region44: #{fine_tuned_bert_forward.5} parent=11 // pred_fallthru
          _
        // Predicated region
        $region45: #{fine_tuned_bert_forward.5} parent=11 // pred_check
          %p442 = pneg %p265
        $region46: #{fine_tuned_bert_forward.5} parent=11 // pred_check_branch
          %444 = sbr.rel (%p442) target = $region48
        $region47: #{fine_tuned_bert_forward.5} parent=11 // pred_region
          _
        $region48: #{fine_tuned_bert_forward.5} parent=11 // pred_fallthru
          _
        // Predicated region
        $region49: #{fine_tuned_bert_forward.5} parent=11 // pred_check
          %p445 = pneg %p286
        $region50: #{fine_tuned_bert_forward.5} parent=11 // pred_check_branch
          %447 = sbr.rel (%p445) target = $region52
        $region51: #{fine_tuned_bert_forward.5} parent=11 // pred_region
          %449 = vsyncadd [#allocation11], 0
          %s451 = sshll.u32 %s11, 4
          %s452 = int_to_ptr.hbm [resolvable:$true] %s451
          %s453 = sshll.u32 [#allocation10], 4
          %s454 = int_to_ptr.vmem [resolvable:$true] %s453
          %456 = dma.hbm_to_vmem [thread:$0]  %s452, 16, %s454, [#allocation11]
        $region52: #{fine_tuned_bert_forward.5} parent=11 // pred_fallthru
          _
        // Predicated region
        $region53: #{fine_tuned_bert_forward.5} parent=11 // pred_check
          %p457 = pneg %p307
        $region54: #{fine_tuned_bert_forward.5} parent=11 // pred_check_branch
          %459 = sbr.rel (%p457) target = $region56
        $region55: #{fine_tuned_bert_forward.5} parent=11 // pred_region
          _
        $region56: #{fine_tuned_bert_forward.5} parent=11 // pred_fallthru
          _
        // Predicated region
        $region57: #{fine_tuned_bert_forward.5} parent=11 // pred_check
          %p460 = pneg %p328
        $region58: #{fine_tuned_bert_forward.5} parent=11 // pred_check_branch
          %462 = sbr.rel (%p460) target = $region60
        $region59: #{fine_tuned_bert_forward.5} parent=11 // pred_region
          _
        $region60: #{fine_tuned_bert_forward.5} parent=11 // pred_fallthru
          _
      $region12: #{fine_tuned_bert_forward.5} parent=5 // pred_fallthru
        _
      %p463 = scmp.lt.s32.totalorder %s24, 2
      // Predicated region
      $region61: #{fine_tuned_bert_forward.5} parent=5 // pred_check
        %p464 = pneg %p463
      $region62: #{fine_tuned_bert_forward.5} parent=5 // pred_check_branch
        %466 = sbr.rel (%p464) target = $region64
      $region63: #{fine_tuned_bert_forward.5} parent=5 // pred_region
        // Predicated region
        $region65: #{fine_tuned_bert_forward.5} parent=63 // pred_check
          %p467 = pneg %p44
        $region66: #{fine_tuned_bert_forward.5} parent=63 // pred_check_branch
          %469 = sbr.rel (%p467) target = $region68
        $region67: #{fine_tuned_bert_forward.5} parent=63 // pred_region
          %p470 = scmp.lt.s32.totalorder %s24, 1
          %s471 = scalar_select %p470, %s24, 1
          %s472 = smul.addr %s471, 8
          %s473 = scalar_lea.vmem %s0, %s472
        $region68: #{fine_tuned_bert_forward.5} parent=63 // pred_fallthru
          _
        // Predicated region
        $region69: #{fine_tuned_bert_forward.5} parent=63 // pred_check
          %p474 = pneg %p70
        $region70: #{fine_tuned_bert_forward.5} parent=63 // pred_check_branch
          %476 = sbr.rel (%p474) target = $region72
        $region71: #{fine_tuned_bert_forward.5} parent=63 // pred_region
          %p477 = scmp.lt.s32.totalorder %s24, 1
          %s478 = scalar_select %p477, %s24, 1
          %s479 = scalar_lea.vmem %s1, %s478
        $region72: #{fine_tuned_bert_forward.5} parent=63 // pred_fallthru
          _
      $region64: #{fine_tuned_bert_forward.5} parent=5 // pred_fallthru
        _
      %p480 = scmp.le.s32.totalorder 1, %s24
      %p481 = scmp.lt.s32.totalorder %s24, 3
      %p482 = pnand %p480, %p481
      %p483 = pneg %p482
      // Predicated region
      $region73: #{fine_tuned_bert_forward.5} parent=5 // pred_check
        _
      $region74: #{fine_tuned_bert_forward.5} parent=5 // pred_check_branch
        %485 = sbr.rel (%p482) target = $region76
      $region75: #{fine_tuned_bert_forward.5} parent=5 // pred_region
        %s486 = ssub.s32 %s24, 1
        // Predicated region
        $region77: #{fine_tuned_bert_forward.5} parent=75 // pred_check
          %p487 = pneg %p97
        $region78: #{fine_tuned_bert_forward.5} parent=75 // pred_check_branch
          %489 = sbr.rel (%p487) target = $region80
        $region79: #{fine_tuned_bert_forward.5} parent=75 // pred_region
          %491 = dma.done [#allocation3], 256
        $region80: #{fine_tuned_bert_forward.5} parent=75 // pred_fallthru
          _
        // Predicated region
        $region81: #{fine_tuned_bert_forward.5} parent=75 // pred_check
          %p492 = pneg %p118
        $region82: #{fine_tuned_bert_forward.5} parent=75 // pred_check_branch
          %494 = sbr.rel (%p492) target = $region84
        $region83: #{fine_tuned_bert_forward.5} parent=75 // pred_region
          %496 = dma.done [#allocation5], 16
        $region84: #{fine_tuned_bert_forward.5} parent=75 // pred_fallthru
          _
        // Predicated region
        $region85: #{fine_tuned_bert_forward.5} parent=75 // pred_check
          %p497 = pneg %p139
        $region86: #{fine_tuned_bert_forward.5} parent=75 // pred_check_branch
          %499 = sbr.rel (%p497) target = $region88
        $region87: #{fine_tuned_bert_forward.5} parent=75 // pred_region
          %501 = dma.done [#allocation5], 256
        $region88: #{fine_tuned_bert_forward.5} parent=75 // pred_fallthru
          _
        // Predicated region
        $region89: #{fine_tuned_bert_forward.5} parent=75 // pred_check
          %p502 = pneg %p160
        $region90: #{fine_tuned_bert_forward.5} parent=75 // pred_check_branch
          %504 = sbr.rel (%p502) target = $region92
        $region91: #{fine_tuned_bert_forward.5} parent=75 // pred_region
          %506 = dma.done [#allocation8], 16
        $region92: #{fine_tuned_bert_forward.5} parent=75 // pred_fallthru
          _
        // Predicated region
        $region93: #{fine_tuned_bert_forward.5} parent=75 // pred_check
          %p507 = pneg %p244
        $region94: #{fine_tuned_bert_forward.5} parent=75 // pred_check_branch
          %509 = sbr.rel (%p507) target = $region96
        $region95: #{fine_tuned_bert_forward.5} parent=75 // pred_region
          %511 = dma.done [#allocation8], 16
        $region96: #{fine_tuned_bert_forward.5} parent=75 // pred_fallthru
          _
        // Predicated region
        $region97: #{fine_tuned_bert_forward.5} parent=75 // pred_check
          %p512 = pneg %p286
        $region98: #{fine_tuned_bert_forward.5} parent=75 // pred_check_branch
          %514 = sbr.rel (%p512) target = $region100
        $region99: #{fine_tuned_bert_forward.5} parent=75 // pred_region
          %516 = dma.done [#allocation11], 16
        $region100: #{fine_tuned_bert_forward.5} parent=75 // pred_fallthru
          _
        %p517 = scmp.lt.s32.totalorder %s29, 1
        %s518 = scalar_select %p517, %s29, 1
        %s519 = smul.addr %s518, 8
        %s520 = scalar_lea.vmem %s0, %s519
        %p521 = pneg %p50
        %p522 = pneg %p47
        %p523 = scmp.lt.s32.totalorder %s29, 1
        %s524 = scalar_select %p523, %s29, 1
        %s525 = scalar_lea.vmem %s1, %s524
        %p526 = pneg %p76
        %p527 = pneg %p73
        %p528 = pneg %p97
        %p529 = pneg %p94
        %p530 = pneg %p118
        %p531 = pneg %p115
        %p532 = pneg %p139
        %p533 = pneg %p136
        %p534 = pneg %p160
        %p535 = pneg %p157
        %p536 = pneg %p181
        %p537 = pneg %p178
        %p538 = pneg %p202
        %p539 = pneg %p199
        %p540 = pneg %p223
        %p541 = pneg %p220
        %p542 = pneg %p244
        %p543 = pneg %p241
        %p544 = pneg %p265
        %p545 = pneg %p262
        %p546 = pneg %p286
        %p547 = pneg %p283
        %p548 = pneg %p307
        %p549 = pneg %p304
        %p550 = pneg %p328
        %p551 = pneg %p325
        %p552 = pneg %p354
        %p553 = pneg %p351
        %p554 = scmp.lt.s32.totalorder %s29, 1
        %s555 = scalar_select %p554, %s29, 1
        %s556 = smul.addr %s555, 8
        %s557 = scalar_lea.vmem %s14, %s556
        %p558 = scmp.lt.s32.totalorder %s29, 1
        %s559 = scalar_select %p558, %s29, 1
        %s560 = smul.addr %s559, 8
        %s561 = scalar_lea.vmem %s0, %s560
        %p562 = scmp.lt.s32.totalorder %s29, 1
        %s563 = scalar_select %p562, %s29, 1
        %s564 = scalar_lea.vmem %s1, %s563
        %p565 = scmp.lt.s32.totalorder %s29, 1
        %s566 = scalar_select %p565, %s29, 1
        %s567 = smul.addr %s566, 8
        %s568 = scalar_lea.vmem %s14, %s567
        %v570 = vld [vmem:[%s561] sm:$0xff]
        %v571 = vpack.c.bf16 %v570, %v570
        %v572 = vld [vmem:[#allocation2] sm:$0xf]
        %v573 = vld [vmem:[#allocation2 + $0x4] sm:$0xf]
        %v574 = vld [vmem:[#allocation2 + $0x8] sm:$0xf]
        %v575 = vld [vmem:[#allocation2 + $0xc] sm:$0xf]
        %v576 = vld [vmem:[#allocation4] sm:$0x1]
        %v578 = vperm.slane %v576, 0
        %v584 = vunpack.c.l.b16 %v572
        %v585 = vunpack.c.l.b16 %v573
        %v586 = vunpack.c.l.b16 %v574
        %v587 = vunpack.c.l.b16 %v575
        %v588 = vpack.c.b16 %v585, %v584
        %v589 = vpack.c.b16 %v587, %v586
        %vm592 = vcmask 261120
        %v594 = vsel %vm592, %v571, 0
        %596 = vmatpush.bf16.msra.mxu0 0
        %597 = vmatpush.bf16.msra.mxu0 0
        %598 = vmatpush.bf16.msra.mxu0 0
        %599 = vmatpush.bf16.msra.mxu0 0
        %600 = vmatpush.bf16.msra.mxu0 0
        %601 = vmatpush.bf16.msra.mxu0 0
        %602 = vmatpush.bf16.msra.mxu0 %v589
        %603 = vmatpush.bf16.msra.mxu0 %v588
        %604 = vmatmul.bf16.gmra.mxu0 %v594
        %v605 = vpop.f32.mrf.mxu0
        %v606 = vadd.f32 %v578, %v605
        %v607 = vpop.f32.mrf.mxu0
        %608 = vdwg.mxu0
        %v609 = vld [vmem:[%s564] sm:$0x1]
        %v610 = vsub.f32 1.0, %v609
        %v611 = vmul.f32 %v610, -1e+09
        %v612 = vpack.c.bf16 %v606, %v606
        %614 = vrot.lane.b32.xlu0 %v612, 96
        %v615 = vpop.permute.xlu0 %614
        %vm616 = vcmask 64512
        %v618 = vsel %vm616, %v612, 0
        %v621 = vsel %vm616, %v615, 0
        %623 = vmatpush.bf16.xpose.msra.mxu0 0
        %624 = vmatpush.bf16.xpose.msra.mxu0 0
        %625 = vmatpush.bf16.xpose.msra.mxu0 0
        %626 = vmatpush.bf16.xpose.msra.mxu0 0
        %627 = vmatpush.bf16.xpose.msra.mxu0 0
        %628 = vmatpush.bf16.xpose.msra.mxu0 0
        %629 = vmatpush.bf16.xpose.msra.mxu0 0
        %630 = vmatpush.bf16.xpose.msra.mxu0 %v621
        %631 = vmatmul.bf16.gmra.mxu0 %v618
        %v632 = vpop.f32.mrf.mxu0
        %v633 = vadd.f32 0.0, %v632
        %v634 = vpop.f32.mrf.mxu0
        %635 = vdwg.mxu0
        %v636 = vmul.f32 %v633, 0.35355338
        %v638 = vperm.slane %v611, 0
        %v640 = vadd.f32 %v636, %v638
        %v641 = vsel %vm616, %v640, -inf
        %642 = vmax.xlane.f32.xlu0 %v641
        %v643 = vpop.xlane.xlu0 %642
        %v644 = vsub.f32 %v640, %v643
        %v645 = vmul.f32 %v644, 1.442695
        %v646 = vpow.pop %v645
        %v647 = vsel %vm616, %v646, 0.0
        %648 = vadd.xlane.f32.xlu0 %v647
        %v649 = vpop.xlane.xlu0 %648
        %v650 = vrcp.pop %v649
        %v651 = vmul.f32 %v646, %v650
        %v652 = vpack.c.bf16 %v651, %v651
        %653 = vrot.lane.b32.xlu0 %v612, 64
        %v654 = vpop.permute.xlu0 %653
        %v656 = vsel %vm616, %v652, 0
        %vm658 = vcmask 1043456
        %v660 = vsel %vm658, %v654, 0
        %662 = vmatpush.bf16.msra.mxu0 0
        %663 = vmatpush.bf16.msra.mxu0 0
        %664 = vmatpush.bf16.msra.mxu0 0
        %665 = vmatpush.bf16.msra.mxu0 0
        %666 = vmatpush.bf16.msra.mxu0 0
        %667 = vmatpush.bf16.msra.mxu0 0
        %668 = vmatpush.bf16.msra.mxu0 0
        %669 = vmatpush.bf16.msra.mxu0 %v660
        %670 = vmatmul.bf16.gmra.mxu0 %v656
        %v671 = vpop.f32.mrf.mxu0
        %v672 = vadd.f32 0.0, %v671
        %v673 = vpop.f32.mrf.mxu0
        %674 = vdwg.mxu0
        %675 = vrot.lane.b32.xlu0 %v612, 120
        %v676 = vpop.permute.xlu0 %675
        %677 = vrot.lane.b32.xlu0 %v612, 88
        %v678 = vpop.permute.xlu0 %677
        %v680 = vsel %vm616, %v676, 0
        %v683 = vsel %vm616, %v678, 0
        %685 = vmatpush.bf16.xpose.msra.mxu0 0
        %686 = vmatpush.bf16.xpose.msra.mxu0 0
        %687 = vmatpush.bf16.xpose.msra.mxu0 0
        %688 = vmatpush.bf16.xpose.msra.mxu0 0
        %689 = vmatpush.bf16.xpose.msra.mxu0 0
        %690 = vmatpush.bf16.xpose.msra.mxu0 0
        %691 = vmatpush.bf16.xpose.msra.mxu0 0
        %692 = vmatpush.bf16.xpose.msra.mxu0 %v683
        %693 = vmatmul.bf16.gmra.mxu0 %v680
        %v694 = vpop.f32.mrf.mxu0
        %v695 = vadd.f32 0.0, %v694
        %v696 = vpop.f32.mrf.mxu0
        %697 = vdwg.mxu0
        %v698 = vmul.f32 %v695, 0.35355338
        %v699 = vadd.f32 %v698, %v638
        %v700 = vsel %vm616, %v699, -inf
        %701 = vmax.xlane.f32.xlu0 %v700
        %v702 = vpop.xlane.xlu0 %701
        %v703 = vsub.f32 %v699, %v702
        %v704 = vmul.f32 %v703, 1.442695
        %v705 = vpow.pop %v704
        %v706 = vsel %vm616, %v705, 0.0
        %707 = vadd.xlane.f32.xlu0 %v706
        %v708 = vpop.xlane.xlu0 %707
        %v709 = vrcp.pop %v708
        %v710 = vmul.f32 %v705, %v709
        %v711 = vpack.c.bf16 %v710, %v710
        %712 = vrot.lane.b32.xlu0 %v612, 56
        %v713 = vpop.permute.xlu0 %712
        %v715 = vsel %vm616, %v711, 0
        %v718 = vsel %vm658, %v713, 0
        %720 = vmatpush.bf16.msra.mxu0 0
        %721 = vmatpush.bf16.msra.mxu0 0
        %722 = vmatpush.bf16.msra.mxu0 0
        %723 = vmatpush.bf16.msra.mxu0 0
        %724 = vmatpush.bf16.msra.mxu0 0
        %725 = vmatpush.bf16.msra.mxu0 0
        %726 = vmatpush.bf16.msra.mxu0 0
        %727 = vmatpush.bf16.msra.mxu0 %v718
        %728 = vmatmul.bf16.gmra.mxu0 %v715
        %v729 = vpop.f32.mrf.mxu0
        %v730 = vadd.f32 0.0, %v729
        %v731 = vpop.f32.mrf.mxu0
        %732 = vdwg.mxu0
        %733 = vrot.lane.b32.xlu0 %v612, 112
        %v734 = vpop.permute.xlu0 %733
        %735 = vrot.lane.b32.xlu0 %v612, 80
        %v736 = vpop.permute.xlu0 %735
        %v738 = vsel %vm616, %v734, 0
        %v741 = vsel %vm616, %v736, 0
        %743 = vmatpush.bf16.xpose.msra.mxu0 0
        %744 = vmatpush.bf16.xpose.msra.mxu0 0
        %745 = vmatpush.bf16.xpose.msra.mxu0 0
        %746 = vmatpush.bf16.xpose.msra.mxu0 0
        %747 = vmatpush.bf16.xpose.msra.mxu0 0
        %748 = vmatpush.bf16.xpose.msra.mxu0 0
        %749 = vmatpush.bf16.xpose.msra.mxu0 0
        %750 = vmatpush.bf16.xpose.msra.mxu0 %v741
        %751 = vmatmul.bf16.gmra.mxu0 %v738
        %v752 = vpop.f32.mrf.mxu0
        %v753 = vadd.f32 0.0, %v752
        %v754 = vpop.f32.mrf.mxu0
        %755 = vdwg.mxu0
        %v756 = vmul.f32 %v753, 0.35355338
        %v757 = vadd.f32 %v756, %v638
        %v758 = vsel %vm616, %v757, -inf
        %759 = vmax.xlane.f32.xlu0 %v758
        %v760 = vpop.xlane.xlu0 %759
        %v761 = vsub.f32 %v757, %v760
        %v762 = vmul.f32 %v761, 1.442695
        %v763 = vpow.pop %v762
        %v764 = vsel %vm616, %v763, 0.0
        %765 = vadd.xlane.f32.xlu0 %v764
        %v766 = vpop.xlane.xlu0 %765
        %v767 = vrcp.pop %v766
        %v768 = vmul.f32 %v763, %v767
        %v769 = vpack.c.bf16 %v768, %v768
        %770 = vrot.lane.b32.xlu0 %v612, 48
        %v771 = vpop.permute.xlu0 %770
        %v773 = vsel %vm616, %v769, 0
        %v776 = vsel %vm658, %v771, 0
        %778 = vmatpush.bf16.msra.mxu0 0
        %779 = vmatpush.bf16.msra.mxu0 0
        %780 = vmatpush.bf16.msra.mxu0 0
        %781 = vmatpush.bf16.msra.mxu0 0
        %782 = vmatpush.bf16.msra.mxu0 0
        %783 = vmatpush.bf16.msra.mxu0 0
        %784 = vmatpush.bf16.msra.mxu0 0
        %785 = vmatpush.bf16.msra.mxu0 %v776
        %786 = vmatmul.bf16.gmra.mxu0 %v773
        %v787 = vpop.f32.mrf.mxu0
        %v788 = vadd.f32 0.0, %v787
        %v789 = vpop.f32.mrf.mxu0
        %790 = vdwg.mxu0
        %791 = vrot.lane.b32.xlu0 %v612, 104
        %v792 = vpop.permute.xlu0 %791
        %793 = vrot.lane.b32.xlu0 %v612, 72
        %v794 = vpop.permute.xlu0 %793
        %v796 = vsel %vm616, %v792, 0
        %v799 = vsel %vm616, %v794, 0
        %801 = vmatpush.bf16.xpose.msra.mxu0 0
        %802 = vmatpush.bf16.xpose.msra.mxu0 0
        %803 = vmatpush.bf16.xpose.msra.mxu0 0
        %804 = vmatpush.bf16.xpose.msra.mxu0 0
        %805 = vmatpush.bf16.xpose.msra.mxu0 0
        %806 = vmatpush.bf16.xpose.msra.mxu0 0
        %807 = vmatpush.bf16.xpose.msra.mxu0 0
        %808 = vmatpush.bf16.xpose.msra.mxu0 %v799
        %809 = vmatmul.bf16.gmra.mxu0 %v796
        %v810 = vpop.f32.mrf.mxu0
        %v811 = vadd.f32 0.0, %v810
        %v812 = vpop.f32.mrf.mxu0
        %813 = vdwg.mxu0
        %v814 = vmul.f32 %v811, 0.35355338
        %v815 = vadd.f32 %v814, %v638
        %v816 = vsel %vm616, %v815, -inf
        %817 = vmax.xlane.f32.xlu0 %v816
        %v818 = vpop.xlane.xlu0 %817
        %v819 = vsub.f32 %v815, %v818
        %v820 = vmul.f32 %v819, 1.442695
        %v821 = vpow.pop %v820
        %v822 = vsel %vm616, %v821, 0.0
        %823 = vadd.xlane.f32.xlu0 %v822
        %v824 = vpop.xlane.xlu0 %823
        %v825 = vrcp.pop %v824
        %v826 = vmul.f32 %v821, %v825
        %v827 = vpack.c.bf16 %v826, %v826
        %828 = vrot.lane.b32.xlu0 %v612, 40
        %v829 = vpop.permute.xlu0 %828
        %v831 = vsel %vm616, %v827, 0
        %v834 = vsel %vm658, %v829, 0
        %836 = vmatpush.bf16.msra.mxu0 0
        %837 = vmatpush.bf16.msra.mxu0 0
        %838 = vmatpush.bf16.msra.mxu0 0
        %839 = vmatpush.bf16.msra.mxu0 0
        %840 = vmatpush.bf16.msra.mxu0 0
        %841 = vmatpush.bf16.msra.mxu0 0
        %842 = vmatpush.bf16.msra.mxu0 0
        %843 = vmatpush.bf16.msra.mxu0 %v834
        %844 = vmatmul.bf16.gmra.mxu0 %v831
        %v845 = vpop.f32.mrf.mxu0
        %v846 = vadd.f32 0.0, %v845
        %v847 = vpop.f32.mrf.mxu0
        %848 = vdwg.mxu0
        %850 = vrot.lane.b32.xlu0 %v730, 8
        %v851 = vpop.permute.xlu0 %850
        %854 = vrot.lane.b32.xlu0 %v788, 16
        %v855 = vpop.permute.xlu0 %854
        %858 = vrot.lane.b32.xlu0 %v846, 24
        %v859 = vpop.permute.xlu0 %858
        %v861 = vsel %vm616, %v672, %v851
        %vm862 = vcmask 130048
        %v863 = vsel %vm862, %v861, %v855
        %vm864 = vcmask 195584
        %v865 = vsel %vm864, %v863, %v859
        %v866 = vpack.c.bf16 %v865, %v865
        %v867 = vld [vmem:[#allocation6] sm:$0xf]
        %v868 = vld [vmem:[#allocation6 + $0x4] sm:$0xf]
        %v869 = vld [vmem:[#allocation6 + $0x8] sm:$0xf]
        %v870 = vld [vmem:[#allocation6 + $0xc] sm:$0xf]
        %v871 = vld [vmem:[#allocation7] sm:$0x1]
        %v873 = vperm.slane %v871, 0
        %v879 = vunpack.c.l.b16 %v867
        %v880 = vunpack.c.l.b16 %v868
        %v881 = vunpack.c.l.b16 %v869
        %v882 = vunpack.c.l.b16 %v870
        %v883 = vpack.c.b16 %v880, %v879
        %v884 = vpack.c.b16 %v882, %v881
        %v888 = vsel %vm592, %v866, 0
        %890 = vmatpush.bf16.msra.mxu0 0
        %891 = vmatpush.bf16.msra.mxu0 0
        %892 = vmatpush.bf16.msra.mxu0 0
        %893 = vmatpush.bf16.msra.mxu0 0
        %894 = vmatpush.bf16.msra.mxu0 0
        %895 = vmatpush.bf16.msra.mxu0 0
        %896 = vmatpush.bf16.msra.mxu0 %v884
        %897 = vmatpush.bf16.msra.mxu0 %v883
        %898 = vmatmul.bf16.gmra.mxu0 %v888
        %v899 = vpop.f32.mrf.mxu0
        %v900 = vadd.f32 %v873, %v899
        %v901 = vpop.f32.mrf.mxu0
        %902 = vdwg.mxu0
        %v903 = vadd.f32 %v570, %v900
        %v904 = vld [vmem:[%s6] sm:$0x1]
        %v905 = vld [vmem:[%s7] sm:$0x1]
        %v906 = vsel %vm592, %v903, 0.0
        %907 = vadd.xlane.f32.xlu0 %v906
        %v908 = vpop.xlane.xlu0 %907
        %v909 = vrcp.pop 32.0
        %v910 = vmul.f32 32.0, %v909
        %v911 = vsub.f32 1.0, %v910
        %v912 = vmul.f32 %v909, %v911
        %v913 = vadd.f32 %v909, %v912
        %vm914 = vweird.f32 %v909
        %v915 = vsel %vm914, %v909, %v913
        %v916 = vmul.f32 %v908, %v915
        %v917 = vsub.f32 %v903, %v916
        %v918 = vmul.f32 %v917, %v917
        %v919 = vsel %vm592, %v918, 0.0
        %920 = vadd.xlane.f32.xlu0 %v919
        %v921 = vpop.xlane.xlu0 %920
        %v922 = vmul.f32 %v921, %v915
        %v923 = vadd.f32 %v922, 1e-12
        %v924 = vrsqrt.pop %v923
        %v925 = vmul.f32 %v924, %v923
        %v926 = vmul.f32 %v925, %v924
        %v927 = vmul.f32 0.5, %v926
        %v928 = vsub.f32 1.5, %v927
        %v929 = vmul.f32 %v924, %v928
        %vm930 = vweird.f32 %v923
        %vm931 = vweird.f32 %v924
        %vm932 = vmor %vm930, %vm931
        %v933 = vsel %vm932, %v924, %v929
        %v934 = vmul.f32 %v917, %v933
        %v936 = vperm.slane %v904, 0
        %v938 = vmul.f32 %v934, %v936
        %v940 = vperm.slane %v905, 0
        %v942 = vadd.f32 %v938, %v940
        %v943 = vpack.c.bf16 %v942, %v942
        %v944 = vld [vmem:[%s8] sm:$0xf]
        %v945 = vld [vmem:[%s8 + $0x4] sm:$0xf]
        %v946 = vld [vmem:[%s8 + $0x8] sm:$0xf]
        %v947 = vld [vmem:[%s8 + $0xc] sm:$0xf]
        %v948 = vld [vmem:[#allocation9] sm:$0x1]
        %v950 = vperm.slane %v948, 0
        %v956 = vunpack.c.l.b16 %v944
        %v957 = vunpack.c.l.b16 %v945
        %v958 = vunpack.c.l.b16 %v946
        %v959 = vunpack.c.l.b16 %v947
        %v960 = vpack.c.b16 %v957, %v956
        %v961 = vpack.c.b16 %v959, %v958
        %v965 = vsel %vm592, %v943, 0
        %967 = vmatpush.bf16.msra.mxu0 0
        %968 = vmatpush.bf16.msra.mxu0 0
        %969 = vmatpush.bf16.msra.mxu0 0
        %970 = vmatpush.bf16.msra.mxu0 0
        %971 = vmatpush.bf16.msra.mxu0 0
        %972 = vmatpush.bf16.msra.mxu0 0
        %973 = vmatpush.bf16.msra.mxu0 %v961
        %974 = vmatpush.bf16.msra.mxu0 %v960
        %975 = vmatmul.bf16.gmra.mxu0 %v965
        %v976 = vpop.f32.mrf.mxu0
        %v977 = vadd.f32 %v950, %v976
        %v978 = vpop.f32.mrf.mxu0
        %979 = vdwg.mxu0
        %v980 = vmul.f32 %v977, %v977
        %v981 = vmul.f32 %v977, %v980
        %v982 = vmul.f32 %v981, 0.044715
        %v983 = vadd.f32 %v977, %v982
        %v984 = vmul.f32 %v983, 0.7978846
        %v985 = vtanh.pop %v984
        %v986 = vadd.f32 %v985, 1.0
        %v987 = vmul.f32 %v986, 0.5
        %v988 = vmul.f32 %v977, %v987
        %v989 = vpack.c.bf16 %v988, %v988
        %v990 = vld [vmem:[%s10] sm:$0xf]
        %v991 = vld [vmem:[%s10 + $0x4] sm:$0xf]
        %v992 = vld [vmem:[%s10 + $0x8] sm:$0xf]
        %v993 = vld [vmem:[%s10 + $0xc] sm:$0xf]
        %v994 = vld [vmem:[%s10 + $0x10] sm:$0xf]
        %v995 = vld [vmem:[%s10 + $0x14] sm:$0xf]
        %v996 = vld [vmem:[%s10 + $0x18] sm:$0xf]
        %v997 = vld [vmem:[%s10 + $0x1c] sm:$0xf]
        %v998 = vld [vmem:[#allocation10] sm:$0x1]
        %v1000 = vperm.slane %v998, 0
        %v1010 = vunpack.c.l.b16 %v990
        %v1011 = vunpack.c.l.b16 %v991
        %v1012 = vunpack.c.l.b16 %v992
        %v1013 = vunpack.c.l.b16 %v993
        %v1014 = vunpack.c.l.b16 %v994
        %v1015 = vunpack.c.l.b16 %v995
        %v1016 = vunpack.c.l.b16 %v996
        %v1017 = vunpack.c.l.b16 %v997
        %v1018 = vpack.c.b16 %v1011, %v1010
        %v1019 = vpack.c.b16 %v1013, %v1012
        %v1020 = vpack.c.b16 %v1015, %v1014
        %v1021 = vpack.c.b16 %v1017, %v1016
        %vm1026 = vcmask 523264
        %v1028 = vsel %vm1026, %v989, 0
        %1030 = vmatpush.bf16.msra.mxu0 0
        %1031 = vmatpush.bf16.msra.mxu0 0
        %1032 = vmatpush.bf16.msra.mxu0 0
        %1033 = vmatpush.bf16.msra.mxu0 0
        %1034 = vmatpush.bf16.msra.mxu0 %v1021
        %1035 = vmatpush.bf16.msra.mxu0 %v1020
        %1036 = vmatpush.bf16.msra.mxu0 %v1019
        %1037 = vmatpush.bf16.msra.mxu0 %v1018
        %1038 = vmatmul.bf16.gmra.mxu0 %v1028
        %v1039 = vpop.f32.mrf.mxu0
        %v1040 = vadd.f32 %v1000, %v1039
        %v1041 = vpop.f32.mrf.mxu0
        %1042 = vdwg.mxu0
        %v1043 = vadd.f32 %v942, %v1040
        %v1044 = vld [vmem:[%s12] sm:$0x1]
        %v1045 = vld [vmem:[%s13] sm:$0x1]
        %v1046 = vsel %vm592, %v1043, 0.0
        %1047 = vadd.xlane.f32.xlu0 %v1046
        %v1048 = vpop.xlane.xlu0 %1047
        %v1049 = vmul.f32 %v1048, %v915
        %v1050 = vsub.f32 %v1043, %v1049
        %v1051 = vmul.f32 %v1050, %v1050
        %v1052 = vsel %vm592, %v1051, 0.0
        %1053 = vadd.xlane.f32.xlu0 %v1052
        %v1054 = vpop.xlane.xlu0 %1053
        %v1055 = vmul.f32 %v1054, %v915
        %v1056 = vadd.f32 %v1055, 1e-12
        %v1057 = vrsqrt.pop %v1056
        %v1058 = vmul.f32 %v1057, %v1056
        %v1059 = vmul.f32 %v1058, %v1057
        %v1060 = vmul.f32 0.5, %v1059
        %v1061 = vsub.f32 1.5, %v1060
        %v1062 = vmul.f32 %v1057, %v1061
        %vm1063 = vweird.f32 %v1056
        %vm1064 = vweird.f32 %v1057
        %vm1065 = vmor %vm1063, %vm1064
        %v1066 = vsel %vm1065, %v1057, %v1062
        %v1067 = vmul.f32 %v1050, %v1066
        %v1069 = vperm.slane %v1044, 0
        %v1071 = vmul.f32 %v1067, %v1069
        %v1073 = vperm.slane %v1045, 0
        %v1075 = vadd.f32 %v1071, %v1073
        %1076 = vst.msk [vmem:[%s568] sm:$0xff] %vm592, %v1075
        %p1077 = scmp.lt.s32.totalorder %s29, 1
        %s1078 = scalar_select %p1077, %s29, 1
        %s1079 = smul.addr %s1078, 8
        %s1080 = scalar_lea.vmem %s14, %s1079
        // Predicated region
        $region101: #{fine_tuned_bert_forward.5} parent=75 // pred_check
          %p1081 = pneg %p351
        $region102: #{fine_tuned_bert_forward.5} parent=75 // pred_check_branch
          %1083 = sbr.rel (%p1081) target = $region104
        $region103: #{fine_tuned_bert_forward.5} parent=75 // pred_region
          _
        $region104: #{fine_tuned_bert_forward.5} parent=75 // pred_fallthru
          _
      $region76: #{fine_tuned_bert_forward.5} parent=5 // pred_fallthru
        _
      %p1084 = scmp.le.s32.totalorder 2, %s24
      // Predicated region
      $region105: #{fine_tuned_bert_forward.5} parent=5 // pred_check
        %p1085 = pneg %p1084
      $region106: #{fine_tuned_bert_forward.5} parent=5 // pred_check_branch
        %1087 = sbr.rel (%p1085) target = $region108
      $region107: #{fine_tuned_bert_forward.5} parent=5 // pred_region
        %s1088 = ssub.s32 %s24, 2
        // Predicated region
        $region109: #{fine_tuned_bert_forward.5} parent=107 // pred_check
          %p1089 = pneg %p357
        $region110: #{fine_tuned_bert_forward.5} parent=107 // pred_check_branch
          %1091 = sbr.rel (%p1089) target = $region112
        $region111: #{fine_tuned_bert_forward.5} parent=107 // pred_region
          %p1092 = scmp.lt.s32.totalorder %s30, 1
          %s1093 = scalar_select %p1092, %s30, 1
          %s1094 = smul.addr %s1093, 8
          %s1095 = scalar_lea.vmem %s14, %s1094
        $region112: #{fine_tuned_bert_forward.5} parent=107 // pred_fallthru
          _
      $region108: #{fine_tuned_bert_forward.5} parent=5 // pred_fallthru
        _
    $region6: #{fine_tuned_bert_forward.5} parent=1 // loop_footer
      %s28 = sadd.s32 1, %s24
    $region7: #{fine_tuned_bert_forward.5} parent=1 // loop_footer_branch
      %23 = sbr.rel target = $region3
    $region8: #{fine_tuned_bert_forward.5} parent=1 // loop_exit
      _
    %1096 = vsyncpa [#allocation3], 1
    %s1097 = scalar_lea.sflag [#allocation3], 1
    %1098 = vsyncpa %s1097, 1
    %1099 = vsyncpa [#allocation5], 1
    %1100 = vsyncpa [#allocation8], 1
    %1101 = vsyncpa [#allocation11], 1

// kernel: fine_tuned_bert_forward.6
$region0: #{fine_tuned_bert_forward.6}
  #allocation0 [shape = 'u32[]', space=smem, size = 0x4, offset = 0x4, fixed_abs, tag = 'smem constant byte address 0x4 - core index']
  #allocation1 [shape = 'u32[72,128]{1,0:T(1,128)}', space=vmem, size = 0x9000, scoped, tag = 'internal scratch']
  %s0 = inlined_call_operand.vmem [shape: f32[2,8,32], index: 0, kind: input, shape index: {}]
  %s1 = inlined_call_operand.vmem [shape: f32[2,1,8], index: 1, kind: input, shape index: {}]
  %s2 = inlined_call_operand.hbm [shape: bf16[32,96], index: 2, kind: input, shape index: {}]
  %s3 = inlined_call_operand.hbm [shape: f32[1,96], index: 3, kind: input, shape index: {}]
  %s4 = inlined_call_operand.hbm [shape: bf16[32,32], index: 4, kind: input, shape index: {}]
  %s5 = inlined_call_operand.hbm [shape: f32[1,32], index: 5, kind: input, shape index: {}]
  %s6 = inlined_call_operand.vmem [shape: f32[1,32], index: 6, kind: input, shape index: {}, may-alias: {6,12}]
  %s7 = inlined_call_operand.vmem [shape: f32[1,32], index: 7, kind: input, shape index: {}, may-alias: {7,13}]
  %s8 = inlined_call_operand.hbm [shape: bf16[32,64], index: 8, kind: input, shape index: {}]
  %s9 = inlined_call_operand.hbm [shape: f32[1,64], index: 9, kind: input, shape index: {}]
  %s10 = inlined_call_operand.vmem [shape: bf16[64,32], index: 10, kind: input, shape index: {}]
  %s11 = inlined_call_operand.hbm [shape: f32[1,32], index: 11, kind: input, shape index: {}]
  %s12 = inlined_call_operand.vmem [shape: f32[1,32], index: 12, kind: input, shape index: {}, may-alias: {6,12}]
  %s13 = inlined_call_operand.vmem [shape: f32[1,32], index: 13, kind: input, shape index: {}, may-alias: {7,13}]
  %s14 = inlined_call_operand.vmem [shape: f32[2,8,32], index: 14, kind: output, shape index: {}]
  %s15 = sld [smem:[#allocation0]]
  $region117: #{fine_tuned_bert_forward.6} parent=0
    _
  %s17 = ssub.s32 1, %s15
  %s18 = scalar_select 0, %s17, %s15
  $region1: #{fine_tuned_bert_forward.6} parent=0
    #allocation2 [shape = 'u8[8192]{0}', space=vmem, size = 0x2000, scoped, tag = 'input window, operand 2, single buffered']
    #allocation3 [shape = 's32[2]{0}', space=sflag, size = 0x8, scoped, tag = 'scoped memory for fine_tuned_bert_forward.6']
    #allocation4 [shape = 'u8[512]{0}', space=vmem, size = 0x400, scoped, tag = 'input window, operand 3, single buffered']
    #allocation5 [shape = 's32[1]{0}', space=sflag, size = 0x4, scoped, tag = 'scoped memory for fine_tuned_bert_forward.6']
    #allocation6 [shape = 'u8[8192]{0}', space=vmem, size = 0x2000, scoped, tag = 'input window, operand 4, single buffered']
    #allocation7 [shape = 'u8[512]{0}', space=vmem, size = 0x400, scoped, tag = 'input window, operand 5, single buffered']
    #allocation8 [shape = 's32[1]{0}', space=sflag, size = 0x4, scoped, tag = 'scoped memory for fine_tuned_bert_forward.6']
    #allocation9 [shape = 'u8[8192]{0}', space=vmem, size = 0x2000, scoped, tag = 'input window, operand 8, single buffered']
    #allocation10 [shape = 'u8[512]{0}', space=vmem, size = 0x400, scoped, tag = 'input window, operand 9, single buffered']
    #allocation11 [shape = 's32[1]{0}', space=sflag, size = 0x4, scoped, tag = 'scoped memory for fine_tuned_bert_forward.6']
    #allocation12 [shape = 'u8[512]{0}', space=vmem, size = 0x400, scoped, tag = 'input window, operand 11, single buffered']
    %19 = vsyncpa [#allocation3], 0
    %20 = vsyncpa [#allocation5], 0
    %21 = vsyncpa [#allocation8], 0
    %22 = vsyncpa [#allocation11], 0
    loop: start=0, step=1, limit=4
    $region2: #{fine_tuned_bert_forward.6} parent=1 // loop_pre_header
      _
    $region3: #{fine_tuned_bert_forward.6} parent=1 // loop_header
      %s24 = sphi 0, %s28
      %p25 = scmp.ge.s32.totalorder %s24, 4
      %s34 = sphi 0, %s36
      %s37 = sphi 0, %s34
      %s38 = sphi 0, %s37
      %s54 = sphi 0, %s38
      %s60 = sphi 0, %s62
      %s63 = sphi 0, %s60
      %s64 = sphi 0, %s63
      %s80 = sphi 0, %s64
      %s84 = sphi 0, %s84
      %s86 = sphi 0, %s84
      %s87 = sphi 0, %s86
      %s101 = sphi 0, %s87
      %s105 = sphi 0, %s105
      %s107 = sphi 0, %s105
      %s108 = sphi 0, %s107
      %s122 = sphi 0, %s108
      %s126 = sphi 0, %s126
      %s128 = sphi 0, %s126
      %s129 = sphi 0, %s128
      %s143 = sphi 0, %s129
      %s147 = sphi 0, %s147
      %s149 = sphi 0, %s147
      %s150 = sphi 0, %s149
      %s164 = sphi 0, %s150
      %s168 = sphi 0, %s168
      %s170 = sphi 0, %s168
      %s171 = sphi 0, %s170
      %s185 = sphi 0, %s171
      %s189 = sphi 0, %s189
      %s191 = sphi 0, %s189
      %s192 = sphi 0, %s191
      %s206 = sphi 0, %s192
      %s210 = sphi 0, %s210
      %s212 = sphi 0, %s210
      %s213 = sphi 0, %s212
      %s227 = sphi 0, %s213
      %s231 = sphi 0, %s231
      %s233 = sphi 0, %s231
      %s234 = sphi 0, %s233
      %s248 = sphi 0, %s234
      %s252 = sphi 0, %s252
      %s254 = sphi 0, %s252
      %s255 = sphi 0, %s254
      %s269 = sphi 0, %s255
      %s273 = sphi 0, %s273
      %s275 = sphi 0, %s273
      %s276 = sphi 0, %s275
      %s290 = sphi 0, %s276
      %s294 = sphi 0, %s294
      %s296 = sphi 0, %s294
      %s297 = sphi 0, %s296
      %s311 = sphi 0, %s297
      %s315 = sphi 0, %s315
      %s317 = sphi 0, %s315
      %s318 = sphi 0, %s317
      %s332 = sphi 0, %s318
      %s338 = sphi 0, %s340
      %s341 = sphi 0, %s338
      %s342 = sphi 0, %s341
      %s358 = sphi 0, %s342
    $region4: #{fine_tuned_bert_forward.6} parent=1 // loop_header_branch
      %27 = sbr.rel (%p25) target = $region8
    $region5: #{fine_tuned_bert_forward.6} parent=1 // loop_body
      %s29 = ssub.s32 %s24, 1
      %s30 = ssub.s32 %s24, 2
      %s31 = sadd.s32 %s24, 1
      %s32 = ssub.s32 %s24, %s31
      %p33 = scmp.eq.s32.totalorder %s32, 0
      %s35 = sadd.s32 %s34, 1
      %s36 = scalar_select %p33, %s34, %s35
      %p39 = pneg %p33
      %p40 = scmp.eq.s32.totalorder %s24, 1
      %p41 = por %p39, %p40
      %p42 = scmp.ne.s32.totalorder %s34, %s37
      %p43 = scmp.eq.s32.totalorder %s24, 0
      %p44 = por %p42, %p43
      %p45 = scmp.ne.s32.totalorder %s34, %s37
      %p46 = scmp.eq.s32.totalorder %s29, 1
      %p47 = por %p45, %p46
      %p48 = scmp.ne.s32.totalorder %s37, %s38
      %p49 = scmp.eq.s32.totalorder %s29, 0
      %p50 = por %p48, %p49
      %p51 = scmp.ne.s32.totalorder %s37, %s38
      %p52 = scmp.eq.s32.totalorder %s30, 1
      %p53 = por %p51, %p52
      %p55 = scmp.ne.s32.totalorder %s38, %s54
      %p56 = scmp.eq.s32.totalorder %s30, 0
      %p57 = por %p55, %p56
      %s58 = ssub.s32 %s24, %s31
      %p59 = scmp.eq.s32.totalorder %s58, 0
      %s61 = sadd.s32 %s60, 1
      %s62 = scalar_select %p59, %s60, %s61
      %p65 = pneg %p59
      %p66 = scmp.eq.s32.totalorder %s24, 1
      %p67 = por %p65, %p66
      %p68 = scmp.ne.s32.totalorder %s60, %s63
      %p69 = scmp.eq.s32.totalorder %s24, 0
      %p70 = por %p68, %p69
      %p71 = scmp.ne.s32.totalorder %s60, %s63
      %p72 = scmp.eq.s32.totalorder %s29, 1
      %p73 = por %p71, %p72
      %p74 = scmp.ne.s32.totalorder %s63, %s64
      %p75 = scmp.eq.s32.totalorder %s29, 0
      %p76 = por %p74, %p75
      %p77 = scmp.ne.s32.totalorder %s63, %s64
      %p78 = scmp.eq.s32.totalorder %s30, 1
      %p79 = por %p77, %p78
      %p81 = scmp.ne.s32.totalorder %s64, %s80
      %p82 = scmp.eq.s32.totalorder %s30, 0
      %p83 = por %p81, %p82
      %s85 = sadd.s32 %s84, 1
      %p88 = scmp.eq.s32.totalorder %s24, 1
      %p89 = scmp.ne.s32.totalorder %s84, %s86
      %p90 = scmp.eq.s32.totalorder %s24, 0
      %p91 = por %p89, %p90
      %p92 = scmp.ne.s32.totalorder %s84, %s86
      %p93 = scmp.eq.s32.totalorder %s29, 1
      %p94 = por %p92, %p93
      %p95 = scmp.ne.s32.totalorder %s86, %s87
      %p96 = scmp.eq.s32.totalorder %s29, 0
      %p97 = por %p95, %p96
      %p98 = scmp.ne.s32.totalorder %s86, %s87
      %p99 = scmp.eq.s32.totalorder %s30, 1
      %p100 = por %p98, %p99
      %p102 = scmp.ne.s32.totalorder %s87, %s101
      %p103 = scmp.eq.s32.totalorder %s30, 0
      %p104 = por %p102, %p103
      %s106 = sadd.s32 %s105, 1
      %p109 = scmp.eq.s32.totalorder %s24, 1
      %p110 = scmp.ne.s32.totalorder %s105, %s107
      %p111 = scmp.eq.s32.totalorder %s24, 0
      %p112 = por %p110, %p111
      %p113 = scmp.ne.s32.totalorder %s105, %s107
      %p114 = scmp.eq.s32.totalorder %s29, 1
      %p115 = por %p113, %p114
      %p116 = scmp.ne.s32.totalorder %s107, %s108
      %p117 = scmp.eq.s32.totalorder %s29, 0
      %p118 = por %p116, %p117
      %p119 = scmp.ne.s32.totalorder %s107, %s108
      %p120 = scmp.eq.s32.totalorder %s30, 1
      %p121 = por %p119, %p120
      %p123 = scmp.ne.s32.totalorder %s108, %s122
      %p124 = scmp.eq.s32.totalorder %s30, 0
      %p125 = por %p123, %p124
      %s127 = sadd.s32 %s126, 1
      %p130 = scmp.eq.s32.totalorder %s24, 1
      %p131 = scmp.ne.s32.totalorder %s126, %s128
      %p132 = scmp.eq.s32.totalorder %s24, 0
      %p133 = por %p131, %p132
      %p134 = scmp.ne.s32.totalorder %s126, %s128
      %p135 = scmp.eq.s32.totalorder %s29, 1
      %p136 = por %p134, %p135
      %p137 = scmp.ne.s32.totalorder %s128, %s129
      %p138 = scmp.eq.s32.totalorder %s29, 0
      %p139 = por %p137, %p138
      %p140 = scmp.ne.s32.totalorder %s128, %s129
      %p141 = scmp.eq.s32.totalorder %s30, 1
      %p142 = por %p140, %p141
      %p144 = scmp.ne.s32.totalorder %s129, %s143
      %p145 = scmp.eq.s32.totalorder %s30, 0
      %p146 = por %p144, %p145
      %s148 = sadd.s32 %s147, 1
      %p151 = scmp.eq.s32.totalorder %s24, 1
      %p152 = scmp.ne.s32.totalorder %s147, %s149
      %p153 = scmp.eq.s32.totalorder %s24, 0
      %p154 = por %p152, %p153
      %p155 = scmp.ne.s32.totalorder %s147, %s149
      %p156 = scmp.eq.s32.totalorder %s29, 1
      %p157 = por %p155, %p156
      %p158 = scmp.ne.s32.totalorder %s149, %s150
      %p159 = scmp.eq.s32.totalorder %s29, 0
      %p160 = por %p158, %p159
      %p161 = scmp.ne.s32.totalorder %s149, %s150
      %p162 = scmp.eq.s32.totalorder %s30, 1
      %p163 = por %p161, %p162
      %p165 = scmp.ne.s32.totalorder %s150, %s164
      %p166 = scmp.eq.s32.totalorder %s30, 0
      %p167 = por %p165, %p166
      %s169 = sadd.s32 %s168, 1
      %p172 = scmp.eq.s32.totalorder %s24, 1
      %p173 = scmp.ne.s32.totalorder %s168, %s170
      %p174 = scmp.eq.s32.totalorder %s24, 0
      %p175 = por %p173, %p174
      %p176 = scmp.ne.s32.totalorder %s168, %s170
      %p177 = scmp.eq.s32.totalorder %s29, 1
      %p178 = por %p176, %p177
      %p179 = scmp.ne.s32.totalorder %s170, %s171
      %p180 = scmp.eq.s32.totalorder %s29, 0
      %p181 = por %p179, %p180
      %p182 = scmp.ne.s32.totalorder %s170, %s171
      %p183 = scmp.eq.s32.totalorder %s30, 1
      %p184 = por %p182, %p183
      %p186 = scmp.ne.s32.totalorder %s171, %s185
      %p187 = scmp.eq.s32.totalorder %s30, 0
      %p188 = por %p186, %p187
      %s190 = sadd.s32 %s189, 1
      %p193 = scmp.eq.s32.totalorder %s24, 1
      %p194 = scmp.ne.s32.totalorder %s189, %s191
      %p195 = scmp.eq.s32.totalorder %s24, 0
      %p196 = por %p194, %p195
      %p197 = scmp.ne.s32.totalorder %s189, %s191
      %p198 = scmp.eq.s32.totalorder %s29, 1
      %p199 = por %p197, %p198
      %p200 = scmp.ne.s32.totalorder %s191, %s192
      %p201 = scmp.eq.s32.totalorder %s29, 0
      %p202 = por %p200, %p201
      %p203 = scmp.ne.s32.totalorder %s191, %s192
      %p204 = scmp.eq.s32.totalorder %s30, 1
      %p205 = por %p203, %p204
      %p207 = scmp.ne.s32.totalorder %s192, %s206
      %p208 = scmp.eq.s32.totalorder %s30, 0
      %p209 = por %p207, %p208
      %s211 = sadd.s32 %s210, 1
      %p214 = scmp.eq.s32.totalorder %s24, 1
      %p215 = scmp.ne.s32.totalorder %s210, %s212
      %p216 = scmp.eq.s32.totalorder %s24, 0
      %p217 = por %p215, %p216
      %p218 = scmp.ne.s32.totalorder %s210, %s212
      %p219 = scmp.eq.s32.totalorder %s29, 1
      %p220 = por %p218, %p219
      %p221 = scmp.ne.s32.totalorder %s212, %s213
      %p222 = scmp.eq.s32.totalorder %s29, 0
      %p223 = por %p221, %p222
      %p224 = scmp.ne.s32.totalorder %s212, %s213
      %p225 = scmp.eq.s32.totalorder %s30, 1
      %p226 = por %p224, %p225
      %p228 = scmp.ne.s32.totalorder %s213, %s227
      %p229 = scmp.eq.s32.totalorder %s30, 0
      %p230 = por %p228, %p229
      %s232 = sadd.s32 %s231, 1
      %p235 = scmp.eq.s32.totalorder %s24, 1
      %p236 = scmp.ne.s32.totalorder %s231, %s233
      %p237 = scmp.eq.s32.totalorder %s24, 0
      %p238 = por %p236, %p237
      %p239 = scmp.ne.s32.totalorder %s231, %s233
      %p240 = scmp.eq.s32.totalorder %s29, 1
      %p241 = por %p239, %p240
      %p242 = scmp.ne.s32.totalorder %s233, %s234
      %p243 = scmp.eq.s32.totalorder %s29, 0
      %p244 = por %p242, %p243
      %p245 = scmp.ne.s32.totalorder %s233, %s234
      %p246 = scmp.eq.s32.totalorder %s30, 1
      %p247 = por %p245, %p246
      %p249 = scmp.ne.s32.totalorder %s234, %s248
      %p250 = scmp.eq.s32.totalorder %s30, 0
      %p251 = por %p249, %p250
      %s253 = sadd.s32 %s252, 1
      %p256 = scmp.eq.s32.totalorder %s24, 1
      %p257 = scmp.ne.s32.totalorder %s252, %s254
      %p258 = scmp.eq.s32.totalorder %s24, 0
      %p259 = por %p257, %p258
      %p260 = scmp.ne.s32.totalorder %s252, %s254
      %p261 = scmp.eq.s32.totalorder %s29, 1
      %p262 = por %p260, %p261
      %p263 = scmp.ne.s32.totalorder %s254, %s255
      %p264 = scmp.eq.s32.totalorder %s29, 0
      %p265 = por %p263, %p264
      %p266 = scmp.ne.s32.totalorder %s254, %s255
      %p267 = scmp.eq.s32.totalorder %s30, 1
      %p268 = por %p266, %p267
      %p270 = scmp.ne.s32.totalorder %s255, %s269
      %p271 = scmp.eq.s32.totalorder %s30, 0
      %p272 = por %p270, %p271
      %s274 = sadd.s32 %s273, 1
      %p277 = scmp.eq.s32.totalorder %s24, 1
      %p278 = scmp.ne.s32.totalorder %s273, %s275
      %p279 = scmp.eq.s32.totalorder %s24, 0
      %p280 = por %p278, %p279
      %p281 = scmp.ne.s32.totalorder %s273, %s275
      %p282 = scmp.eq.s32.totalorder %s29, 1
      %p283 = por %p281, %p282
      %p284 = scmp.ne.s32.totalorder %s275, %s276
      %p285 = scmp.eq.s32.totalorder %s29, 0
      %p286 = por %p284, %p285
      %p287 = scmp.ne.s32.totalorder %s275, %s276
      %p288 = scmp.eq.s32.totalorder %s30, 1
      %p289 = por %p287, %p288
      %p291 = scmp.ne.s32.totalorder %s276, %s290
      %p292 = scmp.eq.s32.totalorder %s30, 0
      %p293 = por %p291, %p292
      %s295 = sadd.s32 %s294, 1
      %p298 = scmp.eq.s32.totalorder %s24, 1
      %p299 = scmp.ne.s32.totalorder %s294, %s296
      %p300 = scmp.eq.s32.totalorder %s24, 0
      %p301 = por %p299, %p300
      %p302 = scmp.ne.s32.totalorder %s294, %s296
      %p303 = scmp.eq.s32.totalorder %s29, 1
      %p304 = por %p302, %p303
      %p305 = scmp.ne.s32.totalorder %s296, %s297
      %p306 = scmp.eq.s32.totalorder %s29, 0
      %p307 = por %p305, %p306
      %p308 = scmp.ne.s32.totalorder %s296, %s297
      %p309 = scmp.eq.s32.totalorder %s30, 1
      %p310 = por %p308, %p309
      %p312 = scmp.ne.s32.totalorder %s297, %s311
      %p313 = scmp.eq.s32.totalorder %s30, 0
      %p314 = por %p312, %p313
      %s316 = sadd.s32 %s315, 1
      %p319 = scmp.eq.s32.totalorder %s24, 1
      %p320 = scmp.ne.s32.totalorder %s315, %s317
      %p321 = scmp.eq.s32.totalorder %s24, 0
      %p322 = por %p320, %p321
      %p323 = scmp.ne.s32.totalorder %s315, %s317
      %p324 = scmp.eq.s32.totalorder %s29, 1
      %p325 = por %p323, %p324
      %p326 = scmp.ne.s32.totalorder %s317, %s318
      %p327 = scmp.eq.s32.totalorder %s29, 0
      %p328 = por %p326, %p327
      %p329 = scmp.ne.s32.totalorder %s317, %s318
      %p330 = scmp.eq.s32.totalorder %s30, 1
      %p331 = por %p329, %p330
      %p333 = scmp.ne.s32.totalorder %s318, %s332
      %p334 = scmp.eq.s32.totalorder %s30, 0
      %p335 = por %p333, %p334
      %s336 = ssub.s32 %s24, %s31
      %p337 = scmp.eq.s32.totalorder %s336, 0
      %s339 = sadd.s32 %s338, 1
      %s340 = scalar_select %p337, %s338, %s339
      %p343 = pneg %p337
      %p344 = scmp.eq.s32.totalorder %s24, 1
      %p345 = por %p343, %p344
      %p346 = scmp.ne.s32.totalorder %s338, %s341
      %p347 = scmp.eq.s32.totalorder %s24, 0
      %p348 = por %p346, %p347
      %p349 = scmp.ne.s32.totalorder %s338, %s341
      %p350 = scmp.eq.s32.totalorder %s29, 1
      %p351 = por %p349, %p350
      %p352 = scmp.ne.s32.totalorder %s341, %s342
      %p353 = scmp.eq.s32.totalorder %s29, 0
      %p354 = por %p352, %p353
      %p355 = scmp.ne.s32.totalorder %s341, %s342
      %p356 = scmp.eq.s32.totalorder %s30, 1
      %p357 = por %p355, %p356
      %p359 = scmp.ne.s32.totalorder %s342, %s358
      %p360 = scmp.eq.s32.totalorder %s30, 0
      %p361 = por %p359, %p360
      %p362 = scmp.le.s32.totalorder 1, %s24
      %p363 = scmp.lt.s32.totalorder %s24, 3
      %p364 = pnand %p362, %p363
      %p365 = pneg %p364
      // Predicated region
      $region9: #{fine_tuned_bert_forward.6} parent=5 // pred_check
        _
      $region10: #{fine_tuned_bert_forward.6} parent=5 // pred_check_branch
        %367 = sbr.rel (%p364) target = $region12
      $region11: #{fine_tuned_bert_forward.6} parent=5 // pred_region
        %s368 = ssub.s32 %s24, 1
        // Predicated region
        $region13: #{fine_tuned_bert_forward.6} parent=11 // pred_check
          %p369 = pneg %p97
        $region14: #{fine_tuned_bert_forward.6} parent=11 // pred_check_branch
          %371 = sbr.rel (%p369) target = $region16
        $region15: #{fine_tuned_bert_forward.6} parent=11 // pred_region
          %373 = vsyncadd [#allocation3], 0
          %s374 = sshll.u32 %s2, 4
          %s375 = int_to_ptr.hbm [resolvable:$true] %s374
          %s376 = sshll.u32 [#allocation2], 4
          %s377 = int_to_ptr.vmem [resolvable:$true] %s376
          %382 = dma.hbm_to_vmem [thread:$0]  %s375, 256, %s377, [#allocation3], 64, 64, 4
        $region16: #{fine_tuned_bert_forward.6} parent=11 // pred_fallthru
          _
        // Predicated region
        $region17: #{fine_tuned_bert_forward.6} parent=11 // pred_check
          %p383 = pneg %p118
        $region18: #{fine_tuned_bert_forward.6} parent=11 // pred_check_branch
          %385 = sbr.rel (%p383) target = $region20
        $region19: #{fine_tuned_bert_forward.6} parent=11 // pred_region
          %387 = vsyncadd [#allocation5], 0
          %s389 = sshll.u32 %s3, 4
          %s390 = int_to_ptr.hbm [resolvable:$true] %s389
          %s391 = sshll.u32 [#allocation4], 4
          %s392 = int_to_ptr.vmem [resolvable:$true] %s391
          %394 = dma.hbm_to_vmem [thread:$0]  %s390, 16, %s392, [#allocation5]
        $region20: #{fine_tuned_bert_forward.6} parent=11 // pred_fallthru
          _
        // Predicated region
        $region21: #{fine_tuned_bert_forward.6} parent=11 // pred_check
          %p395 = pneg %p139
        $region22: #{fine_tuned_bert_forward.6} parent=11 // pred_check_branch
          %397 = sbr.rel (%p395) target = $region24
        $region23: #{fine_tuned_bert_forward.6} parent=11 // pred_region
          %399 = vsyncadd [#allocation5], 0
          %s400 = sshll.u32 %s4, 4
          %s401 = int_to_ptr.hbm [resolvable:$true] %s400
          %s402 = sshll.u32 [#allocation6], 4
          %s403 = int_to_ptr.vmem [resolvable:$true] %s402
          %408 = dma.hbm_to_vmem [thread:$0]  %s401, 256, %s403, [#allocation5], 64, 64, 4
        $region24: #{fine_tuned_bert_forward.6} parent=11 // pred_fallthru
          _
        // Predicated region
        $region25: #{fine_tuned_bert_forward.6} parent=11 // pred_check
          %p409 = pneg %p160
        $region26: #{fine_tuned_bert_forward.6} parent=11 // pred_check_branch
          %411 = sbr.rel (%p409) target = $region28
        $region27: #{fine_tuned_bert_forward.6} parent=11 // pred_region
          %413 = vsyncadd [#allocation8], 0
          %s415 = sshll.u32 %s5, 4
          %s416 = int_to_ptr.hbm [resolvable:$true] %s415
          %s417 = sshll.u32 [#allocation7], 4
          %s418 = int_to_ptr.vmem [resolvable:$true] %s417
          %420 = dma.hbm_to_vmem [thread:$0]  %s416, 16, %s418, [#allocation8]
        $region28: #{fine_tuned_bert_forward.6} parent=11 // pred_fallthru
          _
        // Predicated region
        $region29: #{fine_tuned_bert_forward.6} parent=11 // pred_check
          %p421 = pneg %p181
        $region30: #{fine_tuned_bert_forward.6} parent=11 // pred_check_branch
          %423 = sbr.rel (%p421) target = $region32
        $region31: #{fine_tuned_bert_forward.6} parent=11 // pred_region
          _
        $region32: #{fine_tuned_bert_forward.6} parent=11 // pred_fallthru
          _
        // Predicated region
        $region33: #{fine_tuned_bert_forward.6} parent=11 // pred_check
          %p424 = pneg %p202
        $region34: #{fine_tuned_bert_forward.6} parent=11 // pred_check_branch
          %426 = sbr.rel (%p424) target = $region36
        $region35: #{fine_tuned_bert_forward.6} parent=11 // pred_region
          _
        $region36: #{fine_tuned_bert_forward.6} parent=11 // pred_fallthru
          _
        // Predicated region
        $region37: #{fine_tuned_bert_forward.6} parent=11 // pred_check
          %p427 = pneg %p223
        $region38: #{fine_tuned_bert_forward.6} parent=11 // pred_check_branch
          %429 = sbr.rel (%p427) target = $region40
        $region39: #{fine_tuned_bert_forward.6} parent=11 // pred_region
          %431 = vsyncadd [#allocation8], 0
          %s432 = sshll.u32 %s8, 4
          %s433 = int_to_ptr.hbm [resolvable:$true] %s432
          %s434 = sshll.u32 [#allocation9], 4
          %s435 = int_to_ptr.vmem [resolvable:$true] %s434
          %440 = dma.hbm_to_vmem [thread:$0]  %s433, 256, %s435, [#allocation8], 64, 64, 4
        $region40: #{fine_tuned_bert_forward.6} parent=11 // pred_fallthru
          _
        // Predicated region
        $region41: #{fine_tuned_bert_forward.6} parent=11 // pred_check
          %p441 = pneg %p244
        $region42: #{fine_tuned_bert_forward.6} parent=11 // pred_check_branch
          %443 = sbr.rel (%p441) target = $region44
        $region43: #{fine_tuned_bert_forward.6} parent=11 // pred_region
          %445 = vsyncadd [#allocation11], 0
          %s447 = sshll.u32 %s9, 4
          %s448 = int_to_ptr.hbm [resolvable:$true] %s447
          %s449 = sshll.u32 [#allocation10], 4
          %s450 = int_to_ptr.vmem [resolvable:$true] %s449
          %452 = dma.hbm_to_vmem [thread:$0]  %s448, 16, %s450, [#allocation11]
        $region44: #{fine_tuned_bert_forward.6} parent=11 // pred_fallthru
          _
        // Predicated region
        $region45: #{fine_tuned_bert_forward.6} parent=11 // pred_check
          %p453 = pneg %p265
        $region46: #{fine_tuned_bert_forward.6} parent=11 // pred_check_branch
          %455 = sbr.rel (%p453) target = $region48
        $region47: #{fine_tuned_bert_forward.6} parent=11 // pred_region
          _
        $region48: #{fine_tuned_bert_forward.6} parent=11 // pred_fallthru
          _
        // Predicated region
        $region49: #{fine_tuned_bert_forward.6} parent=11 // pred_check
          %p456 = pneg %p286
        $region50: #{fine_tuned_bert_forward.6} parent=11 // pred_check_branch
          %458 = sbr.rel (%p456) target = $region52
        $region51: #{fine_tuned_bert_forward.6} parent=11 // pred_region
          %460 = vsyncadd [#allocation11], 0
          %s462 = sshll.u32 %s11, 4
          %s463 = int_to_ptr.hbm [resolvable:$true] %s462
          %s464 = sshll.u32 [#allocation12], 4
          %s465 = int_to_ptr.vmem [resolvable:$true] %s464
          %467 = dma.hbm_to_vmem [thread:$0]  %s463, 16, %s465, [#allocation11]
        $region52: #{fine_tuned_bert_forward.6} parent=11 // pred_fallthru
          _
        // Predicated region
        $region53: #{fine_tuned_bert_forward.6} parent=11 // pred_check
          %p468 = pneg %p307
        $region54: #{fine_tuned_bert_forward.6} parent=11 // pred_check_branch
          %470 = sbr.rel (%p468) target = $region56
        $region55: #{fine_tuned_bert_forward.6} parent=11 // pred_region
          _
        $region56: #{fine_tuned_bert_forward.6} parent=11 // pred_fallthru
          _
        // Predicated region
        $region57: #{fine_tuned_bert_forward.6} parent=11 // pred_check
          %p471 = pneg %p328
        $region58: #{fine_tuned_bert_forward.6} parent=11 // pred_check_branch
          %473 = sbr.rel (%p471) target = $region60
        $region59: #{fine_tuned_bert_forward.6} parent=11 // pred_region
          _
        $region60: #{fine_tuned_bert_forward.6} parent=11 // pred_fallthru
          _
      $region12: #{fine_tuned_bert_forward.6} parent=5 // pred_fallthru
        _
      %p474 = scmp.lt.s32.totalorder %s24, 2
      // Predicated region
      $region61: #{fine_tuned_bert_forward.6} parent=5 // pred_check
        %p475 = pneg %p474
      $region62: #{fine_tuned_bert_forward.6} parent=5 // pred_check_branch
        %477 = sbr.rel (%p475) target = $region64
      $region63: #{fine_tuned_bert_forward.6} parent=5 // pred_region
        // Predicated region
        $region65: #{fine_tuned_bert_forward.6} parent=63 // pred_check
          %p478 = pneg %p44
        $region66: #{fine_tuned_bert_forward.6} parent=63 // pred_check_branch
          %480 = sbr.rel (%p478) target = $region68
        $region67: #{fine_tuned_bert_forward.6} parent=63 // pred_region
          %p481 = scmp.lt.s32.totalorder %s24, 1
          %s482 = scalar_select %p481, %s24, 1
          %s483 = smul.addr %s482, 8
          %s484 = scalar_lea.vmem %s0, %s483
        $region68: #{fine_tuned_bert_forward.6} parent=63 // pred_fallthru
          _
        // Predicated region
        $region69: #{fine_tuned_bert_forward.6} parent=63 // pred_check
          %p485 = pneg %p70
        $region70: #{fine_tuned_bert_forward.6} parent=63 // pred_check_branch
          %487 = sbr.rel (%p485) target = $region72
        $region71: #{fine_tuned_bert_forward.6} parent=63 // pred_region
          %p488 = scmp.lt.s32.totalorder %s24, 1
          %s489 = scalar_select %p488, %s24, 1
          %s490 = scalar_lea.vmem %s1, %s489
        $region72: #{fine_tuned_bert_forward.6} parent=63 // pred_fallthru
          _
      $region64: #{fine_tuned_bert_forward.6} parent=5 // pred_fallthru
        _
      %p491 = scmp.le.s32.totalorder 1, %s24
      %p492 = scmp.lt.s32.totalorder %s24, 3
      %p493 = pnand %p491, %p492
      %p494 = pneg %p493
      // Predicated region
      $region73: #{fine_tuned_bert_forward.6} parent=5 // pred_check
        _
      $region74: #{fine_tuned_bert_forward.6} parent=5 // pred_check_branch
        %496 = sbr.rel (%p493) target = $region76
      $region75: #{fine_tuned_bert_forward.6} parent=5 // pred_region
        %s497 = ssub.s32 %s24, 1
        // Predicated region
        $region77: #{fine_tuned_bert_forward.6} parent=75 // pred_check
          %p498 = pneg %p97
        $region78: #{fine_tuned_bert_forward.6} parent=75 // pred_check_branch
          %500 = sbr.rel (%p498) target = $region80
        $region79: #{fine_tuned_bert_forward.6} parent=75 // pred_region
          %502 = dma.done [#allocation3], 256
        $region80: #{fine_tuned_bert_forward.6} parent=75 // pred_fallthru
          _
        // Predicated region
        $region81: #{fine_tuned_bert_forward.6} parent=75 // pred_check
          %p503 = pneg %p118
        $region82: #{fine_tuned_bert_forward.6} parent=75 // pred_check_branch
          %505 = sbr.rel (%p503) target = $region84
        $region83: #{fine_tuned_bert_forward.6} parent=75 // pred_region
          %507 = dma.done [#allocation5], 16
        $region84: #{fine_tuned_bert_forward.6} parent=75 // pred_fallthru
          _
        // Predicated region
        $region85: #{fine_tuned_bert_forward.6} parent=75 // pred_check
          %p508 = pneg %p139
        $region86: #{fine_tuned_bert_forward.6} parent=75 // pred_check_branch
          %510 = sbr.rel (%p508) target = $region88
        $region87: #{fine_tuned_bert_forward.6} parent=75 // pred_region
          %512 = dma.done [#allocation5], 256
        $region88: #{fine_tuned_bert_forward.6} parent=75 // pred_fallthru
          _
        // Predicated region
        $region89: #{fine_tuned_bert_forward.6} parent=75 // pred_check
          %p513 = pneg %p160
        $region90: #{fine_tuned_bert_forward.6} parent=75 // pred_check_branch
          %515 = sbr.rel (%p513) target = $region92
        $region91: #{fine_tuned_bert_forward.6} parent=75 // pred_region
          %517 = dma.done [#allocation8], 16
        $region92: #{fine_tuned_bert_forward.6} parent=75 // pred_fallthru
          _
        // Predicated region
        $region93: #{fine_tuned_bert_forward.6} parent=75 // pred_check
          %p518 = pneg %p223
        $region94: #{fine_tuned_bert_forward.6} parent=75 // pred_check_branch
          %520 = sbr.rel (%p518) target = $region96
        $region95: #{fine_tuned_bert_forward.6} parent=75 // pred_region
          %522 = dma.done [#allocation8], 256
        $region96: #{fine_tuned_bert_forward.6} parent=75 // pred_fallthru
          _
        // Predicated region
        $region97: #{fine_tuned_bert_forward.6} parent=75 // pred_check
          %p523 = pneg %p244
        $region98: #{fine_tuned_bert_forward.6} parent=75 // pred_check_branch
          %525 = sbr.rel (%p523) target = $region100
        $region99: #{fine_tuned_bert_forward.6} parent=75 // pred_region
          %527 = dma.done [#allocation11], 16
        $region100: #{fine_tuned_bert_forward.6} parent=75 // pred_fallthru
          _
        // Predicated region
        $region101: #{fine_tuned_bert_forward.6} parent=75 // pred_check
          %p528 = pneg %p286
        $region102: #{fine_tuned_bert_forward.6} parent=75 // pred_check_branch
          %530 = sbr.rel (%p528) target = $region104
        $region103: #{fine_tuned_bert_forward.6} parent=75 // pred_region
          %532 = dma.done [#allocation11], 16
        $region104: #{fine_tuned_bert_forward.6} parent=75 // pred_fallthru
          _
        %p533 = scmp.lt.s32.totalorder %s29, 1
        %s534 = scalar_select %p533, %s29, 1
        %s535 = smul.addr %s534, 8
        %s536 = scalar_lea.vmem %s0, %s535
        %p537 = pneg %p50
        %p538 = pneg %p47
        %p539 = scmp.lt.s32.totalorder %s29, 1
        %s540 = scalar_select %p539, %s29, 1
        %s541 = scalar_lea.vmem %s1, %s540
        %p542 = pneg %p76
        %p543 = pneg %p73
        %p544 = pneg %p97
        %p545 = pneg %p94
        %p546 = pneg %p118
        %p547 = pneg %p115
        %p548 = pneg %p139
        %p549 = pneg %p136
        %p550 = pneg %p160
        %p551 = pneg %p157
        %p552 = pneg %p181
        %p553 = pneg %p178
        %p554 = pneg %p202
        %p555 = pneg %p199
        %p556 = pneg %p223
        %p557 = pneg %p220
        %p558 = pneg %p244
        %p559 = pneg %p241
        %p560 = pneg %p265
        %p561 = pneg %p262
        %p562 = pneg %p286
        %p563 = pneg %p283
        %p564 = pneg %p307
        %p565 = pneg %p304
        %p566 = pneg %p328
        %p567 = pneg %p325
        %p568 = pneg %p354
        %p569 = pneg %p351
        %p570 = scmp.lt.s32.totalorder %s29, 1
        %s571 = scalar_select %p570, %s29, 1
        %s572 = smul.addr %s571, 8
        %s573 = scalar_lea.vmem %s14, %s572
        %p574 = scmp.lt.s32.totalorder %s29, 1
        %s575 = scalar_select %p574, %s29, 1
        %s576 = smul.addr %s575, 8
        %s577 = scalar_lea.vmem %s0, %s576
        %p578 = scmp.lt.s32.totalorder %s29, 1
        %s579 = scalar_select %p578, %s29, 1
        %s580 = scalar_lea.vmem %s1, %s579
        %p581 = scmp.lt.s32.totalorder %s29, 1
        %s582 = scalar_select %p581, %s29, 1
        %s583 = smul.addr %s582, 8
        %s584 = scalar_lea.vmem %s14, %s583
        %v586 = vld [vmem:[%s577] sm:$0xff]
        %v587 = vpack.c.bf16 %v586, %v586
        %v588 = vld [vmem:[#allocation2] sm:$0xf]
        %v589 = vld [vmem:[#allocation2 + $0x4] sm:$0xf]
        %v590 = vld [vmem:[#allocation2 + $0x8] sm:$0xf]
        %v591 = vld [vmem:[#allocation2 + $0xc] sm:$0xf]
        %v592 = vld [vmem:[#allocation4] sm:$0x1]
        %v594 = vperm.slane %v592, 0
        %v600 = vunpack.c.l.b16 %v588
        %v601 = vunpack.c.l.b16 %v589
        %v602 = vunpack.c.l.b16 %v590
        %v603 = vunpack.c.l.b16 %v591
        %v604 = vpack.c.b16 %v601, %v600
        %v605 = vpack.c.b16 %v603, %v602
        %vm608 = vcmask 261120
        %v610 = vsel %vm608, %v587, 0
        %612 = vmatpush.bf16.msra.mxu0 0
        %613 = vmatpush.bf16.msra.mxu0 0
        %614 = vmatpush.bf16.msra.mxu0 0
        %615 = vmatpush.bf16.msra.mxu0 0
        %616 = vmatpush.bf16.msra.mxu0 0
        %617 = vmatpush.bf16.msra.mxu0 0
        %618 = vmatpush.bf16.msra.mxu0 %v605
        %619 = vmatpush.bf16.msra.mxu0 %v604
        %620 = vmatmul.bf16.gmra.mxu0 %v610
        %v621 = vpop.f32.mrf.mxu0
        %v622 = vadd.f32 %v594, %v621
        %v623 = vpop.f32.mrf.mxu0
        %624 = vdwg.mxu0
        %v625 = vld [vmem:[%s580] sm:$0x1]
        %v626 = vsub.f32 1.0, %v625
        %v627 = vmul.f32 %v626, -1e+09
        %v628 = vpack.c.bf16 %v622, %v622
        %630 = vrot.lane.b32.xlu0 %v628, 96
        %v631 = vpop.permute.xlu0 %630
        %vm632 = vcmask 64512
        %v634 = vsel %vm632, %v628, 0
        %v637 = vsel %vm632, %v631, 0
        %639 = vmatpush.bf16.xpose.msra.mxu0 0
        %640 = vmatpush.bf16.xpose.msra.mxu0 0
        %641 = vmatpush.bf16.xpose.msra.mxu0 0
        %642 = vmatpush.bf16.xpose.msra.mxu0 0
        %643 = vmatpush.bf16.xpose.msra.mxu0 0
        %644 = vmatpush.bf16.xpose.msra.mxu0 0
        %645 = vmatpush.bf16.xpose.msra.mxu0 0
        %646 = vmatpush.bf16.xpose.msra.mxu0 %v637
        %647 = vmatmul.bf16.gmra.mxu0 %v634
        %v648 = vpop.f32.mrf.mxu0
        %v649 = vadd.f32 0.0, %v648
        %v650 = vpop.f32.mrf.mxu0
        %651 = vdwg.mxu0
        %v652 = vmul.f32 %v649, 0.35355338
        %v654 = vperm.slane %v627, 0
        %v656 = vadd.f32 %v652, %v654
        %v657 = vsel %vm632, %v656, -inf
        %658 = vmax.xlane.f32.xlu0 %v657
        %v659 = vpop.xlane.xlu0 %658
        %v660 = vsub.f32 %v656, %v659
        %v661 = vmul.f32 %v660, 1.442695
        %v662 = vpow.pop %v661
        %v663 = vsel %vm632, %v662, 0.0
        %664 = vadd.xlane.f32.xlu0 %v663
        %v665 = vpop.xlane.xlu0 %664
        %v666 = vrcp.pop %v665
        %v667 = vmul.f32 %v662, %v666
        %v668 = vpack.c.bf16 %v667, %v667
        %669 = vrot.lane.b32.xlu0 %v628, 64
        %v670 = vpop.permute.xlu0 %669
        %v672 = vsel %vm632, %v668, 0
        %vm674 = vcmask 1043456
        %v676 = vsel %vm674, %v670, 0
        %678 = vmatpush.bf16.msra.mxu0 0
        %679 = vmatpush.bf16.msra.mxu0 0
        %680 = vmatpush.bf16.msra.mxu0 0
        %681 = vmatpush.bf16.msra.mxu0 0
        %682 = vmatpush.bf16.msra.mxu0 0
        %683 = vmatpush.bf16.msra.mxu0 0
        %684 = vmatpush.bf16.msra.mxu0 0
        %685 = vmatpush.bf16.msra.mxu0 %v676
        %686 = vmatmul.bf16.gmra.mxu0 %v672
        %v687 = vpop.f32.mrf.mxu0
        %v688 = vadd.f32 0.0, %v687
        %v689 = vpop.f32.mrf.mxu0
        %690 = vdwg.mxu0
        %691 = vrot.lane.b32.xlu0 %v628, 120
        %v692 = vpop.permute.xlu0 %691
        %693 = vrot.lane.b32.xlu0 %v628, 88
        %v694 = vpop.permute.xlu0 %693
        %v696 = vsel %vm632, %v692, 0
        %v699 = vsel %vm632, %v694, 0
        %701 = vmatpush.bf16.xpose.msra.mxu0 0
        %702 = vmatpush.bf16.xpose.msra.mxu0 0
        %703 = vmatpush.bf16.xpose.msra.mxu0 0
        %704 = vmatpush.bf16.xpose.msra.mxu0 0
        %705 = vmatpush.bf16.xpose.msra.mxu0 0
        %706 = vmatpush.bf16.xpose.msra.mxu0 0
        %707 = vmatpush.bf16.xpose.msra.mxu0 0
        %708 = vmatpush.bf16.xpose.msra.mxu0 %v699
        %709 = vmatmul.bf16.gmra.mxu0 %v696
        %v710 = vpop.f32.mrf.mxu0
        %v711 = vadd.f32 0.0, %v710
        %v712 = vpop.f32.mrf.mxu0
        %713 = vdwg.mxu0
        %v714 = vmul.f32 %v711, 0.35355338
        %v715 = vadd.f32 %v714, %v654
        %v716 = vsel %vm632, %v715, -inf
        %717 = vmax.xlane.f32.xlu0 %v716
        %v718 = vpop.xlane.xlu0 %717
        %v719 = vsub.f32 %v715, %v718
        %v720 = vmul.f32 %v719, 1.442695
        %v721 = vpow.pop %v720
        %v722 = vsel %vm632, %v721, 0.0
        %723 = vadd.xlane.f32.xlu0 %v722
        %v724 = vpop.xlane.xlu0 %723
        %v725 = vrcp.pop %v724
        %v726 = vmul.f32 %v721, %v725
        %v727 = vpack.c.bf16 %v726, %v726
        %728 = vrot.lane.b32.xlu0 %v628, 56
        %v729 = vpop.permute.xlu0 %728
        %v731 = vsel %vm632, %v727, 0
        %v734 = vsel %vm674, %v729, 0
        %736 = vmatpush.bf16.msra.mxu0 0
        %737 = vmatpush.bf16.msra.mxu0 0
        %738 = vmatpush.bf16.msra.mxu0 0
        %739 = vmatpush.bf16.msra.mxu0 0
        %740 = vmatpush.bf16.msra.mxu0 0
        %741 = vmatpush.bf16.msra.mxu0 0
        %742 = vmatpush.bf16.msra.mxu0 0
        %743 = vmatpush.bf16.msra.mxu0 %v734
        %744 = vmatmul.bf16.gmra.mxu0 %v731
        %v745 = vpop.f32.mrf.mxu0
        %v746 = vadd.f32 0.0, %v745
        %v747 = vpop.f32.mrf.mxu0
        %748 = vdwg.mxu0
        %749 = vrot.lane.b32.xlu0 %v628, 112
        %v750 = vpop.permute.xlu0 %749
        %751 = vrot.lane.b32.xlu0 %v628, 80
        %v752 = vpop.permute.xlu0 %751
        %v754 = vsel %vm632, %v750, 0
        %v757 = vsel %vm632, %v752, 0
        %759 = vmatpush.bf16.xpose.msra.mxu0 0
        %760 = vmatpush.bf16.xpose.msra.mxu0 0
        %761 = vmatpush.bf16.xpose.msra.mxu0 0
        %762 = vmatpush.bf16.xpose.msra.mxu0 0
        %763 = vmatpush.bf16.xpose.msra.mxu0 0
        %764 = vmatpush.bf16.xpose.msra.mxu0 0
        %765 = vmatpush.bf16.xpose.msra.mxu0 0
        %766 = vmatpush.bf16.xpose.msra.mxu0 %v757
        %767 = vmatmul.bf16.gmra.mxu0 %v754
        %v768 = vpop.f32.mrf.mxu0
        %v769 = vadd.f32 0.0, %v768
        %v770 = vpop.f32.mrf.mxu0
        %771 = vdwg.mxu0
        %v772 = vmul.f32 %v769, 0.35355338
        %v773 = vadd.f32 %v772, %v654
        %v774 = vsel %vm632, %v773, -inf
        %775 = vmax.xlane.f32.xlu0 %v774
        %v776 = vpop.xlane.xlu0 %775
        %v777 = vsub.f32 %v773, %v776
        %v778 = vmul.f32 %v777, 1.442695
        %v779 = vpow.pop %v778
        %v780 = vsel %vm632, %v779, 0.0
        %781 = vadd.xlane.f32.xlu0 %v780
        %v782 = vpop.xlane.xlu0 %781
        %v783 = vrcp.pop %v782
        %v784 = vmul.f32 %v779, %v783
        %v785 = vpack.c.bf16 %v784, %v784
        %786 = vrot.lane.b32.xlu0 %v628, 48
        %v787 = vpop.permute.xlu0 %786
        %v789 = vsel %vm632, %v785, 0
        %v792 = vsel %vm674, %v787, 0
        %794 = vmatpush.bf16.msra.mxu0 0
        %795 = vmatpush.bf16.msra.mxu0 0
        %796 = vmatpush.bf16.msra.mxu0 0
        %797 = vmatpush.bf16.msra.mxu0 0
        %798 = vmatpush.bf16.msra.mxu0 0
        %799 = vmatpush.bf16.msra.mxu0 0
        %800 = vmatpush.bf16.msra.mxu0 0
        %801 = vmatpush.bf16.msra.mxu0 %v792
        %802 = vmatmul.bf16.gmra.mxu0 %v789
        %v803 = vpop.f32.mrf.mxu0
        %v804 = vadd.f32 0.0, %v803
        %v805 = vpop.f32.mrf.mxu0
        %806 = vdwg.mxu0
        %807 = vrot.lane.b32.xlu0 %v628, 104
        %v808 = vpop.permute.xlu0 %807
        %809 = vrot.lane.b32.xlu0 %v628, 72
        %v810 = vpop.permute.xlu0 %809
        %v812 = vsel %vm632, %v808, 0
        %v815 = vsel %vm632, %v810, 0
        %817 = vmatpush.bf16.xpose.msra.mxu0 0
        %818 = vmatpush.bf16.xpose.msra.mxu0 0
        %819 = vmatpush.bf16.xpose.msra.mxu0 0
        %820 = vmatpush.bf16.xpose.msra.mxu0 0
        %821 = vmatpush.bf16.xpose.msra.mxu0 0
        %822 = vmatpush.bf16.xpose.msra.mxu0 0
        %823 = vmatpush.bf16.xpose.msra.mxu0 0
        %824 = vmatpush.bf16.xpose.msra.mxu0 %v815
        %825 = vmatmul.bf16.gmra.mxu0 %v812
        %v826 = vpop.f32.mrf.mxu0
        %v827 = vadd.f32 0.0, %v826
        %v828 = vpop.f32.mrf.mxu0
        %829 = vdwg.mxu0
        %v830 = vmul.f32 %v827, 0.35355338
        %v831 = vadd.f32 %v830, %v654
        %v832 = vsel %vm632, %v831, -inf
        %833 = vmax.xlane.f32.xlu0 %v832
        %v834 = vpop.xlane.xlu0 %833
        %v835 = vsub.f32 %v831, %v834
        %v836 = vmul.f32 %v835, 1.442695
        %v837 = vpow.pop %v836
        %v838 = vsel %vm632, %v837, 0.0
        %839 = vadd.xlane.f32.xlu0 %v838
        %v840 = vpop.xlane.xlu0 %839
        %v841 = vrcp.pop %v840
        %v842 = vmul.f32 %v837, %v841
        %v843 = vpack.c.bf16 %v842, %v842
        %844 = vrot.lane.b32.xlu0 %v628, 40
        %v845 = vpop.permute.xlu0 %844
        %v847 = vsel %vm632, %v843, 0
        %v850 = vsel %vm674, %v845, 0
        %852 = vmatpush.bf16.msra.mxu0 0
        %853 = vmatpush.bf16.msra.mxu0 0
        %854 = vmatpush.bf16.msra.mxu0 0
        %855 = vmatpush.bf16.msra.mxu0 0
        %856 = vmatpush.bf16.msra.mxu0 0
        %857 = vmatpush.bf16.msra.mxu0 0
        %858 = vmatpush.bf16.msra.mxu0 0
        %859 = vmatpush.bf16.msra.mxu0 %v850
        %860 = vmatmul.bf16.gmra.mxu0 %v847
        %v861 = vpop.f32.mrf.mxu0
        %v862 = vadd.f32 0.0, %v861
        %v863 = vpop.f32.mrf.mxu0
        %864 = vdwg.mxu0
        %866 = vrot.lane.b32.xlu0 %v746, 8
        %v867 = vpop.permute.xlu0 %866
        %870 = vrot.lane.b32.xlu0 %v804, 16
        %v871 = vpop.permute.xlu0 %870
        %874 = vrot.lane.b32.xlu0 %v862, 24
        %v875 = vpop.permute.xlu0 %874
        %v877 = vsel %vm632, %v688, %v867
        %vm878 = vcmask 130048
        %v879 = vsel %vm878, %v877, %v871
        %vm880 = vcmask 195584
        %v881 = vsel %vm880, %v879, %v875
        %v882 = vpack.c.bf16 %v881, %v881
        %v883 = vld [vmem:[#allocation6] sm:$0xf]
        %v884 = vld [vmem:[#allocation6 + $0x4] sm:$0xf]
        %v885 = vld [vmem:[#allocation6 + $0x8] sm:$0xf]
        %v886 = vld [vmem:[#allocation6 + $0xc] sm:$0xf]
        %v887 = vld [vmem:[#allocation7] sm:$0x1]
        %v889 = vperm.slane %v887, 0
        %v895 = vunpack.c.l.b16 %v883
        %v896 = vunpack.c.l.b16 %v884
        %v897 = vunpack.c.l.b16 %v885
        %v898 = vunpack.c.l.b16 %v886
        %v899 = vpack.c.b16 %v896, %v895
        %v900 = vpack.c.b16 %v898, %v897
        %v904 = vsel %vm608, %v882, 0
        %906 = vmatpush.bf16.msra.mxu0 0
        %907 = vmatpush.bf16.msra.mxu0 0
        %908 = vmatpush.bf16.msra.mxu0 0
        %909 = vmatpush.bf16.msra.mxu0 0
        %910 = vmatpush.bf16.msra.mxu0 0
        %911 = vmatpush.bf16.msra.mxu0 0
        %912 = vmatpush.bf16.msra.mxu0 %v900
        %913 = vmatpush.bf16.msra.mxu0 %v899
        %914 = vmatmul.bf16.gmra.mxu0 %v904
        %v915 = vpop.f32.mrf.mxu0
        %v916 = vadd.f32 %v889, %v915
        %v917 = vpop.f32.mrf.mxu0
        %918 = vdwg.mxu0
        %v919 = vadd.f32 %v586, %v916
        %v920 = vld [vmem:[%s6] sm:$0x1]
        %v921 = vld [vmem:[%s7] sm:$0x1]
        %v922 = vsel %vm608, %v919, 0.0
        %923 = vadd.xlane.f32.xlu0 %v922
        %v924 = vpop.xlane.xlu0 %923
        %v925 = vrcp.pop 32.0
        %v926 = vmul.f32 32.0, %v925
        %v927 = vsub.f32 1.0, %v926
        %v928 = vmul.f32 %v925, %v927
        %v929 = vadd.f32 %v925, %v928
        %vm930 = vweird.f32 %v925
        %v931 = vsel %vm930, %v925, %v929
        %v932 = vmul.f32 %v924, %v931
        %v933 = vsub.f32 %v919, %v932
        %v934 = vmul.f32 %v933, %v933
        %v935 = vsel %vm608, %v934, 0.0
        %936 = vadd.xlane.f32.xlu0 %v935
        %v937 = vpop.xlane.xlu0 %936
        %v938 = vmul.f32 %v937, %v931
        %v939 = vadd.f32 %v938, 1e-12
        %v940 = vrsqrt.pop %v939
        %v941 = vmul.f32 %v940, %v939
        %v942 = vmul.f32 %v941, %v940
        %v943 = vmul.f32 0.5, %v942
        %v944 = vsub.f32 1.5, %v943
        %v945 = vmul.f32 %v940, %v944
        %vm946 = vweird.f32 %v939
        %vm947 = vweird.f32 %v940
        %vm948 = vmor %vm946, %vm947
        %v949 = vsel %vm948, %v940, %v945
        %v950 = vmul.f32 %v933, %v949
        %v952 = vperm.slane %v920, 0
        %v954 = vmul.f32 %v950, %v952
        %v956 = vperm.slane %v921, 0
        %v958 = vadd.f32 %v954, %v956
        %v959 = vpack.c.bf16 %v958, %v958
        %v960 = vld [vmem:[#allocation9] sm:$0xf]
        %v961 = vld [vmem:[#allocation9 + $0x4] sm:$0xf]
        %v962 = vld [vmem:[#allocation9 + $0x8] sm:$0xf]
        %v963 = vld [vmem:[#allocation9 + $0xc] sm:$0xf]
        %v964 = vld [vmem:[#allocation10] sm:$0x1]
        %v966 = vperm.slane %v964, 0
        %v972 = vunpack.c.l.b16 %v960
        %v973 = vunpack.c.l.b16 %v961
        %v974 = vunpack.c.l.b16 %v962
        %v975 = vunpack.c.l.b16 %v963
        %v976 = vpack.c.b16 %v973, %v972
        %v977 = vpack.c.b16 %v975, %v974
        %v981 = vsel %vm608, %v959, 0
        %983 = vmatpush.bf16.msra.mxu0 0
        %984 = vmatpush.bf16.msra.mxu0 0
        %985 = vmatpush.bf16.msra.mxu0 0
        %986 = vmatpush.bf16.msra.mxu0 0
        %987 = vmatpush.bf16.msra.mxu0 0
        %988 = vmatpush.bf16.msra.mxu0 0
        %989 = vmatpush.bf16.msra.mxu0 %v977
        %990 = vmatpush.bf16.msra.mxu0 %v976
        %991 = vmatmul.bf16.gmra.mxu0 %v981
        %v992 = vpop.f32.mrf.mxu0
        %v993 = vadd.f32 %v966, %v992
        %v994 = vpop.f32.mrf.mxu0
        %995 = vdwg.mxu0
        %v996 = vmul.f32 %v993, %v993
        %v997 = vmul.f32 %v993, %v996
        %v998 = vmul.f32 %v997, 0.044715
        %v999 = vadd.f32 %v993, %v998
        %v1000 = vmul.f32 %v999, 0.7978846
        %v1001 = vtanh.pop %v1000
        %v1002 = vadd.f32 %v1001, 1.0
        %v1003 = vmul.f32 %v1002, 0.5
        %v1004 = vmul.f32 %v993, %v1003
        %v1005 = vpack.c.bf16 %v1004, %v1004
        %v1006 = vld [vmem:[%s10] sm:$0xf]
        %v1007 = vld [vmem:[%s10 + $0x4] sm:$0xf]
        %v1008 = vld [vmem:[%s10 + $0x8] sm:$0xf]
        %v1009 = vld [vmem:[%s10 + $0xc] sm:$0xf]
        %v1010 = vld [vmem:[%s10 + $0x10] sm:$0xf]
        %v1011 = vld [vmem:[%s10 + $0x14] sm:$0xf]
        %v1012 = vld [vmem:[%s10 + $0x18] sm:$0xf]
        %v1013 = vld [vmem:[%s10 + $0x1c] sm:$0xf]
        %v1014 = vld [vmem:[#allocation12] sm:$0x1]
        %v1016 = vperm.slane %v1014, 0
        %v1026 = vunpack.c.l.b16 %v1006
        %v1027 = vunpack.c.l.b16 %v1007
        %v1028 = vunpack.c.l.b16 %v1008
        %v1029 = vunpack.c.l.b16 %v1009
        %v1030 = vunpack.c.l.b16 %v1010
        %v1031 = vunpack.c.l.b16 %v1011
        %v1032 = vunpack.c.l.b16 %v1012
        %v1033 = vunpack.c.l.b16 %v1013
        %v1034 = vpack.c.b16 %v1027, %v1026
        %v1035 = vpack.c.b16 %v1029, %v1028
        %v1036 = vpack.c.b16 %v1031, %v1030
        %v1037 = vpack.c.b16 %v1033, %v1032
        %vm1042 = vcmask 523264
        %v1044 = vsel %vm1042, %v1005, 0
        %1046 = vmatpush.bf16.msra.mxu0 0
        %1047 = vmatpush.bf16.msra.mxu0 0
        %1048 = vmatpush.bf16.msra.mxu0 0
        %1049 = vmatpush.bf16.msra.mxu0 0
        %1050 = vmatpush.bf16.msra.mxu0 %v1037
        %1051 = vmatpush.bf16.msra.mxu0 %v1036
        %1052 = vmatpush.bf16.msra.mxu0 %v1035
        %1053 = vmatpush.bf16.msra.mxu0 %v1034
        %1054 = vmatmul.bf16.gmra.mxu0 %v1044
        %v1055 = vpop.f32.mrf.mxu0
        %v1056 = vadd.f32 %v1016, %v1055
        %v1057 = vpop.f32.mrf.mxu0
        %1058 = vdwg.mxu0
        %v1059 = vadd.f32 %v958, %v1056
        %v1060 = vld [vmem:[%s12] sm:$0x1]
        %v1061 = vld [vmem:[%s13] sm:$0x1]
        %v1062 = vsel %vm608, %v1059, 0.0
        %1063 = vadd.xlane.f32.xlu0 %v1062
        %v1064 = vpop.xlane.xlu0 %1063
        %v1065 = vmul.f32 %v1064, %v931
        %v1066 = vsub.f32 %v1059, %v1065
        %v1067 = vmul.f32 %v1066, %v1066
        %v1068 = vsel %vm608, %v1067, 0.0
        %1069 = vadd.xlane.f32.xlu0 %v1068
        %v1070 = vpop.xlane.xlu0 %1069
        %v1071 = vmul.f32 %v1070, %v931
        %v1072 = vadd.f32 %v1071, 1e-12
        %v1073 = vrsqrt.pop %v1072
        %v1074 = vmul.f32 %v1073, %v1072
        %v1075 = vmul.f32 %v1074, %v1073
        %v1076 = vmul.f32 0.5, %v1075
        %v1077 = vsub.f32 1.5, %v1076
        %v1078 = vmul.f32 %v1073, %v1077
        %vm1079 = vweird.f32 %v1072
        %vm1080 = vweird.f32 %v1073
        %vm1081 = vmor %vm1079, %vm1080
        %v1082 = vsel %vm1081, %v1073, %v1078
        %v1083 = vmul.f32 %v1066, %v1082
        %v1085 = vperm.slane %v1060, 0
        %v1087 = vmul.f32 %v1083, %v1085
        %v1089 = vperm.slane %v1061, 0
        %v1091 = vadd.f32 %v1087, %v1089
        %1092 = vst.msk [vmem:[%s584] sm:$0xff] %vm608, %v1091
        %p1093 = scmp.lt.s32.totalorder %s29, 1
        %s1094 = scalar_select %p1093, %s29, 1
        %s1095 = smul.addr %s1094, 8
        %s1096 = scalar_lea.vmem %s14, %s1095
        // Predicated region
        $region105: #{fine_tuned_bert_forward.6} parent=75 // pred_check
          %p1097 = pneg %p351
        $region106: #{fine_tuned_bert_forward.6} parent=75 // pred_check_branch
          %1099 = sbr.rel (%p1097) target = $region108
        $region107: #{fine_tuned_bert_forward.6} parent=75 // pred_region
          _
        $region108: #{fine_tuned_bert_forward.6} parent=75 // pred_fallthru
          _
      $region76: #{fine_tuned_bert_forward.6} parent=5 // pred_fallthru
        _
      %p1100 = scmp.le.s32.totalorder 2, %s24
      // Predicated region
      $region109: #{fine_tuned_bert_forward.6} parent=5 // pred_check
        %p1101 = pneg %p1100
      $region110: #{fine_tuned_bert_forward.6} parent=5 // pred_check_branch
        %1103 = sbr.rel (%p1101) target = $region112
      $region111: #{fine_tuned_bert_forward.6} parent=5 // pred_region
        %s1104 = ssub.s32 %s24, 2
        // Predicated region
        $region113: #{fine_tuned_bert_forward.6} parent=111 // pred_check
          %p1105 = pneg %p357
        $region114: #{fine_tuned_bert_forward.6} parent=111 // pred_check_branch
          %1107 = sbr.rel (%p1105) target = $region116
        $region115: #{fine_tuned_bert_forward.6} parent=111 // pred_region
          %p1108 = scmp.lt.s32.totalorder %s30, 1
          %s1109 = scalar_select %p1108, %s30, 1
          %s1110 = smul.addr %s1109, 8
          %s1111 = scalar_lea.vmem %s14, %s1110
        $region116: #{fine_tuned_bert_forward.6} parent=111 // pred_fallthru
          _
      $region112: #{fine_tuned_bert_forward.6} parent=5 // pred_fallthru
        _
    $region6: #{fine_tuned_bert_forward.6} parent=1 // loop_footer
      %s28 = sadd.s32 1, %s24
    $region7: #{fine_tuned_bert_forward.6} parent=1 // loop_footer_branch
      %23 = sbr.rel target = $region3
    $region8: #{fine_tuned_bert_forward.6} parent=1 // loop_exit
      _
    %1112 = vsyncpa [#allocation3], 1
    %s1113 = scalar_lea.sflag [#allocation3], 1
    %1114 = vsyncpa %s1113, 1
    %1115 = vsyncpa [#allocation5], 1
    %1116 = vsyncpa [#allocation8], 1
    %1117 = vsyncpa [#allocation11], 1

// kernel: fine_tuned_bert_forward.7
$region0: #{fine_tuned_bert_forward.7}
  #allocation0 [shape = 'u32[]', space=smem, size = 0x4, offset = 0x4, fixed_abs, tag = 'smem constant byte address 0x4 - core index']
  #allocation1 [shape = 'u32[72,128]{1,0:T(1,128)}', space=vmem, size = 0x9000, scoped, tag = 'internal scratch']
  %s0 = inlined_call_operand.vmem [shape: f32[2,8,32], index: 0, kind: input, shape index: {}]
  %s1 = inlined_call_operand.vmem [shape: f32[2,1,8], index: 1, kind: input, shape index: {}]
  %s2 = inlined_call_operand.vmem [shape: f32[2,1,16], index: 2, kind: input, shape index: {}]
  %s3 = inlined_call_operand.hbm [shape: bf16[32,40], index: 3, kind: input, shape index: {}]
  %s4 = inlined_call_operand.hbm [shape: f32[1,40], index: 4, kind: input, shape index: {}]
  %s5 = inlined_call_operand.hbm [shape: bf16[16,16], index: 5, kind: input, shape index: {}]
  %s6 = inlined_call_operand.hbm [shape: f32[1,16], index: 6, kind: input, shape index: {}]
  %s7 = inlined_call_operand.hbm [shape: bf16[16,40], index: 7, kind: input, shape index: {}]
  %s8 = inlined_call_operand.hbm [shape: f32[1,40], index: 8, kind: input, shape index: {}]
  %s9 = inlined_call_operand.vmem [shape: bf16[40,40], index: 9, kind: input, shape index: {}]
  %s10 = inlined_call_operand.hbm [shape: f32[1,40], index: 10, kind: input, shape index: {}]
  %s11 = inlined_call_operand.vmem [shape: bf16[40,40], index: 11, kind: input, shape index: {}]
  %s12 = inlined_call_operand.hbm [shape: f32[1,40], index: 12, kind: input, shape index: {}]
  %s13 = inlined_call_operand.vmem [shape: bf16[40,40], index: 13, kind: input, shape index: {}]
  %s14 = inlined_call_operand.vmem [shape: bf16[40,40], index: 14, kind: input, shape index: {}]
  %s15 = inlined_call_operand.vmem [shape: f32[1,40], index: 15, kind: input, shape index: {}]
  %s16 = inlined_call_operand.vmem [shape: bf16[40,32], index: 16, kind: input, shape index: {}]
  %s17 = inlined_call_operand.vmem [shape: f32[1,32], index: 17, kind: input, shape index: {}]
  %s18 = inlined_call_operand.vmem [shape: bf16[32,3], index: 18, kind: input, shape index: {}]
  %s19 = inlined_call_operand.vmem [shape: f32[1,3], index: 19, kind: input, shape index: {}]
  %s20 = inlined_call_operand.hbm [shape: f32[2,1,32], index: 20, kind: output, shape index: {0}]
  %s21 = inlined_call_operand.hbm [shape: f32[2,1,3], index: 21, kind: output, shape index: {1}]
  %22 = xla_tuple %s20, %s21
  %s23 = sld [smem:[#allocation0]]
  $region153: #{fine_tuned_bert_forward.7} parent=0
    _
  %s25 = ssub.s32 1, %s23
  %s26 = scalar_select 0, %s25, %s23
  $region1: #{fine_tuned_bert_forward.7} parent=0
    #allocation2 [shape = 'u8[8192]{0}', space=vmem, size = 0x2000, scoped, tag = 'input window, operand 3, single buffered']
    #allocation3 [shape = 's32[2]{0}', space=sflag, size = 0x8, scoped, tag = 'scoped memory for fine_tuned_bert_forward.7']
    #allocation4 [shape = 's32[2]{0}', space=sflag, size = 0x8, scoped, tag = 'scoped memory for fine_tuned_bert_forward.7']
    #allocation5 [shape = 'u8[512]{0}', space=vmem, size = 0x400, scoped, tag = 'input window, operand 4, single buffered']
    #allocation6 [shape = 's32[1]{0}', space=sflag, size = 0x4, scoped, tag = 'scoped memory for fine_tuned_bert_forward.7']
    #allocation7 [shape = 'u8[4096]{0}', space=vmem, size = 0x1000, scoped, tag = 'input window, operand 5, single buffered']
    #allocation8 [shape = 'u8[512]{0}', space=vmem, size = 0x400, scoped, tag = 'input window, operand 6, single buffered']
    #allocation9 [shape = 's32[1]{0}', space=sflag, size = 0x4, scoped, tag = 'scoped memory for fine_tuned_bert_forward.7']
    #allocation10 [shape = 'u8[4096]{0}', space=vmem, size = 0x1000, scoped, tag = 'input window, operand 7, single buffered']
    #allocation11 [shape = 'u8[512]{0}', space=vmem, size = 0x400, scoped, tag = 'input window, operand 8, single buffered']
    #allocation12 [shape = 's32[1]{0}', space=sflag, size = 0x4, scoped, tag = 'scoped memory for fine_tuned_bert_forward.7']
    #allocation13 [shape = 'u8[512]{0}', space=vmem, size = 0x400, scoped, tag = 'input window, operand 10, single buffered']
    #allocation14 [shape = 'u8[512]{0}', space=vmem, size = 0x400, scoped, tag = 'input window, operand 12, single buffered']
    #allocation15 [shape = 's32[1]{0}', space=sflag, size = 0x4, scoped, tag = 'scoped memory for fine_tuned_bert_forward.7']
    #allocation16 [shape = 'u8[1024]{0}', space=vmem, size = 0x400, scoped, tag = 'output window, operand 0']
    #allocation17 [shape = 'u8[1024]{0}', space=vmem, size = 0x400, scoped, tag = 'output window, operand 1']
    #allocation18 [shape = 's32[2]{0}', space=sflag, size = 0x8, scoped, tag = 'scoped memory for fine_tuned_bert_forward.7']
    %27 = vsyncpa [#allocation3], 0
    %28 = vsyncpa [#allocation6], 0
    %29 = vsyncpa [#allocation9], 0
    %30 = vsyncpa [#allocation12], 0
    %31 = vsyncpa [#allocation15], 0
    %32 = vsyncpa [#allocation4], 0
    %s33 = scalar_lea.sflag [#allocation4], 1
    %34 = vsyncpa %s33, 0
    %35 = vsyncpa [#allocation18], 0
    %s36 = scalar_lea.sflag [#allocation18], 1
    %37 = vsyncpa %s36, 0
    loop: start=0, step=1, limit=4
    $region2: #{fine_tuned_bert_forward.7} parent=1 // loop_pre_header
      _
    $region3: #{fine_tuned_bert_forward.7} parent=1 // loop_header
      %s39 = sphi 0, %s43
      %p40 = scmp.ge.s32.totalorder %s39, 4
      %s49 = sphi 0, %s51
      %s52 = sphi 0, %s49
      %s53 = sphi 0, %s52
      %s69 = sphi 0, %s53
      %s75 = sphi 0, %s77
      %s78 = sphi 0, %s75
      %s79 = sphi 0, %s78
      %s95 = sphi 0, %s79
      %s101 = sphi 0, %s103
      %s104 = sphi 0, %s101
      %s105 = sphi 0, %s104
      %s121 = sphi 0, %s105
      %s125 = sphi 0, %s125
      %s127 = sphi 0, %s125
      %s128 = sphi 0, %s127
      %s142 = sphi 0, %s128
      %s146 = sphi 0, %s146
      %s148 = sphi 0, %s146
      %s149 = sphi 0, %s148
      %s163 = sphi 0, %s149
      %s167 = sphi 0, %s167
      %s169 = sphi 0, %s167
      %s170 = sphi 0, %s169
      %s184 = sphi 0, %s170
      %s188 = sphi 0, %s188
      %s190 = sphi 0, %s188
      %s191 = sphi 0, %s190
      %s205 = sphi 0, %s191
      %s209 = sphi 0, %s209
      %s211 = sphi 0, %s209
      %s212 = sphi 0, %s211
      %s226 = sphi 0, %s212
      %s230 = sphi 0, %s230
      %s232 = sphi 0, %s230
      %s233 = sphi 0, %s232
      %s247 = sphi 0, %s233
      %s251 = sphi 0, %s251
      %s253 = sphi 0, %s251
      %s254 = sphi 0, %s253
      %s268 = sphi 0, %s254
      %s272 = sphi 0, %s272
      %s274 = sphi 0, %s272
      %s275 = sphi 0, %s274
      %s289 = sphi 0, %s275
      %s293 = sphi 0, %s293
      %s295 = sphi 0, %s293
      %s296 = sphi 0, %s295
      %s310 = sphi 0, %s296
      %s314 = sphi 0, %s314
      %s316 = sphi 0, %s314
      %s317 = sphi 0, %s316
      %s331 = sphi 0, %s317
      %s335 = sphi 0, %s335
      %s337 = sphi 0, %s335
      %s338 = sphi 0, %s337
      %s352 = sphi 0, %s338
      %s356 = sphi 0, %s356
      %s358 = sphi 0, %s356
      %s359 = sphi 0, %s358
      %s373 = sphi 0, %s359
      %s377 = sphi 0, %s377
      %s379 = sphi 0, %s377
      %s380 = sphi 0, %s379
      %s394 = sphi 0, %s380
      %s398 = sphi 0, %s398
      %s400 = sphi 0, %s398
      %s401 = sphi 0, %s400
      %s415 = sphi 0, %s401
      %s419 = sphi 0, %s419
      %s421 = sphi 0, %s419
      %s422 = sphi 0, %s421
      %s436 = sphi 0, %s422
      %s440 = sphi 0, %s440
      %s442 = sphi 0, %s440
      %s443 = sphi 0, %s442
      %s457 = sphi 0, %s443
      %s461 = sphi 0, %s461
      %s463 = sphi 0, %s461
      %s464 = sphi 0, %s463
      %s478 = sphi 0, %s464
      %s484 = sphi 0, %s486
      %s487 = sphi 0, %s484
      %s488 = sphi 0, %s487
      %s504 = sphi 0, %s488
      %s510 = sphi 0, %s512
      %s513 = sphi 0, %s510
      %s514 = sphi 0, %s513
      %s530 = sphi 0, %s514
    $region4: #{fine_tuned_bert_forward.7} parent=1 // loop_header_branch
      %42 = sbr.rel (%p40) target = $region8
    $region5: #{fine_tuned_bert_forward.7} parent=1 // loop_body
      %s44 = ssub.s32 %s39, 1
      %s45 = ssub.s32 %s39, 2
      %s46 = sadd.s32 %s39, 1
      %s47 = ssub.s32 %s39, %s46
      %p48 = scmp.eq.s32.totalorder %s47, 0
      %s50 = sadd.s32 %s49, 1
      %s51 = scalar_select %p48, %s49, %s50
      %p54 = pneg %p48
      %p55 = scmp.eq.s32.totalorder %s39, 1
      %p56 = por %p54, %p55
      %p57 = scmp.ne.s32.totalorder %s49, %s52
      %p58 = scmp.eq.s32.totalorder %s39, 0
      %p59 = por %p57, %p58
      %p60 = scmp.ne.s32.totalorder %s49, %s52
      %p61 = scmp.eq.s32.totalorder %s44, 1
      %p62 = por %p60, %p61
      %p63 = scmp.ne.s32.totalorder %s52, %s53
      %p64 = scmp.eq.s32.totalorder %s44, 0
      %p65 = por %p63, %p64
      %p66 = scmp.ne.s32.totalorder %s52, %s53
      %p67 = scmp.eq.s32.totalorder %s45, 1
      %p68 = por %p66, %p67
      %p70 = scmp.ne.s32.totalorder %s53, %s69
      %p71 = scmp.eq.s32.totalorder %s45, 0
      %p72 = por %p70, %p71
      %s73 = ssub.s32 %s39, %s46
      %p74 = scmp.eq.s32.totalorder %s73, 0
      %s76 = sadd.s32 %s75, 1
      %s77 = scalar_select %p74, %s75, %s76
      %p80 = pneg %p74
      %p81 = scmp.eq.s32.totalorder %s39, 1
      %p82 = por %p80, %p81
      %p83 = scmp.ne.s32.totalorder %s75, %s78
      %p84 = scmp.eq.s32.totalorder %s39, 0
      %p85 = por %p83, %p84
      %p86 = scmp.ne.s32.totalorder %s75, %s78
      %p87 = scmp.eq.s32.totalorder %s44, 1
      %p88 = por %p86, %p87
      %p89 = scmp.ne.s32.totalorder %s78, %s79
      %p90 = scmp.eq.s32.totalorder %s44, 0
      %p91 = por %p89, %p90
      %p92 = scmp.ne.s32.totalorder %s78, %s79
      %p93 = scmp.eq.s32.totalorder %s45, 1
      %p94 = por %p92, %p93
      %p96 = scmp.ne.s32.totalorder %s79, %s95
      %p97 = scmp.eq.s32.totalorder %s45, 0
      %p98 = por %p96, %p97
      %s99 = ssub.s32 %s39, %s46
      %p100 = scmp.eq.s32.totalorder %s99, 0
      %s102 = sadd.s32 %s101, 1
      %s103 = scalar_select %p100, %s101, %s102
      %p106 = pneg %p100
      %p107 = scmp.eq.s32.totalorder %s39, 1
      %p108 = por %p106, %p107
      %p109 = scmp.ne.s32.totalorder %s101, %s104
      %p110 = scmp.eq.s32.totalorder %s39, 0
      %p111 = por %p109, %p110
      %p112 = scmp.ne.s32.totalorder %s101, %s104
      %p113 = scmp.eq.s32.totalorder %s44, 1
      %p114 = por %p112, %p113
      %p115 = scmp.ne.s32.totalorder %s104, %s105
      %p116 = scmp.eq.s32.totalorder %s44, 0
      %p117 = por %p115, %p116
      %p118 = scmp.ne.s32.totalorder %s104, %s105
      %p119 = scmp.eq.s32.totalorder %s45, 1
      %p120 = por %p118, %p119
      %p122 = scmp.ne.s32.totalorder %s105, %s121
      %p123 = scmp.eq.s32.totalorder %s45, 0
      %p124 = por %p122, %p123
      %s126 = sadd.s32 %s125, 1
      %p129 = scmp.eq.s32.totalorder %s39, 1
      %p130 = scmp.ne.s32.totalorder %s125, %s127
      %p131 = scmp.eq.s32.totalorder %s39, 0
      %p132 = por %p130, %p131
      %p133 = scmp.ne.s32.totalorder %s125, %s127
      %p134 = scmp.eq.s32.totalorder %s44, 1
      %p135 = por %p133, %p134
      %p136 = scmp.ne.s32.totalorder %s127, %s128
      %p137 = scmp.eq.s32.totalorder %s44, 0
      %p138 = por %p136, %p137
      %p139 = scmp.ne.s32.totalorder %s127, %s128
      %p140 = scmp.eq.s32.totalorder %s45, 1
      %p141 = por %p139, %p140
      %p143 = scmp.ne.s32.totalorder %s128, %s142
      %p144 = scmp.eq.s32.totalorder %s45, 0
      %p145 = por %p143, %p144
      %s147 = sadd.s32 %s146, 1
      %p150 = scmp.eq.s32.totalorder %s39, 1
      %p151 = scmp.ne.s32.totalorder %s146, %s148
      %p152 = scmp.eq.s32.totalorder %s39, 0
      %p153 = por %p151, %p152
      %p154 = scmp.ne.s32.totalorder %s146, %s148
      %p155 = scmp.eq.s32.totalorder %s44, 1
      %p156 = por %p154, %p155
      %p157 = scmp.ne.s32.totalorder %s148, %s149
      %p158 = scmp.eq.s32.totalorder %s44, 0
      %p159 = por %p157, %p158
      %p160 = scmp.ne.s32.totalorder %s148, %s149
      %p161 = scmp.eq.s32.totalorder %s45, 1
      %p162 = por %p160, %p161
      %p164 = scmp.ne.s32.totalorder %s149, %s163
      %p165 = scmp.eq.s32.totalorder %s45, 0
      %p166 = por %p164, %p165
      %s168 = sadd.s32 %s167, 1
      %p171 = scmp.eq.s32.totalorder %s39, 1
      %p172 = scmp.ne.s32.totalorder %s167, %s169
      %p173 = scmp.eq.s32.totalorder %s39, 0
      %p174 = por %p172, %p173
      %p175 = scmp.ne.s32.totalorder %s167, %s169
      %p176 = scmp.eq.s32.totalorder %s44, 1
      %p177 = por %p175, %p176
      %p178 = scmp.ne.s32.totalorder %s169, %s170
      %p179 = scmp.eq.s32.totalorder %s44, 0
      %p180 = por %p178, %p179
      %p181 = scmp.ne.s32.totalorder %s169, %s170
      %p182 = scmp.eq.s32.totalorder %s45, 1
      %p183 = por %p181, %p182
      %p185 = scmp.ne.s32.totalorder %s170, %s184
      %p186 = scmp.eq.s32.totalorder %s45, 0
      %p187 = por %p185, %p186
      %s189 = sadd.s32 %s188, 1
      %p192 = scmp.eq.s32.totalorder %s39, 1
      %p193 = scmp.ne.s32.totalorder %s188, %s190
      %p194 = scmp.eq.s32.totalorder %s39, 0
      %p195 = por %p193, %p194
      %p196 = scmp.ne.s32.totalorder %s188, %s190
      %p197 = scmp.eq.s32.totalorder %s44, 1
      %p198 = por %p196, %p197
      %p199 = scmp.ne.s32.totalorder %s190, %s191
      %p200 = scmp.eq.s32.totalorder %s44, 0
      %p201 = por %p199, %p200
      %p202 = scmp.ne.s32.totalorder %s190, %s191
      %p203 = scmp.eq.s32.totalorder %s45, 1
      %p204 = por %p202, %p203
      %p206 = scmp.ne.s32.totalorder %s191, %s205
      %p207 = scmp.eq.s32.totalorder %s45, 0
      %p208 = por %p206, %p207
      %s210 = sadd.s32 %s209, 1
      %p213 = scmp.eq.s32.totalorder %s39, 1
      %p214 = scmp.ne.s32.totalorder %s209, %s211
      %p215 = scmp.eq.s32.totalorder %s39, 0
      %p216 = por %p214, %p215
      %p217 = scmp.ne.s32.totalorder %s209, %s211
      %p218 = scmp.eq.s32.totalorder %s44, 1
      %p219 = por %p217, %p218
      %p220 = scmp.ne.s32.totalorder %s211, %s212
      %p221 = scmp.eq.s32.totalorder %s44, 0
      %p222 = por %p220, %p221
      %p223 = scmp.ne.s32.totalorder %s211, %s212
      %p224 = scmp.eq.s32.totalorder %s45, 1
      %p225 = por %p223, %p224
      %p227 = scmp.ne.s32.totalorder %s212, %s226
      %p228 = scmp.eq.s32.totalorder %s45, 0
      %p229 = por %p227, %p228
      %s231 = sadd.s32 %s230, 1
      %p234 = scmp.eq.s32.totalorder %s39, 1
      %p235 = scmp.ne.s32.totalorder %s230, %s232
      %p236 = scmp.eq.s32.totalorder %s39, 0
      %p237 = por %p235, %p236
      %p238 = scmp.ne.s32.totalorder %s230, %s232
      %p239 = scmp.eq.s32.totalorder %s44, 1
      %p240 = por %p238, %p239
      %p241 = scmp.ne.s32.totalorder %s232, %s233
      %p242 = scmp.eq.s32.totalorder %s44, 0
      %p243 = por %p241, %p242
      %p244 = scmp.ne.s32.totalorder %s232, %s233
      %p245 = scmp.eq.s32.totalorder %s45, 1
      %p246 = por %p244, %p245
      %p248 = scmp.ne.s32.totalorder %s233, %s247
      %p249 = scmp.eq.s32.totalorder %s45, 0
      %p250 = por %p248, %p249
      %s252 = sadd.s32 %s251, 1
      %p255 = scmp.eq.s32.totalorder %s39, 1
      %p256 = scmp.ne.s32.totalorder %s251, %s253
      %p257 = scmp.eq.s32.totalorder %s39, 0
      %p258 = por %p256, %p257
      %p259 = scmp.ne.s32.totalorder %s251, %s253
      %p260 = scmp.eq.s32.totalorder %s44, 1
      %p261 = por %p259, %p260
      %p262 = scmp.ne.s32.totalorder %s253, %s254
      %p263 = scmp.eq.s32.totalorder %s44, 0
      %p264 = por %p262, %p263
      %p265 = scmp.ne.s32.totalorder %s253, %s254
      %p266 = scmp.eq.s32.totalorder %s45, 1
      %p267 = por %p265, %p266
      %p269 = scmp.ne.s32.totalorder %s254, %s268
      %p270 = scmp.eq.s32.totalorder %s45, 0
      %p271 = por %p269, %p270
      %s273 = sadd.s32 %s272, 1
      %p276 = scmp.eq.s32.totalorder %s39, 1
      %p277 = scmp.ne.s32.totalorder %s272, %s274
      %p278 = scmp.eq.s32.totalorder %s39, 0
      %p279 = por %p277, %p278
      %p280 = scmp.ne.s32.totalorder %s272, %s274
      %p281 = scmp.eq.s32.totalorder %s44, 1
      %p282 = por %p280, %p281
      %p283 = scmp.ne.s32.totalorder %s274, %s275
      %p284 = scmp.eq.s32.totalorder %s44, 0
      %p285 = por %p283, %p284
      %p286 = scmp.ne.s32.totalorder %s274, %s275
      %p287 = scmp.eq.s32.totalorder %s45, 1
      %p288 = por %p286, %p287
      %p290 = scmp.ne.s32.totalorder %s275, %s289
      %p291 = scmp.eq.s32.totalorder %s45, 0
      %p292 = por %p290, %p291
      %s294 = sadd.s32 %s293, 1
      %p297 = scmp.eq.s32.totalorder %s39, 1
      %p298 = scmp.ne.s32.totalorder %s293, %s295
      %p299 = scmp.eq.s32.totalorder %s39, 0
      %p300 = por %p298, %p299
      %p301 = scmp.ne.s32.totalorder %s293, %s295
      %p302 = scmp.eq.s32.totalorder %s44, 1
      %p303 = por %p301, %p302
      %p304 = scmp.ne.s32.totalorder %s295, %s296
      %p305 = scmp.eq.s32.totalorder %s44, 0
      %p306 = por %p304, %p305
      %p307 = scmp.ne.s32.totalorder %s295, %s296
      %p308 = scmp.eq.s32.totalorder %s45, 1
      %p309 = por %p307, %p308
      %p311 = scmp.ne.s32.totalorder %s296, %s310
      %p312 = scmp.eq.s32.totalorder %s45, 0
      %p313 = por %p311, %p312
      %s315 = sadd.s32 %s314, 1
      %p318 = scmp.eq.s32.totalorder %s39, 1
      %p319 = scmp.ne.s32.totalorder %s314, %s316
      %p320 = scmp.eq.s32.totalorder %s39, 0
      %p321 = por %p319, %p320
      %p322 = scmp.ne.s32.totalorder %s314, %s316
      %p323 = scmp.eq.s32.totalorder %s44, 1
      %p324 = por %p322, %p323
      %p325 = scmp.ne.s32.totalorder %s316, %s317
      %p326 = scmp.eq.s32.totalorder %s44, 0
      %p327 = por %p325, %p326
      %p328 = scmp.ne.s32.totalorder %s316, %s317
      %p329 = scmp.eq.s32.totalorder %s45, 1
      %p330 = por %p328, %p329
      %p332 = scmp.ne.s32.totalorder %s317, %s331
      %p333 = scmp.eq.s32.totalorder %s45, 0
      %p334 = por %p332, %p333
      %s336 = sadd.s32 %s335, 1
      %p339 = scmp.eq.s32.totalorder %s39, 1
      %p340 = scmp.ne.s32.totalorder %s335, %s337
      %p341 = scmp.eq.s32.totalorder %s39, 0
      %p342 = por %p340, %p341
      %p343 = scmp.ne.s32.totalorder %s335, %s337
      %p344 = scmp.eq.s32.totalorder %s44, 1
      %p345 = por %p343, %p344
      %p346 = scmp.ne.s32.totalorder %s337, %s338
      %p347 = scmp.eq.s32.totalorder %s44, 0
      %p348 = por %p346, %p347
      %p349 = scmp.ne.s32.totalorder %s337, %s338
      %p350 = scmp.eq.s32.totalorder %s45, 1
      %p351 = por %p349, %p350
      %p353 = scmp.ne.s32.totalorder %s338, %s352
      %p354 = scmp.eq.s32.totalorder %s45, 0
      %p355 = por %p353, %p354
      %s357 = sadd.s32 %s356, 1
      %p360 = scmp.eq.s32.totalorder %s39, 1
      %p361 = scmp.ne.s32.totalorder %s356, %s358
      %p362 = scmp.eq.s32.totalorder %s39, 0
      %p363 = por %p361, %p362
      %p364 = scmp.ne.s32.totalorder %s356, %s358
      %p365 = scmp.eq.s32.totalorder %s44, 1
      %p366 = por %p364, %p365
      %p367 = scmp.ne.s32.totalorder %s358, %s359
      %p368 = scmp.eq.s32.totalorder %s44, 0
      %p369 = por %p367, %p368
      %p370 = scmp.ne.s32.totalorder %s358, %s359
      %p371 = scmp.eq.s32.totalorder %s45, 1
      %p372 = por %p370, %p371
      %p374 = scmp.ne.s32.totalorder %s359, %s373
      %p375 = scmp.eq.s32.totalorder %s45, 0
      %p376 = por %p374, %p375
      %s378 = sadd.s32 %s377, 1
      %p381 = scmp.eq.s32.totalorder %s39, 1
      %p382 = scmp.ne.s32.totalorder %s377, %s379
      %p383 = scmp.eq.s32.totalorder %s39, 0
      %p384 = por %p382, %p383
      %p385 = scmp.ne.s32.totalorder %s377, %s379
      %p386 = scmp.eq.s32.totalorder %s44, 1
      %p387 = por %p385, %p386
      %p388 = scmp.ne.s32.totalorder %s379, %s380
      %p389 = scmp.eq.s32.totalorder %s44, 0
      %p390 = por %p388, %p389
      %p391 = scmp.ne.s32.totalorder %s379, %s380
      %p392 = scmp.eq.s32.totalorder %s45, 1
      %p393 = por %p391, %p392
      %p395 = scmp.ne.s32.totalorder %s380, %s394
      %p396 = scmp.eq.s32.totalorder %s45, 0
      %p397 = por %p395, %p396
      %s399 = sadd.s32 %s398, 1
      %p402 = scmp.eq.s32.totalorder %s39, 1
      %p403 = scmp.ne.s32.totalorder %s398, %s400
      %p404 = scmp.eq.s32.totalorder %s39, 0
      %p405 = por %p403, %p404
      %p406 = scmp.ne.s32.totalorder %s398, %s400
      %p407 = scmp.eq.s32.totalorder %s44, 1
      %p408 = por %p406, %p407
      %p409 = scmp.ne.s32.totalorder %s400, %s401
      %p410 = scmp.eq.s32.totalorder %s44, 0
      %p411 = por %p409, %p410
      %p412 = scmp.ne.s32.totalorder %s400, %s401
      %p413 = scmp.eq.s32.totalorder %s45, 1
      %p414 = por %p412, %p413
      %p416 = scmp.ne.s32.totalorder %s401, %s415
      %p417 = scmp.eq.s32.totalorder %s45, 0
      %p418 = por %p416, %p417
      %s420 = sadd.s32 %s419, 1
      %p423 = scmp.eq.s32.totalorder %s39, 1
      %p424 = scmp.ne.s32.totalorder %s419, %s421
      %p425 = scmp.eq.s32.totalorder %s39, 0
      %p426 = por %p424, %p425
      %p427 = scmp.ne.s32.totalorder %s419, %s421
      %p428 = scmp.eq.s32.totalorder %s44, 1
      %p429 = por %p427, %p428
      %p430 = scmp.ne.s32.totalorder %s421, %s422
      %p431 = scmp.eq.s32.totalorder %s44, 0
      %p432 = por %p430, %p431
      %p433 = scmp.ne.s32.totalorder %s421, %s422
      %p434 = scmp.eq.s32.totalorder %s45, 1
      %p435 = por %p433, %p434
      %p437 = scmp.ne.s32.totalorder %s422, %s436
      %p438 = scmp.eq.s32.totalorder %s45, 0
      %p439 = por %p437, %p438
      %s441 = sadd.s32 %s440, 1
      %p444 = scmp.eq.s32.totalorder %s39, 1
      %p445 = scmp.ne.s32.totalorder %s440, %s442
      %p446 = scmp.eq.s32.totalorder %s39, 0
      %p447 = por %p445, %p446
      %p448 = scmp.ne.s32.totalorder %s440, %s442
      %p449 = scmp.eq.s32.totalorder %s44, 1
      %p450 = por %p448, %p449
      %p451 = scmp.ne.s32.totalorder %s442, %s443
      %p452 = scmp.eq.s32.totalorder %s44, 0
      %p453 = por %p451, %p452
      %p454 = scmp.ne.s32.totalorder %s442, %s443
      %p455 = scmp.eq.s32.totalorder %s45, 1
      %p456 = por %p454, %p455
      %p458 = scmp.ne.s32.totalorder %s443, %s457
      %p459 = scmp.eq.s32.totalorder %s45, 0
      %p460 = por %p458, %p459
      %s462 = sadd.s32 %s461, 1
      %p465 = scmp.eq.s32.totalorder %s39, 1
      %p466 = scmp.ne.s32.totalorder %s461, %s463
      %p467 = scmp.eq.s32.totalorder %s39, 0
      %p468 = por %p466, %p467
      %p469 = scmp.ne.s32.totalorder %s461, %s463
      %p470 = scmp.eq.s32.totalorder %s44, 1
      %p471 = por %p469, %p470
      %p472 = scmp.ne.s32.totalorder %s463, %s464
      %p473 = scmp.eq.s32.totalorder %s44, 0
      %p474 = por %p472, %p473
      %p475 = scmp.ne.s32.totalorder %s463, %s464
      %p476 = scmp.eq.s32.totalorder %s45, 1
      %p477 = por %p475, %p476
      %p479 = scmp.ne.s32.totalorder %s464, %s478
      %p480 = scmp.eq.s32.totalorder %s45, 0
      %p481 = por %p479, %p480
      %s482 = ssub.s32 %s39, %s46
      %p483 = scmp.eq.s32.totalorder %s482, 0
      %s485 = sadd.s32 %s484, 1
      %s486 = scalar_select %p483, %s484, %s485
      %p489 = pneg %p483
      %p490 = scmp.eq.s32.totalorder %s39, 1
      %p491 = por %p489, %p490
      %p492 = scmp.ne.s32.totalorder %s484, %s487
      %p493 = scmp.eq.s32.totalorder %s39, 0
      %p494 = por %p492, %p493
      %p495 = scmp.ne.s32.totalorder %s484, %s487
      %p496 = scmp.eq.s32.totalorder %s44, 1
      %p497 = por %p495, %p496
      %p498 = scmp.ne.s32.totalorder %s487, %s488
      %p499 = scmp.eq.s32.totalorder %s44, 0
      %p500 = por %p498, %p499
      %p501 = scmp.ne.s32.totalorder %s487, %s488
      %p502 = scmp.eq.s32.totalorder %s45, 1
      %p503 = por %p501, %p502
      %p505 = scmp.ne.s32.totalorder %s488, %s504
      %p506 = scmp.eq.s32.totalorder %s45, 0
      %p507 = por %p505, %p506
      %s508 = ssub.s32 %s39, %s46
      %p509 = scmp.eq.s32.totalorder %s508, 0
      %s511 = sadd.s32 %s510, 1
      %s512 = scalar_select %p509, %s510, %s511
      %p515 = pneg %p509
      %p516 = scmp.eq.s32.totalorder %s39, 1
      %p517 = por %p515, %p516
      %p518 = scmp.ne.s32.totalorder %s510, %s513
      %p519 = scmp.eq.s32.totalorder %s39, 0
      %p520 = por %p518, %p519
      %p521 = scmp.ne.s32.totalorder %s510, %s513
      %p522 = scmp.eq.s32.totalorder %s44, 1
      %p523 = por %p521, %p522
      %p524 = scmp.ne.s32.totalorder %s513, %s514
      %p525 = scmp.eq.s32.totalorder %s44, 0
      %p526 = por %p524, %p525
      %p527 = scmp.ne.s32.totalorder %s513, %s514
      %p528 = scmp.eq.s32.totalorder %s45, 1
      %p529 = por %p527, %p528
      %p531 = scmp.ne.s32.totalorder %s514, %s530
      %p532 = scmp.eq.s32.totalorder %s45, 0
      %p533 = por %p531, %p532
      %p534 = scmp.le.s32.totalorder 1, %s39
      %p535 = scmp.lt.s32.totalorder %s39, 3
      %p536 = pnand %p534, %p535
      %p537 = pneg %p536
      // Predicated region
      $region9: #{fine_tuned_bert_forward.7} parent=5 // pred_check
        _
      $region10: #{fine_tuned_bert_forward.7} parent=5 // pred_check_branch
        %539 = sbr.rel (%p536) target = $region12
      $region11: #{fine_tuned_bert_forward.7} parent=5 // pred_region
        %s540 = ssub.s32 %s39, 1
        // Predicated region
        $region13: #{fine_tuned_bert_forward.7} parent=11 // pred_check
          %p541 = pneg %p138
        $region14: #{fine_tuned_bert_forward.7} parent=11 // pred_check_branch
          %543 = sbr.rel (%p541) target = $region16
        $region15: #{fine_tuned_bert_forward.7} parent=11 // pred_region
          %545 = vsyncadd [#allocation3], 0
          %s546 = sshll.u32 %s3, 4
          %s547 = int_to_ptr.hbm [resolvable:$true] %s546
          %s548 = sshll.u32 [#allocation2], 4
          %s549 = int_to_ptr.vmem [resolvable:$true] %s548
          %554 = dma.hbm_to_vmem [thread:$0]  %s547, 256, %s549, [#allocation3], 64, 64, 4
        $region16: #{fine_tuned_bert_forward.7} parent=11 // pred_fallthru
          _
        // Predicated region
        $region17: #{fine_tuned_bert_forward.7} parent=11 // pred_check
          %p555 = pneg %p159
        $region18: #{fine_tuned_bert_forward.7} parent=11 // pred_check_branch
          %557 = sbr.rel (%p555) target = $region20
        $region19: #{fine_tuned_bert_forward.7} parent=11 // pred_region
          %559 = vsyncadd [#allocation6], 0
          %s561 = sshll.u32 %s4, 4
          %s562 = int_to_ptr.hbm [resolvable:$true] %s561
          %s563 = sshll.u32 [#allocation5], 4
          %s564 = int_to_ptr.vmem [resolvable:$true] %s563
          %566 = dma.hbm_to_vmem [thread:$0]  %s562, 16, %s564, [#allocation6]
        $region20: #{fine_tuned_bert_forward.7} parent=11 // pred_fallthru
          _
        // Predicated region
        $region21: #{fine_tuned_bert_forward.7} parent=11 // pred_check
          %p567 = pneg %p180
        $region22: #{fine_tuned_bert_forward.7} parent=11 // pred_check_branch
          %569 = sbr.rel (%p567) target = $region24
        $region23: #{fine_tuned_bert_forward.7} parent=11 // pred_region
          %571 = vsyncadd [#allocation6], 0
          %s572 = sshll.u32 %s5, 4
          %s573 = int_to_ptr.hbm [resolvable:$true] %s572
          %s574 = sshll.u32 [#allocation7], 4
          %s575 = int_to_ptr.vmem [resolvable:$true] %s574
          %580 = dma.hbm_to_vmem [thread:$0]  %s573, 128, %s575, [#allocation6], 64, 64, 4
        $region24: #{fine_tuned_bert_forward.7} parent=11 // pred_fallthru
          _
        // Predicated region
        $region25: #{fine_tuned_bert_forward.7} parent=11 // pred_check
          %p581 = pneg %p201
        $region26: #{fine_tuned_bert_forward.7} parent=11 // pred_check_branch
          %583 = sbr.rel (%p581) target = $region28
        $region27: #{fine_tuned_bert_forward.7} parent=11 // pred_region
          %585 = vsyncadd [#allocation9], 0
          %s587 = sshll.u32 %s6, 4
          %s588 = int_to_ptr.hbm [resolvable:$true] %s587
          %s589 = sshll.u32 [#allocation8], 4
          %s590 = int_to_ptr.vmem [resolvable:$true] %s589
          %592 = dma.hbm_to_vmem [thread:$0]  %s588, 16, %s590, [#allocation9]
        $region28: #{fine_tuned_bert_forward.7} parent=11 // pred_fallthru
          _
        // Predicated region
        $region29: #{fine_tuned_bert_forward.7} parent=11 // pred_check
          %p593 = pneg %p222
        $region30: #{fine_tuned_bert_forward.7} parent=11 // pred_check_branch
          %595 = sbr.rel (%p593) target = $region32
        $region31: #{fine_tuned_bert_forward.7} parent=11 // pred_region
          %597 = vsyncadd [#allocation9], 0
          %s598 = sshll.u32 %s7, 4
          %s599 = int_to_ptr.hbm [resolvable:$true] %s598
          %s600 = sshll.u32 [#allocation10], 4
          %s601 = int_to_ptr.vmem [resolvable:$true] %s600
          %606 = dma.hbm_to_vmem [thread:$0]  %s599, 128, %s601, [#allocation9], 64, 64, 4
        $region32: #{fine_tuned_bert_forward.7} parent=11 // pred_fallthru
          _
        // Predicated region
        $region33: #{fine_tuned_bert_forward.7} parent=11 // pred_check
          %p607 = pneg %p243
        $region34: #{fine_tuned_bert_forward.7} parent=11 // pred_check_branch
          %609 = sbr.rel (%p607) target = $region36
        $region35: #{fine_tuned_bert_forward.7} parent=11 // pred_region
          %611 = vsyncadd [#allocation12], 0
          %s613 = sshll.u32 %s8, 4
          %s614 = int_to_ptr.hbm [resolvable:$true] %s613
          %s615 = sshll.u32 [#allocation11], 4
          %s616 = int_to_ptr.vmem [resolvable:$true] %s615
          %618 = dma.hbm_to_vmem [thread:$0]  %s614, 16, %s616, [#allocation12]
        $region36: #{fine_tuned_bert_forward.7} parent=11 // pred_fallthru
          _
        // Predicated region
        $region37: #{fine_tuned_bert_forward.7} parent=11 // pred_check
          %p619 = pneg %p264
        $region38: #{fine_tuned_bert_forward.7} parent=11 // pred_check_branch
          %621 = sbr.rel (%p619) target = $region40
        $region39: #{fine_tuned_bert_forward.7} parent=11 // pred_region
          _
        $region40: #{fine_tuned_bert_forward.7} parent=11 // pred_fallthru
          _
        // Predicated region
        $region41: #{fine_tuned_bert_forward.7} parent=11 // pred_check
          %p622 = pneg %p285
        $region42: #{fine_tuned_bert_forward.7} parent=11 // pred_check_branch
          %624 = sbr.rel (%p622) target = $region44
        $region43: #{fine_tuned_bert_forward.7} parent=11 // pred_region
          %626 = vsyncadd [#allocation12], 0
          %s628 = sshll.u32 %s10, 4
          %s629 = int_to_ptr.hbm [resolvable:$true] %s628
          %s630 = sshll.u32 [#allocation13], 4
          %s631 = int_to_ptr.vmem [resolvable:$true] %s630
          %633 = dma.hbm_to_vmem [thread:$0]  %s629, 16, %s631, [#allocation12]
        $region44: #{fine_tuned_bert_forward.7} parent=11 // pred_fallthru
          _
        // Predicated region
        $region45: #{fine_tuned_bert_forward.7} parent=11 // pred_check
          %p634 = pneg %p306
        $region46: #{fine_tuned_bert_forward.7} parent=11 // pred_check_branch
          %636 = sbr.rel (%p634) target = $region48
        $region47: #{fine_tuned_bert_forward.7} parent=11 // pred_region
          _
        $region48: #{fine_tuned_bert_forward.7} parent=11 // pred_fallthru
          _
        // Predicated region
        $region49: #{fine_tuned_bert_forward.7} parent=11 // pred_check
          %p637 = pneg %p327
        $region50: #{fine_tuned_bert_forward.7} parent=11 // pred_check_branch
          %639 = sbr.rel (%p637) target = $region52
        $region51: #{fine_tuned_bert_forward.7} parent=11 // pred_region
          %641 = vsyncadd [#allocation15], 0
          %s643 = sshll.u32 %s12, 4
          %s644 = int_to_ptr.hbm [resolvable:$true] %s643
          %s645 = sshll.u32 [#allocation14], 4
          %s646 = int_to_ptr.vmem [resolvable:$true] %s645
          %648 = dma.hbm_to_vmem [thread:$0]  %s644, 16, %s646, [#allocation15]
        $region52: #{fine_tuned_bert_forward.7} parent=11 // pred_fallthru
          _
        // Predicated region
        $region53: #{fine_tuned_bert_forward.7} parent=11 // pred_check
          %p649 = pneg %p348
        $region54: #{fine_tuned_bert_forward.7} parent=11 // pred_check_branch
          %651 = sbr.rel (%p649) target = $region56
        $region55: #{fine_tuned_bert_forward.7} parent=11 // pred_region
          _
        $region56: #{fine_tuned_bert_forward.7} parent=11 // pred_fallthru
          _
        // Predicated region
        $region57: #{fine_tuned_bert_forward.7} parent=11 // pred_check
          %p652 = pneg %p369
        $region58: #{fine_tuned_bert_forward.7} parent=11 // pred_check_branch
          %654 = sbr.rel (%p652) target = $region60
        $region59: #{fine_tuned_bert_forward.7} parent=11 // pred_region
          _
        $region60: #{fine_tuned_bert_forward.7} parent=11 // pred_fallthru
          _
        // Predicated region
        $region61: #{fine_tuned_bert_forward.7} parent=11 // pred_check
          %p655 = pneg %p390
        $region62: #{fine_tuned_bert_forward.7} parent=11 // pred_check_branch
          %657 = sbr.rel (%p655) target = $region64
        $region63: #{fine_tuned_bert_forward.7} parent=11 // pred_region
          _
        $region64: #{fine_tuned_bert_forward.7} parent=11 // pred_fallthru
          _
        // Predicated region
        $region65: #{fine_tuned_bert_forward.7} parent=11 // pred_check
          %p658 = pneg %p411
        $region66: #{fine_tuned_bert_forward.7} parent=11 // pred_check_branch
          %660 = sbr.rel (%p658) target = $region68
        $region67: #{fine_tuned_bert_forward.7} parent=11 // pred_region
          _
        $region68: #{fine_tuned_bert_forward.7} parent=11 // pred_fallthru
          _
        // Predicated region
        $region69: #{fine_tuned_bert_forward.7} parent=11 // pred_check
          %p661 = pneg %p432
        $region70: #{fine_tuned_bert_forward.7} parent=11 // pred_check_branch
          %663 = sbr.rel (%p661) target = $region72
        $region71: #{fine_tuned_bert_forward.7} parent=11 // pred_region
          _
        $region72: #{fine_tuned_bert_forward.7} parent=11 // pred_fallthru
          _
        // Predicated region
        $region73: #{fine_tuned_bert_forward.7} parent=11 // pred_check
          %p664 = pneg %p453
        $region74: #{fine_tuned_bert_forward.7} parent=11 // pred_check_branch
          %666 = sbr.rel (%p664) target = $region76
        $region75: #{fine_tuned_bert_forward.7} parent=11 // pred_region
          _
        $region76: #{fine_tuned_bert_forward.7} parent=11 // pred_fallthru
          _
        // Predicated region
        $region77: #{fine_tuned_bert_forward.7} parent=11 // pred_check
          %p667 = pneg %p474
        $region78: #{fine_tuned_bert_forward.7} parent=11 // pred_check_branch
          %669 = sbr.rel (%p667) target = $region80
        $region79: #{fine_tuned_bert_forward.7} parent=11 // pred_region
          _
        $region80: #{fine_tuned_bert_forward.7} parent=11 // pred_fallthru
          _
      $region12: #{fine_tuned_bert_forward.7} parent=5 // pred_fallthru
        _
      %p670 = scmp.lt.s32.totalorder %s39, 2
      // Predicated region
      $region81: #{fine_tuned_bert_forward.7} parent=5 // pred_check
        %p671 = pneg %p670
      $region82: #{fine_tuned_bert_forward.7} parent=5 // pred_check_branch
        %673 = sbr.rel (%p671) target = $region84
      $region83: #{fine_tuned_bert_forward.7} parent=5 // pred_region
        // Predicated region
        $region85: #{fine_tuned_bert_forward.7} parent=83 // pred_check
          %p674 = pneg %p59
        $region86: #{fine_tuned_bert_forward.7} parent=83 // pred_check_branch
          %676 = sbr.rel (%p674) target = $region88
        $region87: #{fine_tuned_bert_forward.7} parent=83 // pred_region
          %p677 = scmp.lt.s32.totalorder %s39, 1
          %s678 = scalar_select %p677, %s39, 1
          %s679 = smul.addr %s678, 8
          %s680 = scalar_lea.vmem %s0, %s679
        $region88: #{fine_tuned_bert_forward.7} parent=83 // pred_fallthru
          _
        // Predicated region
        $region89: #{fine_tuned_bert_forward.7} parent=83 // pred_check
          %p681 = pneg %p85
        $region90: #{fine_tuned_bert_forward.7} parent=83 // pred_check_branch
          %683 = sbr.rel (%p681) target = $region92
        $region91: #{fine_tuned_bert_forward.7} parent=83 // pred_region
          %p684 = scmp.lt.s32.totalorder %s39, 1
          %s685 = scalar_select %p684, %s39, 1
          %s686 = scalar_lea.vmem %s1, %s685
        $region92: #{fine_tuned_bert_forward.7} parent=83 // pred_fallthru
          _
        // Predicated region
        $region93: #{fine_tuned_bert_forward.7} parent=83 // pred_check
          %p687 = pneg %p111
        $region94: #{fine_tuned_bert_forward.7} parent=83 // pred_check_branch
          %689 = sbr.rel (%p687) target = $region96
        $region95: #{fine_tuned_bert_forward.7} parent=83 // pred_region
          %p690 = scmp.lt.s32.totalorder %s39, 1
          %s691 = scalar_select %p690, %s39, 1
          %s692 = scalar_lea.vmem %s2, %s691
        $region96: #{fine_tuned_bert_forward.7} parent=83 // pred_fallthru
          _
      $region84: #{fine_tuned_bert_forward.7} parent=5 // pred_fallthru
        _
      %p693 = scmp.le.s32.totalorder 1, %s39
      %p694 = scmp.lt.s32.totalorder %s39, 3
      %p695 = pnand %p693, %p694
      %p696 = pneg %p695
      // Predicated region
      $region97: #{fine_tuned_bert_forward.7} parent=5 // pred_check
        _
      $region98: #{fine_tuned_bert_forward.7} parent=5 // pred_check_branch
        %698 = sbr.rel (%p695) target = $region100
      $region99: #{fine_tuned_bert_forward.7} parent=5 // pred_region
        %s699 = ssub.s32 %s39, 1
        // Predicated region
        $region101: #{fine_tuned_bert_forward.7} parent=99 // pred_check
          %p700 = pneg %p138
        $region102: #{fine_tuned_bert_forward.7} parent=99 // pred_check_branch
          %702 = sbr.rel (%p700) target = $region104
        $region103: #{fine_tuned_bert_forward.7} parent=99 // pred_region
          %704 = dma.done [#allocation3], 256
        $region104: #{fine_tuned_bert_forward.7} parent=99 // pred_fallthru
          _
        // Predicated region
        $region105: #{fine_tuned_bert_forward.7} parent=99 // pred_check
          %p705 = pneg %p159
        $region106: #{fine_tuned_bert_forward.7} parent=99 // pred_check_branch
          %707 = sbr.rel (%p705) target = $region108
        $region107: #{fine_tuned_bert_forward.7} parent=99 // pred_region
          %709 = dma.done [#allocation6], 16
        $region108: #{fine_tuned_bert_forward.7} parent=99 // pred_fallthru
          _
        // Predicated region
        $region109: #{fine_tuned_bert_forward.7} parent=99 // pred_check
          %p710 = pneg %p180
        $region110: #{fine_tuned_bert_forward.7} parent=99 // pred_check_branch
          %712 = sbr.rel (%p710) target = $region112
        $region111: #{fine_tuned_bert_forward.7} parent=99 // pred_region
          %714 = dma.done [#allocation6], 128
        $region112: #{fine_tuned_bert_forward.7} parent=99 // pred_fallthru
          _
        // Predicated region
        $region113: #{fine_tuned_bert_forward.7} parent=99 // pred_check
          %p715 = pneg %p201
        $region114: #{fine_tuned_bert_forward.7} parent=99 // pred_check_branch
          %717 = sbr.rel (%p715) target = $region116
        $region115: #{fine_tuned_bert_forward.7} parent=99 // pred_region
          %719 = dma.done [#allocation9], 16
        $region116: #{fine_tuned_bert_forward.7} parent=99 // pred_fallthru
          _
        // Predicated region
        $region117: #{fine_tuned_bert_forward.7} parent=99 // pred_check
          %p720 = pneg %p222
        $region118: #{fine_tuned_bert_forward.7} parent=99 // pred_check_branch
          %722 = sbr.rel (%p720) target = $region120
        $region119: #{fine_tuned_bert_forward.7} parent=99 // pred_region
          %724 = dma.done [#allocation9], 128
        $region120: #{fine_tuned_bert_forward.7} parent=99 // pred_fallthru
          _
        // Predicated region
        $region121: #{fine_tuned_bert_forward.7} parent=99 // pred_check
          %p725 = pneg %p243
        $region122: #{fine_tuned_bert_forward.7} parent=99 // pred_check_branch
          %727 = sbr.rel (%p725) target = $region124
        $region123: #{fine_tuned_bert_forward.7} parent=99 // pred_region
          %729 = dma.done [#allocation12], 16
        $region124: #{fine_tuned_bert_forward.7} parent=99 // pred_fallthru
          _
        // Predicated region
        $region125: #{fine_tuned_bert_forward.7} parent=99 // pred_check
          %p730 = pneg %p285
        $region126: #{fine_tuned_bert_forward.7} parent=99 // pred_check_branch
          %732 = sbr.rel (%p730) target = $region128
        $region127: #{fine_tuned_bert_forward.7} parent=99 // pred_region
          %734 = dma.done [#allocation12], 16
        $region128: #{fine_tuned_bert_forward.7} parent=99 // pred_fallthru
          _
        // Predicated region
        $region129: #{fine_tuned_bert_forward.7} parent=99 // pred_check
          %p735 = pneg %p327
        $region130: #{fine_tuned_bert_forward.7} parent=99 // pred_check_branch
          %737 = sbr.rel (%p735) target = $region132
        $region131: #{fine_tuned_bert_forward.7} parent=99 // pred_region
          %739 = dma.done [#allocation15], 16
        $region132: #{fine_tuned_bert_forward.7} parent=99 // pred_fallthru
          _
        %p740 = scmp.lt.s32.totalorder %s44, 1
        %s741 = scalar_select %p740, %s44, 1
        %s742 = smul.addr %s741, 8
        %s743 = scalar_lea.vmem %s0, %s742
        %p744 = pneg %p65
        %p745 = pneg %p62
        %p746 = scmp.lt.s32.totalorder %s44, 1
        %s747 = scalar_select %p746, %s44, 1
        %s748 = scalar_lea.vmem %s1, %s747
        %p749 = pneg %p91
        %p750 = pneg %p88
        %p751 = scmp.lt.s32.totalorder %s44, 1
        %s752 = scalar_select %p751, %s44, 1
        %s753 = scalar_lea.vmem %s2, %s752
        %p754 = pneg %p117
        %p755 = pneg %p114
        %p756 = pneg %p138
        %p757 = pneg %p135
        %p758 = pneg %p159
        %p759 = pneg %p156
        %p760 = pneg %p180
        %p761 = pneg %p177
        %p762 = pneg %p201
        %p763 = pneg %p198
        %p764 = pneg %p222
        %p765 = pneg %p219
        %p766 = pneg %p243
        %p767 = pneg %p240
        %p768 = pneg %p264
        %p769 = pneg %p261
        %p770 = pneg %p285
        %p771 = pneg %p282
        %p772 = pneg %p306
        %p773 = pneg %p303
        %p774 = pneg %p327
        %p775 = pneg %p324
        %p776 = pneg %p348
        %p777 = pneg %p345
        %p778 = pneg %p369
        %p779 = pneg %p366
        %p780 = pneg %p390
        %p781 = pneg %p387
        %p782 = pneg %p411
        %p783 = pneg %p408
        %p784 = pneg %p432
        %p785 = pneg %p429
        %p786 = pneg %p453
        %p787 = pneg %p450
        %p788 = pneg %p474
        %p789 = pneg %p471
        %p790 = pneg %p500
        %p791 = pneg %p497
        %s792 = sand.u32 %s487, 1
        %s793 = scalar_lea.sflag [#allocation4], %s792
        %s794 = sand.u32 %s487, 1
        %s795 = scalar_lea.vmem [#allocation16], %s794
        %p796 = pneg %p526
        %p797 = pneg %p523
        %s798 = sand.u32 %s513, 1
        %s799 = scalar_lea.sflag [#allocation18], %s798
        %s800 = sand.u32 %s513, 1
        %s801 = scalar_lea.vmem [#allocation17], %s800
        %p802 = scmp.lt.s32.totalorder %s44, 1
        %s803 = scalar_select %p802, %s44, 1
        %s804 = smul.addr %s803, 8
        %s805 = scalar_lea.vmem %s0, %s804
        %p806 = scmp.lt.s32.totalorder %s44, 1
        %s807 = scalar_select %p806, %s44, 1
        %s808 = scalar_lea.vmem %s1, %s807
        %p809 = scmp.lt.s32.totalorder %s44, 1
        %s810 = scalar_select %p809, %s44, 1
        %s811 = scalar_lea.vmem %s2, %s810
        %v813 = vld [vmem:[%s805] sm:$0xff]
        %v814 = vld [vmem:[%s808] sm:$0x1]
        %vm815 = vcmask 64512
        %v817 = vsel %vm815, %v814, 0
        %819 = vmatpush.msra.mxu0 0.0
        %820 = vmatpush.msra.mxu0 0.0
        %821 = vmatpush.msra.mxu0 0.0
        %822 = vmatpush.msra.mxu0 0.0
        %823 = vmatpush.msra.mxu0 0.0
        %824 = vmatpush.msra.mxu0 0.0
        %825 = vmatpush.msra.mxu0 0.0
        %826 = vmatpush.msra.mxu0 0.0
        %827 = vmatpush.msra.mxu0 0.0
        %828 = vmatpush.msra.mxu0 0.0
        %829 = vmatpush.msra.mxu0 0.0
        %830 = vmatpush.msra.mxu0 0.0
        %831 = vmatpush.msra.mxu0 0.0
        %832 = vmatpush.msra.mxu0 0.0
        %833 = vmatpush.msra.mxu0 0.0
        %834 = vmatpush.msra.mxu0 %v813
        %835 = vmatmul.f32.gmra.mxu0 %v817
        %v836 = vpop.f32.mrf.mxu0
        %v837 = vadd.f32 0.0, %v836
        %838 = vdwg.mxu0
        %vm839 = vcmask 57344
        %v840 = vsel %vm839, %v814, 0.0
        %841 = vadd.xlane.f32.xlu0 %v840
        %v842 = vpop.xlane.xlu0 %841
        %v843 = vmax.f32 %v842, 1e-09
        %v844 = vrcp.pop %v843
        %v845 = vmul.f32 %v843, %v844
        %v846 = vsub.f32 1.0, %v845
        %v847 = vmul.f32 %v844, %v846
        %v848 = vadd.f32 %v844, %v847
        %vm849 = vweird.f32 %v843
        %vm850 = vweird.f32 %v844
        %vm851 = vmor %vm849, %vm850
        %v852 = vsel %vm851, %v844, %v848
        %v853 = vand.u32 2147483647, %v843
        %vm854 = vcmp.eq.f32.partialorder %v853, 8.507059e+37
        %v855 = vand.u32 %v843, 2147483648
        %v856 = vor.u32 1.1754944e-38, %v855
        %v857 = vsel %vm854, %v856, %v852
        %v858 = vmul.f32 %v837, %v857
        %v859 = vpack.c.bf16 %v858, %v858
        %v860 = vld [vmem:[#allocation2] sm:$0xf]
        %v861 = vld [vmem:[#allocation2 + $0x4] sm:$0xf]
        %v862 = vld [vmem:[#allocation2 + $0x8] sm:$0xf]
        %v863 = vld [vmem:[#allocation2 + $0xc] sm:$0xf]
        %v864 = vld [vmem:[#allocation5] sm:$0x1]
        %v869 = vunpack.c.l.b16 %v860
        %v870 = vunpack.c.l.b16 %v861
        %v871 = vunpack.c.l.b16 %v862
        %v872 = vunpack.c.l.b16 %v863
        %v873 = vpack.c.b16 %v870, %v869
        %v874 = vpack.c.b16 %v872, %v871
        %vm877 = vcmask 261120
        %v879 = vsel %vm877, %v859, 0
        %881 = vmatpush.bf16.msra.mxu0 0
        %882 = vmatpush.bf16.msra.mxu0 0
        %883 = vmatpush.bf16.msra.mxu0 0
        %884 = vmatpush.bf16.msra.mxu0 0
        %885 = vmatpush.bf16.msra.mxu0 0
        %886 = vmatpush.bf16.msra.mxu0 0
        %887 = vmatpush.bf16.msra.mxu0 %v874
        %888 = vmatpush.bf16.msra.mxu0 %v873
        %889 = vmatmul.bf16.gmra.mxu0 %v879
        %v890 = vpop.f32.mrf.mxu0
        %v891 = vadd.f32 %v864, %v890
        %v892 = vpop.f32.mrf.mxu0
        %893 = vdwg.mxu0
        %v894 = vmax.f32 %v891, 0.0
        %v895 = vld [vmem:[%s811] sm:$0x1]
        %v896 = vpack.c.bf16 %v895, %v895
        %v897 = vld [vmem:[#allocation7] sm:$0xf]
        %v898 = vld [vmem:[#allocation7 + $0x4] sm:$0xf]
        %v899 = vld [vmem:[#allocation8] sm:$0x1]
        %v902 = vunpack.c.l.b16 %v897
        %v903 = vunpack.c.l.b16 %v898
        %v904 = vpack.c.b16 %v903, %v902
        %vm906 = vcmask 130048
        %v908 = vsel %vm906, %v896, 0
        %910 = vmatpush.bf16.msra.mxu0 0
        %911 = vmatpush.bf16.msra.mxu0 0
        %912 = vmatpush.bf16.msra.mxu0 0
        %913 = vmatpush.bf16.msra.mxu0 0
        %914 = vmatpush.bf16.msra.mxu0 0
        %915 = vmatpush.bf16.msra.mxu0 0
        %916 = vmatpush.bf16.msra.mxu0 0
        %917 = vmatpush.bf16.msra.mxu0 %v904
        %918 = vmatmul.bf16.gmra.mxu0 %v908
        %v919 = vpop.f32.mrf.mxu0
        %v920 = vadd.f32 %v899, %v919
        %v921 = vpop.f32.mrf.mxu0
        %922 = vdwg.mxu0
        %v923 = vmax.f32 %v920, 0.0
        %v924 = vpack.c.bf16 %v923, %v923
        %v925 = vld [vmem:[#allocation10] sm:$0xf]
        %v926 = vld [vmem:[#allocation10 + $0x4] sm:$0xf]
        %v927 = vld [vmem:[#allocation11] sm:$0x1]
        %v930 = vunpack.c.l.b16 %v925
        %v931 = vunpack.c.l.b16 %v926
        %v932 = vpack.c.b16 %v931, %v930
        %v935 = vsel %vm906, %v924, 0
        %937 = vmatpush.bf16.msra.mxu0 0
        %938 = vmatpush.bf16.msra.mxu0 0
        %939 = vmatpush.bf16.msra.mxu0 0
        %940 = vmatpush.bf16.msra.mxu0 0
        %941 = vmatpush.bf16.msra.mxu0 0
        %942 = vmatpush.bf16.msra.mxu0 0
        %943 = vmatpush.bf16.msra.mxu0 0
        %944 = vmatpush.bf16.msra.mxu0 %v932
        %945 = vmatmul.bf16.gmra.mxu0 %v935
        %v946 = vpop.f32.mrf.mxu0
        %v947 = vadd.f32 %v927, %v946
        %v948 = vpop.f32.mrf.mxu0
        %949 = vdwg.mxu0
        %v950 = vmax.f32 %v947, 0.0
        %v951 = vpack.c.bf16 %v950, %v950
        %v952 = vld [vmem:[%s9] sm:$0xf]
        %v953 = vld [vmem:[%s9 + $0x4] sm:$0xf]
        %v954 = vld [vmem:[%s9 + $0x8] sm:$0xf]
        %v955 = vld [vmem:[%s9 + $0xc] sm:$0xf]
        %v956 = vld [vmem:[%s9 + $0x10] sm:$0xf]
        %v957 = vld [vmem:[#allocation13] sm:$0x1]
        %v963 = vunpack.c.l.b16 %v952
        %v964 = vunpack.c.l.b16 %v953
        %v965 = vunpack.c.l.b16 %v954
        %v966 = vunpack.c.l.b16 %v955
        %v967 = vunpack.c.l.b16 %v956
        %v968 = vpack.c.b16 %v964, %v963
        %v969 = vpack.c.b16 %v966, %v965
        %v970 = vpack.c.b16 %v967, %v967
        %vm973 = vcmask 326656
        %v975 = vsel %vm973, %v951, 0
        %vm977 = vcmask 1043456
        %v979 = vsel %vm977, %v970, 0
        %981 = vmatpush.bf16.msra.mxu0 0
        %982 = vmatpush.bf16.msra.mxu0 0
        %983 = vmatpush.bf16.msra.mxu0 0
        %984 = vmatpush.bf16.msra.mxu0 0
        %985 = vmatpush.bf16.msra.mxu0 0
        %986 = vmatpush.bf16.msra.mxu0 %v979
        %987 = vmatpush.bf16.msra.mxu0 %v969
        %988 = vmatpush.bf16.msra.mxu0 %v968
        %989 = vmatmul.bf16.gmra.mxu0 %v975
        %v990 = vpop.f32.mrf.mxu0
        %v991 = vadd.f32 %v957, %v990
        %v992 = vpop.f32.mrf.mxu0
        %993 = vdwg.mxu0
        %v994 = vmax.f32 %v991, 0.0
        %v995 = vpack.c.bf16 %v994, %v994
        %v996 = vld [vmem:[%s11] sm:$0xf]
        %v997 = vld [vmem:[%s11 + $0x4] sm:$0xf]
        %v998 = vld [vmem:[%s11 + $0x8] sm:$0xf]
        %v999 = vld [vmem:[%s11 + $0xc] sm:$0xf]
        %v1000 = vld [vmem:[%s11 + $0x10] sm:$0xf]
        %v1001 = vld [vmem:[#allocation14] sm:$0x1]
        %v1007 = vunpack.c.l.b16 %v996
        %v1008 = vunpack.c.l.b16 %v997
        %v1009 = vunpack.c.l.b16 %v998
        %v1010 = vunpack.c.l.b16 %v999
        %v1011 = vunpack.c.l.b16 %v1000
        %v1012 = vpack.c.b16 %v1008, %v1007
        %v1013 = vpack.c.b16 %v1010, %v1009
        %v1014 = vpack.c.b16 %v1011, %v1011
        %v1018 = vsel %vm973, %v995, 0
        %v1021 = vsel %vm977, %v1014, 0
        %1023 = vmatpush.bf16.msra.mxu0 0
        %1024 = vmatpush.bf16.msra.mxu0 0
        %1025 = vmatpush.bf16.msra.mxu0 0
        %1026 = vmatpush.bf16.msra.mxu0 0
        %1027 = vmatpush.bf16.msra.mxu0 0
        %1028 = vmatpush.bf16.msra.mxu0 %v1021
        %1029 = vmatpush.bf16.msra.mxu0 %v1013
        %1030 = vmatpush.bf16.msra.mxu0 %v1012
        %1031 = vmatmul.bf16.gmra.mxu0 %v1018
        %v1032 = vpop.f32.mrf.mxu0
        %v1033 = vadd.f32 %v1001, %v1032
        %v1034 = vpop.f32.mrf.mxu0
        %1035 = vdwg.mxu0
        %v1036 = vmax.f32 %v1033, 0.0
        %v1037 = vpack.c.bf16 %v894, %v894
        %v1038 = vld [vmem:[%s13] sm:$0xf]
        %v1039 = vld [vmem:[%s13 + $0x4] sm:$0xf]
        %v1040 = vld [vmem:[%s13 + $0x8] sm:$0xf]
        %v1041 = vld [vmem:[%s13 + $0xc] sm:$0xf]
        %v1042 = vld [vmem:[%s13 + $0x10] sm:$0xf]
        %v1043 = vpack.c.bf16 %v1036, %v1036
        %v1044 = vld [vmem:[%s14] sm:$0xf]
        %v1045 = vld [vmem:[%s14 + $0x4] sm:$0xf]
        %v1046 = vld [vmem:[%s14 + $0x8] sm:$0xf]
        %v1047 = vld [vmem:[%s14 + $0xc] sm:$0xf]
        %v1048 = vld [vmem:[%s14 + $0x10] sm:$0xf]
        %v1054 = vunpack.c.l.b16 %v1044
        %v1055 = vunpack.c.l.b16 %v1045
        %v1056 = vunpack.c.l.b16 %v1046
        %v1057 = vunpack.c.l.b16 %v1047
        %v1058 = vunpack.c.l.b16 %v1048
        %v1059 = vpack.c.b16 %v1055, %v1054
        %v1060 = vpack.c.b16 %v1057, %v1056
        %v1061 = vpack.c.b16 %v1058, %v1058
        %v1065 = vsel %vm973, %v1043, 0
        %v1068 = vsel %vm977, %v1061, 0
        %1070 = vmatpush.bf16.msra.mxu0 0
        %1071 = vmatpush.bf16.msra.mxu0 0
        %1072 = vmatpush.bf16.msra.mxu0 0
        %1073 = vmatpush.bf16.msra.mxu0 0
        %1074 = vmatpush.bf16.msra.mxu0 0
        %1075 = vmatpush.bf16.msra.mxu0 %v1068
        %1076 = vmatpush.bf16.msra.mxu0 %v1060
        %1077 = vmatpush.bf16.msra.mxu0 %v1059
        %1078 = vmatmul.bf16.gmra.mxu0 %v1065
        %v1079 = vpop.f32.mrf.mxu0
        %v1080 = vadd.f32 0.0, %v1079
        %v1081 = vpop.f32.mrf.mxu0
        %1082 = vdwg.mxu0
        %v1088 = vunpack.c.l.b16 %v1038
        %v1089 = vunpack.c.l.b16 %v1039
        %v1090 = vunpack.c.l.b16 %v1040
        %v1091 = vunpack.c.l.b16 %v1041
        %v1092 = vunpack.c.l.b16 %v1042
        %v1093 = vpack.c.b16 %v1089, %v1088
        %v1094 = vpack.c.b16 %v1091, %v1090
        %v1095 = vpack.c.b16 %v1092, %v1092
        %v1099 = vsel %vm973, %v1037, 0
        %v1102 = vsel %vm977, %v1095, 0
        %1104 = vmatpush.bf16.msra.mxu0 0
        %1105 = vmatpush.bf16.msra.mxu0 0
        %1106 = vmatpush.bf16.msra.mxu0 0
        %1107 = vmatpush.bf16.msra.mxu0 0
        %1108 = vmatpush.bf16.msra.mxu0 0
        %1109 = vmatpush.bf16.msra.mxu0 %v1102
        %1110 = vmatpush.bf16.msra.mxu0 %v1094
        %1111 = vmatpush.bf16.msra.mxu0 %v1093
        %1112 = vmatmul.bf16.gmra.mxu0 %v1099
        %v1113 = vpop.f32.mrf.mxu0
        %v1114 = vadd.f32 %v1080, %v1113
        %v1115 = vpop.f32.mrf.mxu0
        %1116 = vdwg.mxu0
        %v1117 = vld [vmem:[%s15] sm:$0x1]
        %v1118 = vadd.f32 %v1114, %v1117
        %v1119 = vmax.f32 %v1118, 0.0
        %v1120 = vpack.c.bf16 %v1119, %v1119
        %v1121 = vld [vmem:[%s16] sm:$0xf]
        %v1122 = vld [vmem:[%s16 + $0x4] sm:$0xf]
        %v1123 = vld [vmem:[%s16 + $0x8] sm:$0xf]
        %v1124 = vld [vmem:[%s16 + $0xc] sm:$0xf]
        %v1125 = vld [vmem:[%s16 + $0x10] sm:$0xf]
        %v1126 = vld [vmem:[%s17] sm:$0x1]
        %v1132 = vunpack.c.l.b16 %v1121
        %v1133 = vunpack.c.l.b16 %v1122
        %v1134 = vunpack.c.l.b16 %v1123
        %v1135 = vunpack.c.l.b16 %v1124
        %v1136 = vunpack.c.l.b16 %v1125
        %v1137 = vpack.c.b16 %v1133, %v1132
        %v1138 = vpack.c.b16 %v1135, %v1134
        %v1139 = vpack.c.b16 %v1136, %v1136
        %v1143 = vsel %vm973, %v1120, 0
        %v1146 = vsel %vm977, %v1139, 0
        %1148 = vmatpush.bf16.msra.mxu0 0
        %1149 = vmatpush.bf16.msra.mxu0 0
        %1150 = vmatpush.bf16.msra.mxu0 0
        %1151 = vmatpush.bf16.msra.mxu0 0
        %1152 = vmatpush.bf16.msra.mxu0 0
        %1153 = vmatpush.bf16.msra.mxu0 %v1146
        %1154 = vmatpush.bf16.msra.mxu0 %v1138
        %1155 = vmatpush.bf16.msra.mxu0 %v1137
        %1156 = vmatmul.bf16.gmra.mxu0 %v1143
        %v1157 = vpop.f32.mrf.mxu0
        %v1158 = vadd.f32 %v1126, %v1157
        %v1159 = vpop.f32.mrf.mxu0
        %1160 = vdwg.mxu0
        %v1161 = vmax.f32 %v1158, 0.0
        %v1162 = vpack.c.bf16 %v1161, %v1161
        %v1163 = vld [vmem:[%s18] sm:$0xf]
        %v1164 = vld [vmem:[%s18 + $0x4] sm:$0xf]
        %v1165 = vld [vmem:[%s18 + $0x8] sm:$0xf]
        %v1166 = vld [vmem:[%s18 + $0xc] sm:$0xf]
        %v1167 = vld [vmem:[%s19] sm:$0x1]
        %v1172 = vunpack.c.l.b16 %v1163
        %v1173 = vunpack.c.l.b16 %v1164
        %v1174 = vunpack.c.l.b16 %v1165
        %v1175 = vunpack.c.l.b16 %v1166
        %v1176 = vpack.c.b16 %v1173, %v1172
        %v1177 = vpack.c.b16 %v1175, %v1174
        %v1181 = vsel %vm877, %v1162, 0
        %1183 = vmatpush.bf16.msra.mxu0 0
        %1184 = vmatpush.bf16.msra.mxu0 0
        %1185 = vmatpush.bf16.msra.mxu0 0
        %1186 = vmatpush.bf16.msra.mxu0 0
        %1187 = vmatpush.bf16.msra.mxu0 0
        %1188 = vmatpush.bf16.msra.mxu0 0
        %1189 = vmatpush.bf16.msra.mxu0 %v1177
        %1190 = vmatpush.bf16.msra.mxu0 %v1176
        %1191 = vmatmul.bf16.gmra.mxu0 %v1181
        %v1192 = vpop.f32.mrf.mxu0
        %v1193 = vadd.f32 %v1167, %v1192
        %v1194 = vpop.f32.mrf.mxu0
        %1195 = vdwg.mxu0
        %vm1196 = vcmask 253952
        %1197 = vst.msk [vmem:[%s795] sm:$0x1] %vm1196, %v1161
        %vm1198 = vcmask 16384
        %1199 = vst.msk [vmem:[%s801] sm:$0x1] %vm1198, %v1193
        %s1200 = sand.u32 %s487, 1
        %s1201 = scalar_lea.sflag [#allocation4], %s1200
        %s1202 = sand.u32 %s487, 1
        %s1203 = scalar_lea.vmem [#allocation16], %s1202
        %s1204 = sand.u32 %s513, 1
        %s1205 = scalar_lea.sflag [#allocation18], %s1204
        %s1206 = sand.u32 %s513, 1
        %s1207 = scalar_lea.vmem [#allocation17], %s1206
        // Predicated region
        $region133: #{fine_tuned_bert_forward.7} parent=99 // pred_check
          %p1208 = pneg %p497
        $region134: #{fine_tuned_bert_forward.7} parent=99 // pred_check_branch
          %1210 = sbr.rel (%p1208) target = $region136
        $region135: #{fine_tuned_bert_forward.7} parent=99 // pred_region
          %1212 = vsyncadd %s1201, 0
          %s1213 = scalar_lea.hbm %s20, %s44
          %s1215 = sshll.u32 %s1203, 4
          %s1216 = int_to_ptr.vmem [resolvable:$true] %s1215
          %s1217 = sshll.u32 %s1213, 4
          %s1218 = int_to_ptr.hbm [resolvable:$true] %s1217
          %1220 = dma.vmem_to_hbm [thread:$0]  %s1216, 16, %s1218, %s1201
        $region136: #{fine_tuned_bert_forward.7} parent=99 // pred_fallthru
          _
        // Predicated region
        $region137: #{fine_tuned_bert_forward.7} parent=99 // pred_check
          %p1221 = pneg %p523
        $region138: #{fine_tuned_bert_forward.7} parent=99 // pred_check_branch
          %1223 = sbr.rel (%p1221) target = $region140
        $region139: #{fine_tuned_bert_forward.7} parent=99 // pred_region
          %1225 = vsyncadd %s1205, 0
          %s1226 = scalar_lea.hbm %s21, %s44
          %s1228 = sshll.u32 %s1207, 4
          %s1229 = int_to_ptr.vmem [resolvable:$true] %s1228
          %s1230 = sshll.u32 %s1226, 4
          %s1231 = int_to_ptr.hbm [resolvable:$true] %s1230
          %1233 = dma.vmem_to_hbm [thread:$0]  %s1229, 16, %s1231, %s1205
        $region140: #{fine_tuned_bert_forward.7} parent=99 // pred_fallthru
          _
      $region100: #{fine_tuned_bert_forward.7} parent=5 // pred_fallthru
        _
      %p1234 = scmp.le.s32.totalorder 2, %s39
      // Predicated region
      $region141: #{fine_tuned_bert_forward.7} parent=5 // pred_check
        %p1235 = pneg %p1234
      $region142: #{fine_tuned_bert_forward.7} parent=5 // pred_check_branch
        %1237 = sbr.rel (%p1235) target = $region144
      $region143: #{fine_tuned_bert_forward.7} parent=5 // pred_region
        %s1238 = ssub.s32 %s39, 2
        // Predicated region
        $region145: #{fine_tuned_bert_forward.7} parent=143 // pred_check
          %p1239 = pneg %p503
        $region146: #{fine_tuned_bert_forward.7} parent=143 // pred_check_branch
          %1241 = sbr.rel (%p1239) target = $region148
        $region147: #{fine_tuned_bert_forward.7} parent=143 // pred_region
          %s1242 = sand.u32 %s488, 1
          %s1243 = scalar_lea.sflag [#allocation4], %s1242
          %s1244 = sand.u32 %s488, 1
          %s1245 = scalar_lea.vmem [#allocation16], %s1244
          %1247 = dma.done %s1243, 16
        $region148: #{fine_tuned_bert_forward.7} parent=143 // pred_fallthru
          _
        // Predicated region
        $region149: #{fine_tuned_bert_forward.7} parent=143 // pred_check
          %p1248 = pneg %p529
        $region150: #{fine_tuned_bert_forward.7} parent=143 // pred_check_branch
          %1250 = sbr.rel (%p1248) target = $region152
        $region151: #{fine_tuned_bert_forward.7} parent=143 // pred_region
          %s1251 = sand.u32 %s514, 1
          %s1252 = scalar_lea.sflag [#allocation18], %s1251
          %s1253 = sand.u32 %s514, 1
          %s1254 = scalar_lea.vmem [#allocation17], %s1253
          %1256 = dma.done %s1252, 16
        $region152: #{fine_tuned_bert_forward.7} parent=143 // pred_fallthru
          _
      $region144: #{fine_tuned_bert_forward.7} parent=5 // pred_fallthru
        _
    $region6: #{fine_tuned_bert_forward.7} parent=1 // loop_footer
      %s43 = sadd.s32 1, %s39
    $region7: #{fine_tuned_bert_forward.7} parent=1 // loop_footer_branch
      %38 = sbr.rel target = $region3
    $region8: #{fine_tuned_bert_forward.7} parent=1 // loop_exit
      _
    %1257 = vsyncpa [#allocation3], 1
    %s1258 = scalar_lea.sflag [#allocation3], 1
    %1259 = vsyncpa %s1258, 1
    %1260 = vsyncpa [#allocation6], 1
    %1261 = vsyncpa [#allocation9], 1
    %1262 = vsyncpa [#allocation12], 1
    %1263 = vsyncpa [#allocation15], 1
    %1264 = vsyncpa [#allocation4], 1
    %s1265 = scalar_lea.sflag [#allocation4], 1
    %1266 = vsyncpa %s1265, 1
    %1267 = vsyncpa [#allocation18], 1
    %s1268 = scalar_lea.sflag [#allocation18], 1
    %1269 = vsyncpa %s1268, 1

</llo_original>
